<compile_context>
chip_gen: v6e
topology: v6e:2x2x1
jax: 0.10.0
libtpu: 0.0.40
codegen_flags: <defaults>
</compile_context>

<pallas_src>
import jax
import jax.numpy as jnp
from jax.experimental import pallas as pl
from jax.experimental.pallas import tpu as pltpu


# ------------------------------- fused kernel --------------------------------

def concat_block_kernel(x_ref, w_ref, b_ref, o_ref):
    # x_ref : (1, H, W, C)   f32   input tile (one batch element), NHWC
    # w_ref : (9, C, C)      bf16  conv weight, tap t = kh*3+kw, rows=cin, cols=cout
    # b_ref : (1, C)         f32   conv bias
    # o_ref : (1, H, W, 2C)  f32   output = [identity || relu(conv3x3(x))] on channels
    _, H, W, C = x_ref.shape

    x = x_ref[0]                          # (H, W, C) f32 (identity half, exact)
    xb = x.astype(jnp.bfloat16)           # MXU operand

    h_idx = jax.lax.broadcasted_iota(jnp.int32, (H, W, 1), 0)
    w_idx = jax.lax.broadcasted_iota(jnp.int32, (H, W, 1), 1)

    # 9 accumulating matmuls instead of an im2col buffer; borders via VPU masks.
    acc = jnp.zeros((H * W, C), jnp.float32)
    t = 0
    for dh in (-1, 0, 1):                 # kh = dh + 1
        for dw in (-1, 0, 1):             # kw = dw + 1
            if dh == 0 and dw == 0:
                tap = xb
            else:
                shifted = xb
                if dh != 0:
                    shifted = jnp.roll(shifted, -dh, axis=0)
                if dw != 0:
                    shifted = jnp.roll(shifted, -dw, axis=1)
                valid = ((h_idx + dh >= 0) & (h_idx + dh < H) &
                         (w_idx + dw >= 0) & (w_idx + dw < W))
                tap = jnp.where(valid, shifted, jnp.bfloat16(0.0))
            acc = acc + jnp.dot(tap.reshape(H * W, C), w_ref[t],
                                preferred_element_type=jnp.float32)
            t += 1

    y = jnp.maximum(acc + b_ref[...], 0.0)          # bias + ReLU (the submodule)

    # channel concat: both halves lane-aligned (C, 2C multiples of 128) -> unmasked vst
    o_ref[0, :, :, :C] = x.astype(o_ref.dtype)
    o_ref[0, :, :, C:] = y.reshape(H, W, C).astype(o_ref.dtype)


# --------------------------------- wrappers -----------------------------------

def concat_block_forward_nhwc(x_nhwc, w_hwio, b):
    """x_nhwc: (N, H, W, C) f32. Returns (N, H, W, 2C) = cat(x, relu(conv3x3(x)))."""
    N, H, W, C = x_nhwc.shape
    w_taps = w_hwio.reshape(9, C, C).astype(jnp.bfloat16)   # tap-major, bf16 for MXU
    b2d = b.reshape(1, C)

    return pl.pallas_call(
        concat_block_kernel,
        out_shape=jax.ShapeDtypeStruct((N, H, W, 2 * C), jnp.float32),
        grid=(N,),
        in_specs=[
            pl.BlockSpec((1, H, W, C), lambda n: (n, 0, 0, 0)),   # pipelined per batch
            pl.BlockSpec((9, C, C), lambda n: (0, 0, 0)),         # VMEM-resident weight
            pl.BlockSpec((1, C), lambda n: (0, 0)),               # VMEM-resident bias
        ],
        out_specs=pl.BlockSpec((1, H, W, 2 * C), lambda n: (n, 0, 0, 0)),
        compiler_params=pltpu.CompilerParams(
            dimension_semantics=("parallel",)),                   # 2-TC sharding on v7x
    )(x_nhwc, w_taps, b2d)


def concat_block_forward(x_nchw, w_hwio, b):
    """NCHW entry matching the PyTorch module layout."""
    x = jnp.transpose(x_nchw, (0, 2, 3, 1))               # NCHW -> NHWC
    out = concat_block_forward_nhwc(x, w_hwio, b)
    return jnp.transpose(out, (0, 3, 1, 2))                # NHWC -> NCHW


# ----------------------------- pure-JAX reference ----------------------------

def ref_forward(x_nchw, w_hwio, b):
    x = jnp.transpose(x_nchw, (0, 2, 3, 1))
    y = jax.lax.conv_general_dilated(
        x, w_hwio, window_strides=(1, 1), padding="SAME",
        dimension_numbers=("NHWC", "HWIO", "NHWC")) + b[None, None, None, :]
    y = jax.nn.relu(y)
    out = jnp.concatenate([x, y], axis=-1)
    return jnp.transpose(out, (0, 3, 1, 2))


# ----------------------------------- main ------------------------------------

if __name__ == "__main__":
    # lane-dense channels (C, 2C multiples of 128); M = H*W = 256 per MXU call
    N, C, H, W = 2, 128, 16, 16
    key = jax.random.PRNGKey(0)
    kx, kw, kb = jax.random.split(key, 3)

    x = jax.random.normal(kx, (N, C, H, W), jnp.float32)
    w = jax.random.normal(kw, (3, 3, C, C), jnp.float32) * 0.05   # HWIO
    b = jax.random.normal(kb, (C,), jnp.float32) * 0.05

    out = jax.block_until_ready(concat_block_forward(x, w, b))
    ref = ref_forward(x, w, b)

    assert out.shape == ref.shape == (N, 2 * C, H, W)
    assert out.dtype == ref.dtype
    # identity half must be bit-exact
    assert jnp.array_equal(out[:, :C], x), "identity half mismatch"
    # conv half uses bf16 MXU operands (f32 accumulation) -> relaxed tolerance
    err = jnp.max(jnp.abs(out[:, C:] - ref[:, C:]))
    assert err < 6e-2, f"mismatch vs reference: {err}"

    print("KERNEL_OK")
</pallas_src>

<mosaic_0001>
module attributes {stable_mosaic.version = 11 : i64} {
  func.func @concat_block_kernel(%arg0: i32, %arg1: memref<1x16x16x128xf32, #tpu.memory_space<vmem>>, %arg2: memref<9x128x128xbf16, #tpu.memory_space<vmem>>, %arg3: memref<1x128xf32, #tpu.memory_space<vmem>>, %arg4: memref<1x16x16x256xf32, #tpu.memory_space<vmem>>) attributes {dimension_semantics = [#tpu.dimension_semantics<parallel>], iteration_bounds = array<i64: 2>, scalar_prefetch = 0 : i64, scratch_operands = 0 : i64, tpu.core_type = #tpu.core_type<tc>, window_params = [{transform_indices = @transform_0, window_bounds = array<i64: 1, 16, 16, 128>}, {pipeline_mode = #tpu.pipeline_mode<synchronous>, transform_indices = @transform_1, window_bounds = array<i64: 9, 128, 128>}, {pipeline_mode = #tpu.pipeline_mode<synchronous>, transform_indices = @transform_2, window_bounds = array<i64: 1, 128>}, {transform_indices = @transform_3, window_bounds = array<i64: 1, 16, 16, 256>}]} {
    %c0 = arith.constant 0 : index
    %c0_0 = arith.constant 0 : index
    %c0_1 = arith.constant 0 : index
    %c0_2 = arith.constant 0 : index
    %0 = vector.load %arg1[%c0, %c0_0, %c0_1, %c0_2] : memref<1x16x16x128xf32, #tpu.memory_space<vmem>>, vector<1x16x16x128xf32>
    %1 = vector.shape_cast %0 : vector<1x16x16x128xf32> to vector<16x16x128xf32>
    %2 = arith.truncf %1 : vector<16x16x128xf32> to vector<16x16x128xbf16>
    %3 = tpu.iota {dimensions = array<i32: 0>} : vector<16x16x1xi32>
    %4 = tpu.iota {dimensions = array<i32: 1>} : vector<16x16x1xi32>
    %cst = arith.constant 0.000000e+00 : f32
    %5 = vector.broadcast %cst : f32 to vector<256x128xf32>
    %6 = vector.extract_strided_slice %2 {offsets = [15, 0, 0], sizes = [1, 16, 128], strides = [1, 1, 1]} : vector<16x16x128xbf16> to vector<1x16x128xbf16>
    %7 = vector.extract_strided_slice %2 {offsets = [0, 0, 0], sizes = [15, 16, 128], strides = [1, 1, 1]} : vector<16x16x128xbf16> to vector<15x16x128xbf16>
    %8 = tpu.concatenate %6, %7 in 0 : vector<1x16x128xbf16>, vector<15x16x128xbf16> -> vector<16x16x128xbf16>
    %9 = vector.extract_strided_slice %8 {offsets = [0, 15, 0], sizes = [16, 1, 128], strides = [1, 1, 1]} : vector<16x16x128xbf16> to vector<16x1x128xbf16>
    %10 = vector.extract_strided_slice %8 {offsets = [0, 0, 0], sizes = [16, 15, 128], strides = [1, 1, 1]} : vector<16x16x128xbf16> to vector<16x15x128xbf16>
    %11 = tpu.concatenate %9, %10 in 1 : vector<16x1x128xbf16>, vector<16x15x128xbf16> -> vector<16x16x128xbf16>
    %c-1_i32 = arith.constant -1 : i32
    %12 = vector.broadcast %c-1_i32 : i32 to vector<16x16x1xi32>
    %13 = arith.addi %3, %12 : vector<16x16x1xi32>
    %c0_i32 = arith.constant 0 : i32
    %14 = vector.broadcast %c0_i32 : i32 to vector<16x16x1xi32>
    %15 = arith.cmpi sge, %13, %14 : vector<16x16x1xi32>
    %c-1_i32_3 = arith.constant -1 : i32
    %16 = vector.broadcast %c-1_i32_3 : i32 to vector<16x16x1xi32>
    %17 = arith.addi %3, %16 : vector<16x16x1xi32>
    %c16_i32 = arith.constant 16 : i32
    %18 = vector.broadcast %c16_i32 : i32 to vector<16x16x1xi32>
    %19 = arith.cmpi slt, %17, %18 : vector<16x16x1xi32>
    %20 = arith.andi %15, %19 : vector<16x16x1xi1>
    %c-1_i32_4 = arith.constant -1 : i32
    %21 = vector.broadcast %c-1_i32_4 : i32 to vector<16x16x1xi32>
    %22 = arith.addi %4, %21 : vector<16x16x1xi32>
    %c0_i32_5 = arith.constant 0 : i32
    %23 = vector.broadcast %c0_i32_5 : i32 to vector<16x16x1xi32>
    %24 = arith.cmpi sge, %22, %23 : vector<16x16x1xi32>
    %25 = arith.andi %20, %24 : vector<16x16x1xi1>
    %c-1_i32_6 = arith.constant -1 : i32
    %26 = vector.broadcast %c-1_i32_6 : i32 to vector<16x16x1xi32>
    %27 = arith.addi %4, %26 : vector<16x16x1xi32>
    %c16_i32_7 = arith.constant 16 : i32
    %28 = vector.broadcast %c16_i32_7 : i32 to vector<16x16x1xi32>
    %29 = arith.cmpi slt, %27, %28 : vector<16x16x1xi32>
    %30 = arith.andi %25, %29 : vector<16x16x1xi1>
    %cst_8 = arith.constant 0.000000e+00 : bf16
    %31 = vector.shape_cast %30 : vector<16x16x1xi1> to vector<16x16x1xi1>
    %32 = vector.broadcast %31 : vector<16x16x1xi1> to vector<16x16x128xi1>
    %33 = vector.broadcast %cst_8 : bf16 to vector<16x16x128xbf16>
    %34 = arith.select %32, %11, %33 : vector<16x16x128xi1>, vector<16x16x128xbf16>
    %35 = vector.shape_cast %34 : vector<16x16x128xbf16> to vector<256x128xbf16>
    %c0_9 = arith.constant 0 : index
    %c0_10 = arith.constant 0 : index
    %c0_11 = arith.constant 0 : index
    %36 = vector.load %arg2[%c0_9, %c0_10, %c0_11] : memref<9x128x128xbf16, #tpu.memory_space<vmem>>, vector<1x128x128xbf16>
    %37 = vector.shape_cast %36 : vector<1x128x128xbf16> to vector<128x128xbf16>
    %cst_12 = arith.constant dense<0.000000e+00> : vector<256x128xf32>
    %38 = tpu.matmul %35, %37, %cst_12 {dimension_numbers = #tpu.dot_dimension_numbers<[1], [0], [0], [1], [0, 0, 1, 1], [], []>} : vector<256x128xbf16>, vector<128x128xbf16>, vector<256x128xf32> -> vector<256x128xf32>
    %39 = arith.addf %5, %38 : vector<256x128xf32>
    %40 = vector.extract_strided_slice %2 {offsets = [15, 0, 0], sizes = [1, 16, 128], strides = [1, 1, 1]} : vector<16x16x128xbf16> to vector<1x16x128xbf16>
    %41 = vector.extract_strided_slice %2 {offsets = [0, 0, 0], sizes = [15, 16, 128], strides = [1, 1, 1]} : vector<16x16x128xbf16> to vector<15x16x128xbf16>
    %42 = tpu.concatenate %40, %41 in 0 : vector<1x16x128xbf16>, vector<15x16x128xbf16> -> vector<16x16x128xbf16>
    %c-1_i32_13 = arith.constant -1 : i32
    %43 = vector.broadcast %c-1_i32_13 : i32 to vector<16x16x1xi32>
    %44 = arith.addi %3, %43 : vector<16x16x1xi32>
    %c0_i32_14 = arith.constant 0 : i32
    %45 = vector.broadcast %c0_i32_14 : i32 to vector<16x16x1xi32>
    %46 = arith.cmpi sge, %44, %45 : vector<16x16x1xi32>
    %c-1_i32_15 = arith.constant -1 : i32
    %47 = vector.broadcast %c-1_i32_15 : i32 to vector<16x16x1xi32>
    %48 = arith.addi %3, %47 : vector<16x16x1xi32>
    %c16_i32_16 = arith.constant 16 : i32
    %49 = vector.broadcast %c16_i32_16 : i32 to vector<16x16x1xi32>
    %50 = arith.cmpi slt, %48, %49 : vector<16x16x1xi32>
    %51 = arith.andi %46, %50 : vector<16x16x1xi1>
    %c0_i32_17 = arith.constant 0 : i32
    %52 = vector.broadcast %c0_i32_17 : i32 to vector<16x16x1xi32>
    %53 = arith.addi %4, %52 : vector<16x16x1xi32>
    %c0_i32_18 = arith.constant 0 : i32
    %54 = vector.broadcast %c0_i32_18 : i32 to vector<16x16x1xi32>
    %55 = arith.cmpi sge, %53, %54 : vector<16x16x1xi32>
    %56 = arith.andi %51, %55 : vector<16x16x1xi1>
    %c0_i32_19 = arith.constant 0 : i32
    %57 = vector.broadcast %c0_i32_19 : i32 to vector<16x16x1xi32>
    %58 = arith.addi %4, %57 : vector<16x16x1xi32>
    %c16_i32_20 = arith.constant 16 : i32
    %59 = vector.broadcast %c16_i32_20 : i32 to vector<16x16x1xi32>
    %60 = arith.cmpi slt, %58, %59 : vector<16x16x1xi32>
    %61 = arith.andi %56, %60 : vector<16x16x1xi1>
    %cst_21 = arith.constant 0.000000e+00 : bf16
    %62 = vector.shape_cast %61 : vector<16x16x1xi1> to vector<16x16x1xi1>
    %63 = vector.broadcast %62 : vector<16x16x1xi1> to vector<16x16x128xi1>
    %64 = vector.broadcast %cst_21 : bf16 to vector<16x16x128xbf16>
    %65 = arith.select %63, %42, %64 : vector<16x16x128xi1>, vector<16x16x128xbf16>
    %66 = vector.shape_cast %65 : vector<16x16x128xbf16> to vector<256x128xbf16>
    %c1 = arith.constant 1 : index
    %c0_22 = arith.constant 0 : index
    %c0_23 = arith.constant 0 : index
    %67 = vector.load %arg2[%c1, %c0_22, %c0_23] : memref<9x128x128xbf16, #tpu.memory_space<vmem>>, vector<1x128x128xbf16>
    %68 = vector.shape_cast %67 : vector<1x128x128xbf16> to vector<128x128xbf16>
    %cst_24 = arith.constant dense<0.000000e+00> : vector<256x128xf32>
    %69 = tpu.matmul %66, %68, %cst_24 {dimension_numbers = #tpu.dot_dimension_numbers<[1], [0], [0], [1], [0, 0, 1, 1], [], []>} : vector<256x128xbf16>, vector<128x128xbf16>, vector<256x128xf32> -> vector<256x128xf32>
    %70 = arith.addf %39, %69 : vector<256x128xf32>
    %71 = vector.extract_strided_slice %2 {offsets = [15, 0, 0], sizes = [1, 16, 128], strides = [1, 1, 1]} : vector<16x16x128xbf16> to vector<1x16x128xbf16>
    %72 = vector.extract_strided_slice %2 {offsets = [0, 0, 0], sizes = [15, 16, 128], strides = [1, 1, 1]} : vector<16x16x128xbf16> to vector<15x16x128xbf16>
    %73 = tpu.concatenate %71, %72 in 0 : vector<1x16x128xbf16>, vector<15x16x128xbf16> -> vector<16x16x128xbf16>
    %74 = vector.extract_strided_slice %73 {offsets = [0, 1, 0], sizes = [16, 15, 128], strides = [1, 1, 1]} : vector<16x16x128xbf16> to vector<16x15x128xbf16>
    %75 = vector.extract_strided_slice %73 {offsets = [0, 0, 0], sizes = [16, 1, 128], strides = [1, 1, 1]} : vector<16x16x128xbf16> to vector<16x1x128xbf16>
    %76 = tpu.concatenate %74, %75 in 1 : vector<16x15x128xbf16>, vector<16x1x128xbf16> -> vector<16x16x128xbf16>
    %c-1_i32_25 = arith.constant -1 : i32
    %77 = vector.broadcast %c-1_i32_25 : i32 to vector<16x16x1xi32>
    %78 = arith.addi %3, %77 : vector<16x16x1xi32>
    %c0_i32_26 = arith.constant 0 : i32
    %79 = vector.broadcast %c0_i32_26 : i32 to vector<16x16x1xi32>
    %80 = arith.cmpi sge, %78, %79 : vector<16x16x1xi32>
    %c-1_i32_27 = arith.constant -1 : i32
    %81 = vector.broadcast %c-1_i32_27 : i32 to vector<16x16x1xi32>
    %82 = arith.addi %3, %81 : vector<16x16x1xi32>
    %c16_i32_28 = arith.constant 16 : i32
    %83 = vector.broadcast %c16_i32_28 : i32 to vector<16x16x1xi32>
    %84 = arith.cmpi slt, %82, %83 : vector<16x16x1xi32>
    %85 = arith.andi %80, %84 : vector<16x16x1xi1>
    %c1_i32 = arith.constant 1 : i32
    %86 = vector.broadcast %c1_i32 : i32 to vector<16x16x1xi32>
    %87 = arith.addi %4, %86 : vector<16x16x1xi32>
    %c0_i32_29 = arith.constant 0 : i32
    %88 = vector.broadcast %c0_i32_29 : i32 to vector<16x16x1xi32>
    %89 = arith.cmpi sge, %87, %88 : vector<16x16x1xi32>
    %90 = arith.andi %85, %89 : vector<16x16x1xi1>
    %c1_i32_30 = arith.constant 1 : i32
    %91 = vector.broadcast %c1_i32_30 : i32 to vector<16x16x1xi32>
    %92 = arith.addi %4, %91 : vector<16x16x1xi32>
    %c16_i32_31 = arith.constant 16 : i32
    %93 = vector.broadcast %c16_i32_31 : i32 to vector<16x16x1xi32>
    %94 = arith.cmpi slt, %92, %93 : vector<16x16x1xi32>
    %95 = arith.andi %90, %94 : vector<16x16x1xi1>
    %cst_32 = arith.constant 0.000000e+00 : bf16
    %96 = vector.shape_cast %95 : vector<16x16x1xi1> to vector<16x16x1xi1>
    %97 = vector.broadcast %96 : vector<16x16x1xi1> to vector<16x16x128xi1>
    %98 = vector.broadcast %cst_32 : bf16 to vector<16x16x128xbf16>
    %99 = arith.select %97, %76, %98 : vector<16x16x128xi1>, vector<16x16x128xbf16>
    %100 = vector.shape_cast %99 : vector<16x16x128xbf16> to vector<256x128xbf16>
    %c2 = arith.constant 2 : index
    %c0_33 = arith.constant 0 : index
    %c0_34 = arith.constant 0 : index
    %101 = vector.load %arg2[%c2, %c0_33, %c0_34] : memref<9x128x128xbf16, #tpu.memory_space<vmem>>, vector<1x128x128xbf16>
    %102 = vector.shape_cast %101 : vector<1x128x128xbf16> to vector<128x128xbf16>
    %cst_35 = arith.constant dense<0.000000e+00> : vector<256x128xf32>
    %103 = tpu.matmul %100, %102, %cst_35 {dimension_numbers = #tpu.dot_dimension_numbers<[1], [0], [0], [1], [0, 0, 1, 1], [], []>} : vector<256x128xbf16>, vector<128x128xbf16>, vector<256x128xf32> -> vector<256x128xf32>
    %104 = arith.addf %70, %103 : vector<256x128xf32>
    %105 = vector.extract_strided_slice %2 {offsets = [0, 15, 0], sizes = [16, 1, 128], strides = [1, 1, 1]} : vector<16x16x128xbf16> to vector<16x1x128xbf16>
    %106 = vector.extract_strided_slice %2 {offsets = [0, 0, 0], sizes = [16, 15, 128], strides = [1, 1, 1]} : vector<16x16x128xbf16> to vector<16x15x128xbf16>
    %107 = tpu.concatenate %105, %106 in 1 : vector<16x1x128xbf16>, vector<16x15x128xbf16> -> vector<16x16x128xbf16>
    %c0_i32_36 = arith.constant 0 : i32
    %108 = vector.broadcast %c0_i32_36 : i32 to vector<16x16x1xi32>
    %109 = arith.addi %3, %108 : vector<16x16x1xi32>
    %c0_i32_37 = arith.constant 0 : i32
    %110 = vector.broadcast %c0_i32_37 : i32 to vector<16x16x1xi32>
    %111 = arith.cmpi sge, %109, %110 : vector<16x16x1xi32>
    %c0_i32_38 = arith.constant 0 : i32
    %112 = vector.broadcast %c0_i32_38 : i32 to vector<16x16x1xi32>
    %113 = arith.addi %3, %112 : vector<16x16x1xi32>
    %c16_i32_39 = arith.constant 16 : i32
    %114 = vector.broadcast %c16_i32_39 : i32 to vector<16x16x1xi32>
    %115 = arith.cmpi slt, %113, %114 : vector<16x16x1xi32>
    %116 = arith.andi %111, %115 : vector<16x16x1xi1>
    %c-1_i32_40 = arith.constant -1 : i32
    %117 = vector.broadcast %c-1_i32_40 : i32 to vector<16x16x1xi32>
    %118 = arith.addi %4, %117 : vector<16x16x1xi32>
    %c0_i32_41 = arith.constant 0 : i32
    %119 = vector.broadcast %c0_i32_41 : i32 to vector<16x16x1xi32>
    %120 = arith.cmpi sge, %118, %119 : vector<16x16x1xi32>
    %121 = arith.andi %116, %120 : vector<16x16x1xi1>
    %c-1_i32_42 = arith.constant -1 : i32
    %122 = vector.broadcast %c-1_i32_42 : i32 to vector<16x16x1xi32>
    %123 = arith.addi %4, %122 : vector<16x16x1xi32>
    %c16_i32_43 = arith.constant 16 : i32
    %124 = vector.broadcast %c16_i32_43 : i32 to vector<16x16x1xi32>
    %125 = arith.cmpi slt, %123, %124 : vector<16x16x1xi32>
    %126 = arith.andi %121, %125 : vector<16x16x1xi1>
    %cst_44 = arith.constant 0.000000e+00 : bf16
    %127 = vector.shape_cast %126 : vector<16x16x1xi1> to vector<16x16x1xi1>
    %128 = vector.broadcast %127 : vector<16x16x1xi1> to vector<16x16x128xi1>
    %129 = vector.broadcast %cst_44 : bf16 to vector<16x16x128xbf16>
    %130 = arith.select %128, %107, %129 : vector<16x16x128xi1>, vector<16x16x128xbf16>
    %131 = vector.shape_cast %130 : vector<16x16x128xbf16> to vector<256x128xbf16>
    %c3 = arith.constant 3 : index
    %c0_45 = arith.constant 0 : index
    %c0_46 = arith.constant 0 : index
    %132 = vector.load %arg2[%c3, %c0_45, %c0_46] : memref<9x128x128xbf16, #tpu.memory_space<vmem>>, vector<1x128x128xbf16>
    %133 = vector.shape_cast %132 : vector<1x128x128xbf16> to vector<128x128xbf16>
    %cst_47 = arith.constant dense<0.000000e+00> : vector<256x128xf32>
    %134 = tpu.matmul %131, %133, %cst_47 {dimension_numbers = #tpu.dot_dimension_numbers<[1], [0], [0], [1], [0, 0, 1, 1], [], []>} : vector<256x128xbf16>, vector<128x128xbf16>, vector<256x128xf32> -> vector<256x128xf32>
    %135 = arith.addf %104, %134 : vector<256x128xf32>
    %136 = vector.shape_cast %2 : vector<16x16x128xbf16> to vector<256x128xbf16>
    %c4 = arith.constant 4 : index
    %c0_48 = arith.constant 0 : index
    %c0_49 = arith.constant 0 : index
    %137 = vector.load %arg2[%c4, %c0_48, %c0_49] : memref<9x128x128xbf16, #tpu.memory_space<vmem>>, vector<1x128x128xbf16>
    %138 = vector.shape_cast %137 : vector<1x128x128xbf16> to vector<128x128xbf16>
    %cst_50 = arith.constant dense<0.000000e+00> : vector<256x128xf32>
    %139 = tpu.matmul %136, %138, %cst_50 {dimension_numbers = #tpu.dot_dimension_numbers<[1], [0], [0], [1], [0, 0, 1, 1], [], []>} : vector<256x128xbf16>, vector<128x128xbf16>, vector<256x128xf32> -> vector<256x128xf32>
    %140 = arith.addf %135, %139 : vector<256x128xf32>
    %141 = vector.extract_strided_slice %2 {offsets = [0, 1, 0], sizes = [16, 15, 128], strides = [1, 1, 1]} : vector<16x16x128xbf16> to vector<16x15x128xbf16>
    %142 = vector.extract_strided_slice %2 {offsets = [0, 0, 0], sizes = [16, 1, 128], strides = [1, 1, 1]} : vector<16x16x128xbf16> to vector<16x1x128xbf16>
    %143 = tpu.concatenate %141, %142 in 1 : vector<16x15x128xbf16>, vector<16x1x128xbf16> -> vector<16x16x128xbf16>
    %c0_i32_51 = arith.constant 0 : i32
    %144 = vector.broadcast %c0_i32_51 : i32 to vector<16x16x1xi32>
    %145 = arith.addi %3, %144 : vector<16x16x1xi32>
    %c0_i32_52 = arith.constant 0 : i32
    %146 = vector.broadcast %c0_i32_52 : i32 to vector<16x16x1xi32>
    %147 = arith.cmpi sge, %145, %146 : vector<16x16x1xi32>
    %c0_i32_53 = arith.constant 0 : i32
    %148 = vector.broadcast %c0_i32_53 : i32 to vector<16x16x1xi32>
    %149 = arith.addi %3, %148 : vector<16x16x1xi32>
    %c16_i32_54 = arith.constant 16 : i32
    %150 = vector.broadcast %c16_i32_54 : i32 to vector<16x16x1xi32>
    %151 = arith.cmpi slt, %149, %150 : vector<16x16x1xi32>
    %152 = arith.andi %147, %151 : vector<16x16x1xi1>
    %c1_i32_55 = arith.constant 1 : i32
    %153 = vector.broadcast %c1_i32_55 : i32 to vector<16x16x1xi32>
    %154 = arith.addi %4, %153 : vector<16x16x1xi32>
    %c0_i32_56 = arith.constant 0 : i32
    %155 = vector.broadcast %c0_i32_56 : i32 to vector<16x16x1xi32>
    %156 = arith.cmpi sge, %154, %155 : vector<16x16x1xi32>
    %157 = arith.andi %152, %156 : vector<16x16x1xi1>
    %c1_i32_57 = arith.constant 1 : i32
    %158 = vector.broadcast %c1_i32_57 : i32 to vector<16x16x1xi32>
    %159 = arith.addi %4, %158 : vector<16x16x1xi32>
    %c16_i32_58 = arith.constant 16 : i32
    %160 = vector.broadcast %c16_i32_58 : i32 to vector<16x16x1xi32>
    %161 = arith.cmpi slt, %159, %160 : vector<16x16x1xi32>
    %162 = arith.andi %157, %161 : vector<16x16x1xi1>
    %cst_59 = arith.constant 0.000000e+00 : bf16
    %163 = vector.shape_cast %162 : vector<16x16x1xi1> to vector<16x16x1xi1>
    %164 = vector.broadcast %163 : vector<16x16x1xi1> to vector<16x16x128xi1>
    %165 = vector.broadcast %cst_59 : bf16 to vector<16x16x128xbf16>
    %166 = arith.select %164, %143, %165 : vector<16x16x128xi1>, vector<16x16x128xbf16>
    %167 = vector.shape_cast %166 : vector<16x16x128xbf16> to vector<256x128xbf16>
    %c5 = arith.constant 5 : index
    %c0_60 = arith.constant 0 : index
    %c0_61 = arith.constant 0 : index
    %168 = vector.load %arg2[%c5, %c0_60, %c0_61] : memref<9x128x128xbf16, #tpu.memory_space<vmem>>, vector<1x128x128xbf16>
    %169 = vector.shape_cast %168 : vector<1x128x128xbf16> to vector<128x128xbf16>
    %cst_62 = arith.constant dense<0.000000e+00> : vector<256x128xf32>
    %170 = tpu.matmul %167, %169, %cst_62 {dimension_numbers = #tpu.dot_dimension_numbers<[1], [0], [0], [1], [0, 0, 1, 1], [], []>} : vector<256x128xbf16>, vector<128x128xbf16>, vector<256x128xf32> -> vector<256x128xf32>
    %171 = arith.addf %140, %170 : vector<256x128xf32>
    %172 = vector.extract_strided_slice %2 {offsets = [1, 0, 0], sizes = [15, 16, 128], strides = [1, 1, 1]} : vector<16x16x128xbf16> to vector<15x16x128xbf16>
    %173 = vector.extract_strided_slice %2 {offsets = [0, 0, 0], sizes = [1, 16, 128], strides = [1, 1, 1]} : vector<16x16x128xbf16> to vector<1x16x128xbf16>
    %174 = tpu.concatenate %172, %173 in 0 : vector<15x16x128xbf16>, vector<1x16x128xbf16> -> vector<16x16x128xbf16>
    %175 = vector.extract_strided_slice %174 {offsets = [0, 15, 0], sizes = [16, 1, 128], strides = [1, 1, 1]} : vector<16x16x128xbf16> to vector<16x1x128xbf16>
    %176 = vector.extract_strided_slice %174 {offsets = [0, 0, 0], sizes = [16, 15, 128], strides = [1, 1, 1]} : vector<16x16x128xbf16> to vector<16x15x128xbf16>
    %177 = tpu.concatenate %175, %176 in 1 : vector<16x1x128xbf16>, vector<16x15x128xbf16> -> vector<16x16x128xbf16>
    %c1_i32_63 = arith.constant 1 : i32
    %178 = vector.broadcast %c1_i32_63 : i32 to vector<16x16x1xi32>
    %179 = arith.addi %3, %178 : vector<16x16x1xi32>
    %c0_i32_64 = arith.constant 0 : i32
    %180 = vector.broadcast %c0_i32_64 : i32 to vector<16x16x1xi32>
    %181 = arith.cmpi sge, %179, %180 : vector<16x16x1xi32>
    %c1_i32_65 = arith.constant 1 : i32
    %182 = vector.broadcast %c1_i32_65 : i32 to vector<16x16x1xi32>
    %183 = arith.addi %3, %182 : vector<16x16x1xi32>
    %c16_i32_66 = arith.constant 16 : i32
    %184 = vector.broadcast %c16_i32_66 : i32 to vector<16x16x1xi32>
    %185 = arith.cmpi slt, %183, %184 : vector<16x16x1xi32>
    %186 = arith.andi %181, %185 : vector<16x16x1xi1>
    %c-1_i32_67 = arith.constant -1 : i32
    %187 = vector.broadcast %c-1_i32_67 : i32 to vector<16x16x1xi32>
    %188 = arith.addi %4, %187 : vector<16x16x1xi32>
    %c0_i32_68 = arith.constant 0 : i32
    %189 = vector.broadcast %c0_i32_68 : i32 to vector<16x16x1xi32>
    %190 = arith.cmpi sge, %188, %189 : vector<16x16x1xi32>
    %191 = arith.andi %186, %190 : vector<16x16x1xi1>
    %c-1_i32_69 = arith.constant -1 : i32
    %192 = vector.broadcast %c-1_i32_69 : i32 to vector<16x16x1xi32>
    %193 = arith.addi %4, %192 : vector<16x16x1xi32>
    %c16_i32_70 = arith.constant 16 : i32
    %194 = vector.broadcast %c16_i32_70 : i32 to vector<16x16x1xi32>
    %195 = arith.cmpi slt, %193, %194 : vector<16x16x1xi32>
    %196 = arith.andi %191, %195 : vector<16x16x1xi1>
    %cst_71 = arith.constant 0.000000e+00 : bf16
    %197 = vector.shape_cast %196 : vector<16x16x1xi1> to vector<16x16x1xi1>
    %198 = vector.broadcast %197 : vector<16x16x1xi1> to vector<16x16x128xi1>
    %199 = vector.broadcast %cst_71 : bf16 to vector<16x16x128xbf16>
    %200 = arith.select %198, %177, %199 : vector<16x16x128xi1>, vector<16x16x128xbf16>
    %201 = vector.shape_cast %200 : vector<16x16x128xbf16> to vector<256x128xbf16>
    %c6 = arith.constant 6 : index
    %c0_72 = arith.constant 0 : index
    %c0_73 = arith.constant 0 : index
    %202 = vector.load %arg2[%c6, %c0_72, %c0_73] : memref<9x128x128xbf16, #tpu.memory_space<vmem>>, vector<1x128x128xbf16>
    %203 = vector.shape_cast %202 : vector<1x128x128xbf16> to vector<128x128xbf16>
    %cst_74 = arith.constant dense<0.000000e+00> : vector<256x128xf32>
    %204 = tpu.matmul %201, %203, %cst_74 {dimension_numbers = #tpu.dot_dimension_numbers<[1], [0], [0], [1], [0, 0, 1, 1], [], []>} : vector<256x128xbf16>, vector<128x128xbf16>, vector<256x128xf32> -> vector<256x128xf32>
    %205 = arith.addf %171, %204 : vector<256x128xf32>
    %206 = vector.extract_strided_slice %2 {offsets = [1, 0, 0], sizes = [15, 16, 128], strides = [1, 1, 1]} : vector<16x16x128xbf16> to vector<15x16x128xbf16>
    %207 = vector.extract_strided_slice %2 {offsets = [0, 0, 0], sizes = [1, 16, 128], strides = [1, 1, 1]} : vector<16x16x128xbf16> to vector<1x16x128xbf16>
    %208 = tpu.concatenate %206, %207 in 0 : vector<15x16x128xbf16>, vector<1x16x128xbf16> -> vector<16x16x128xbf16>
    %c1_i32_75 = arith.constant 1 : i32
    %209 = vector.broadcast %c1_i32_75 : i32 to vector<16x16x1xi32>
    %210 = arith.addi %3, %209 : vector<16x16x1xi32>
    %c0_i32_76 = arith.constant 0 : i32
    %211 = vector.broadcast %c0_i32_76 : i32 to vector<16x16x1xi32>
    %212 = arith.cmpi sge, %210, %211 : vector<16x16x1xi32>
    %c1_i32_77 = arith.constant 1 : i32
    %213 = vector.broadcast %c1_i32_77 : i32 to vector<16x16x1xi32>
    %214 = arith.addi %3, %213 : vector<16x16x1xi32>
    %c16_i32_78 = arith.constant 16 : i32
    %215 = vector.broadcast %c16_i32_78 : i32 to vector<16x16x1xi32>
    %216 = arith.cmpi slt, %214, %215 : vector<16x16x1xi32>
    %217 = arith.andi %212, %216 : vector<16x16x1xi1>
    %c0_i32_79 = arith.constant 0 : i32
    %218 = vector.broadcast %c0_i32_79 : i32 to vector<16x16x1xi32>
    %219 = arith.addi %4, %218 : vector<16x16x1xi32>
    %c0_i32_80 = arith.constant 0 : i32
    %220 = vector.broadcast %c0_i32_80 : i32 to vector<16x16x1xi32>
    %221 = arith.cmpi sge, %219, %220 : vector<16x16x1xi32>
    %222 = arith.andi %217, %221 : vector<16x16x1xi1>
    %c0_i32_81 = arith.constant 0 : i32
    %223 = vector.broadcast %c0_i32_81 : i32 to vector<16x16x1xi32>
    %224 = arith.addi %4, %223 : vector<16x16x1xi32>
    %c16_i32_82 = arith.constant 16 : i32
    %225 = vector.broadcast %c16_i32_82 : i32 to vector<16x16x1xi32>
    %226 = arith.cmpi slt, %224, %225 : vector<16x16x1xi32>
    %227 = arith.andi %222, %226 : vector<16x16x1xi1>
    %cst_83 = arith.constant 0.000000e+00 : bf16
    %228 = vector.shape_cast %227 : vector<16x16x1xi1> to vector<16x16x1xi1>
    %229 = vector.broadcast %228 : vector<16x16x1xi1> to vector<16x16x128xi1>
    %230 = vector.broadcast %cst_83 : bf16 to vector<16x16x128xbf16>
    %231 = arith.select %229, %208, %230 : vector<16x16x128xi1>, vector<16x16x128xbf16>
    %232 = vector.shape_cast %231 : vector<16x16x128xbf16> to vector<256x128xbf16>
    %c7 = arith.constant 7 : index
    %c0_84 = arith.constant 0 : index
    %c0_85 = arith.constant 0 : index
    %233 = vector.load %arg2[%c7, %c0_84, %c0_85] : memref<9x128x128xbf16, #tpu.memory_space<vmem>>, vector<1x128x128xbf16>
    %234 = vector.shape_cast %233 : vector<1x128x128xbf16> to vector<128x128xbf16>
    %cst_86 = arith.constant dense<0.000000e+00> : vector<256x128xf32>
    %235 = tpu.matmul %232, %234, %cst_86 {dimension_numbers = #tpu.dot_dimension_numbers<[1], [0], [0], [1], [0, 0, 1, 1], [], []>} : vector<256x128xbf16>, vector<128x128xbf16>, vector<256x128xf32> -> vector<256x128xf32>
    %236 = arith.addf %205, %235 : vector<256x128xf32>
    %237 = vector.extract_strided_slice %2 {offsets = [1, 0, 0], sizes = [15, 16, 128], strides = [1, 1, 1]} : vector<16x16x128xbf16> to vector<15x16x128xbf16>
    %238 = vector.extract_strided_slice %2 {offsets = [0, 0, 0], sizes = [1, 16, 128], strides = [1, 1, 1]} : vector<16x16x128xbf16> to vector<1x16x128xbf16>
    %239 = tpu.concatenate %237, %238 in 0 : vector<15x16x128xbf16>, vector<1x16x128xbf16> -> vector<16x16x128xbf16>
    %240 = vector.extract_strided_slice %239 {offsets = [0, 1, 0], sizes = [16, 15, 128], strides = [1, 1, 1]} : vector<16x16x128xbf16> to vector<16x15x128xbf16>
    %241 = vector.extract_strided_slice %239 {offsets = [0, 0, 0], sizes = [16, 1, 128], strides = [1, 1, 1]} : vector<16x16x128xbf16> to vector<16x1x128xbf16>
    %242 = tpu.concatenate %240, %241 in 1 : vector<16x15x128xbf16>, vector<16x1x128xbf16> -> vector<16x16x128xbf16>
    %c1_i32_87 = arith.constant 1 : i32
    %243 = vector.broadcast %c1_i32_87 : i32 to vector<16x16x1xi32>
    %244 = arith.addi %3, %243 : vector<16x16x1xi32>
    %c0_i32_88 = arith.constant 0 : i32
    %245 = vector.broadcast %c0_i32_88 : i32 to vector<16x16x1xi32>
    %246 = arith.cmpi sge, %244, %245 : vector<16x16x1xi32>
    %c1_i32_89 = arith.constant 1 : i32
    %247 = vector.broadcast %c1_i32_89 : i32 to vector<16x16x1xi32>
    %248 = arith.addi %3, %247 : vector<16x16x1xi32>
    %c16_i32_90 = arith.constant 16 : i32
    %249 = vector.broadcast %c16_i32_90 : i32 to vector<16x16x1xi32>
    %250 = arith.cmpi slt, %248, %249 : vector<16x16x1xi32>
    %251 = arith.andi %246, %250 : vector<16x16x1xi1>
    %c1_i32_91 = arith.constant 1 : i32
    %252 = vector.broadcast %c1_i32_91 : i32 to vector<16x16x1xi32>
    %253 = arith.addi %4, %252 : vector<16x16x1xi32>
    %c0_i32_92 = arith.constant 0 : i32
    %254 = vector.broadcast %c0_i32_92 : i32 to vector<16x16x1xi32>
    %255 = arith.cmpi sge, %253, %254 : vector<16x16x1xi32>
    %256 = arith.andi %251, %255 : vector<16x16x1xi1>
    %c1_i32_93 = arith.constant 1 : i32
    %257 = vector.broadcast %c1_i32_93 : i32 to vector<16x16x1xi32>
    %258 = arith.addi %4, %257 : vector<16x16x1xi32>
    %c16_i32_94 = arith.constant 16 : i32
    %259 = vector.broadcast %c16_i32_94 : i32 to vector<16x16x1xi32>
    %260 = arith.cmpi slt, %258, %259 : vector<16x16x1xi32>
    %261 = arith.andi %256, %260 : vector<16x16x1xi1>
    %cst_95 = arith.constant 0.000000e+00 : bf16
    %262 = vector.shape_cast %261 : vector<16x16x1xi1> to vector<16x16x1xi1>
    %263 = vector.broadcast %262 : vector<16x16x1xi1> to vector<16x16x128xi1>
    %264 = vector.broadcast %cst_95 : bf16 to vector<16x16x128xbf16>
    %265 = arith.select %263, %242, %264 : vector<16x16x128xi1>, vector<16x16x128xbf16>
    %266 = vector.shape_cast %265 : vector<16x16x128xbf16> to vector<256x128xbf16>
    %c8 = arith.constant 8 : index
    %c0_96 = arith.constant 0 : index
    %c0_97 = arith.constant 0 : index
    %267 = vector.load %arg2[%c8, %c0_96, %c0_97] : memref<9x128x128xbf16, #tpu.memory_space<vmem>>, vector<1x128x128xbf16>
    %268 = vector.shape_cast %267 : vector<1x128x128xbf16> to vector<128x128xbf16>
    %cst_98 = arith.constant dense<0.000000e+00> : vector<256x128xf32>
    %269 = tpu.matmul %266, %268, %cst_98 {dimension_numbers = #tpu.dot_dimension_numbers<[1], [0], [0], [1], [0, 0, 1, 1], [], []>} : vector<256x128xbf16>, vector<128x128xbf16>, vector<256x128xf32> -> vector<256x128xf32>
    %270 = arith.addf %236, %269 : vector<256x128xf32>
    %c0_99 = arith.constant 0 : index
    %c0_100 = arith.constant 0 : index
    %271 = vector.load %arg3[%c0_99, %c0_100] : memref<1x128xf32, #tpu.memory_space<vmem>>, vector<1x128xf32>
    %272 = vector.broadcast %271 : vector<1x128xf32> to vector<256x128xf32>
    %273 = arith.addf %270, %272 : vector<256x128xf32>
    %cst_101 = arith.constant 0.000000e+00 : f32
    %274 = vector.broadcast %cst_101 : f32 to vector<256x128xf32>
    %275 = arith.maximumf %273, %274 : vector<256x128xf32>
    %c0_102 = arith.constant 0 : index
    %c0_103 = arith.constant 0 : index
    %c0_104 = arith.constant 0 : index
    %c0_105 = arith.constant 0 : index
    %276 = vector.load %arg4[%c0_102, %c0_103, %c0_104, %c0_105] : memref<1x16x16x256xf32, #tpu.memory_space<vmem>>, vector<1x16x16x128xf32>
    %277 = vector.shape_cast %276 : vector<1x16x16x128xf32> to vector<16x16x128xf32>
    %278 = vector.shape_cast %1 : vector<16x16x128xf32> to vector<1x16x16x128xf32>
    tpu.vector_store %arg4[%c0_102, %c0_103, %c0_104, %c0_105], %278 {strides = array<i32>} : memref<1x16x16x256xf32, #tpu.memory_space<vmem>>, vector<1x16x16x128xf32>,
    %279 = vector.shape_cast %275 : vector<256x128xf32> to vector<16x16x128xf32>
    %c0_106 = arith.constant 0 : index
    %c0_107 = arith.constant 0 : index
    %c0_108 = arith.constant 0 : index
    %c128 = arith.constant 128 : index
    %280 = vector.load %arg4[%c0_106, %c0_107, %c0_108, %c128] : memref<1x16x16x256xf32, #tpu.memory_space<vmem>>, vector<1x16x16x128xf32>
    %281 = vector.shape_cast %280 : vector<1x16x16x128xf32> to vector<16x16x128xf32>
    %282 = vector.shape_cast %279 : vector<16x16x128xf32> to vector<1x16x16x128xf32>
    tpu.vector_store %arg4[%c0_106, %c0_107, %c0_108, %c128], %282 {strides = array<i32>} : memref<1x16x16x256xf32, #tpu.memory_space<vmem>>, vector<1x16x16x128xf32>,
    return
  }
  func.func @transform_0(%arg0: i32) -> (i32, i32, i32, i32) {
    %c0_i32 = arith.constant 0 : i32
    %c0_i32_0 = arith.constant 0 : i32
    %c0_i32_1 = arith.constant 0 : i32
    %c0_i32_2 = arith.constant 0 : i32
    return %arg0, %c0_i32, %c0_i32_0, %c0_i32_1 : i32, i32, i32, i32
  }
  func.func @transform_1(%arg0: i32) -> (i32, i32, i32) {
    %c0_i32 = arith.constant 0 : i32
    %c0_i32_0 = arith.constant 0 : i32
    %c0_i32_1 = arith.constant 0 : i32
    %c0_i32_2 = arith.constant 0 : i32
    return %c0_i32, %c0_i32_0, %c0_i32_1 : i32, i32, i32
  }
  func.func @transform_2(%arg0: i32) -> (i32, i32) {
    %c0_i32 = arith.constant 0 : i32
    %c0_i32_0 = arith.constant 0 : i32
    %c0_i32_1 = arith.constant 0 : i32
    return %c0_i32, %c0_i32_0 : i32, i32
  }
  func.func @transform_3(%arg0: i32) -> (i32, i32, i32, i32) {
    %c0_i32 = arith.constant 0 : i32
    %c0_i32_0 = arith.constant 0 : i32
    %c0_i32_1 = arith.constant 0 : i32
    %c0_i32_2 = arith.constant 0 : i32
    return %arg0, %c0_i32, %c0_i32_0, %c0_i32_1 : i32, i32, i32, i32
  }
}

</mosaic_0001>

<llo_original>
// kernel: tpu_custom_call.1
$region0: #{tpu_custom_call.1}
  #allocation0 [shape = 'u32[]', space=smem, size = 0x4, offset = 0x4, fixed_abs, tag = 'smem constant byte address 0x4 - core index']
  #allocation1 [shape = 'u32[144,128]{1,0:T(1,128)}', space=vmem, size = 0x12000, scoped, tag = 'internal scratch']
  %s0 = inlined_call_operand.hbm [shape: f32[2,16,16,128], index: 0, kind: input, shape index: {}]
  %s1 = inlined_call_operand.hbm [shape: bf16[9,128,128], index: 1, kind: input, shape index: {}]
  %s2 = inlined_call_operand.vmem [shape: f32[1,128], index: 2, kind: input, shape index: {}]
  %s3 = inlined_call_operand.hbm [shape: f32[2,16,16,256], index: 3, kind: output, shape index: {}]
  %s4 = sld [smem:[#allocation0]]
  $region53: #{tpu_custom_call.1} parent=0
    _
  %s6 = ssub.s32 1, %s4
  %s7 = scalar_select 0, %s6, %s4
  $region1: #{tpu_custom_call.1} parent=0
    #allocation2 [shape = 'u8[262144]{0}', space=vmem, size = 0x40000, scoped, tag = 'input window, operand 0']
    #allocation3 [shape = 's32[2]{0}', space=sflag, size = 0x8, scoped, tag = 'scoped memory for tpu_custom_call.1']
    #allocation4 [shape = 's32[2]{0}', space=sflag, size = 0x8, scoped, tag = 'scoped memory for tpu_custom_call.1']
    #allocation5 [shape = 'u8[294912]{0}', space=vmem, size = 0x48000, scoped, tag = 'input window, operand 1, single buffered']
    #allocation6 [shape = 's32[1]{0}', space=sflag, size = 0x4, scoped, tag = 'scoped memory for tpu_custom_call.1']
    #allocation7 [shape = 'u8[524288]{0}', space=vmem, size = 0x80000, scoped, tag = 'output window, operand 0']
    %8 = vsyncpa [#allocation3], 0
    %s9 = scalar_lea.sflag [#allocation3], 1
    %10 = vsyncpa %s9, 0
    %11 = vsyncpa [#allocation6], 0
    %12 = vsyncpa [#allocation4], 0
    %s13 = scalar_lea.sflag [#allocation4], 1
    %14 = vsyncpa %s13, 0
    loop: start=0, step=1, limit=4
    $region2: #{tpu_custom_call.1} parent=1 // loop_pre_header
      _
    $region3: #{tpu_custom_call.1} parent=1 // loop_header
      %s16 = sphi 0, %s20
      %p17 = scmp.ge.s32.totalorder %s16, 4
      %s26 = sphi 0, %s28
      %s29 = sphi 0, %s26
      %s30 = sphi 0, %s29
      %s46 = sphi 0, %s30
      %s50 = sphi 0, %s50
      %s52 = sphi 0, %s50
      %s53 = sphi 0, %s52
      %s67 = sphi 0, %s53
      %s71 = sphi 0, %s71
      %s73 = sphi 0, %s71
      %s74 = sphi 0, %s73
      %s88 = sphi 0, %s74
      %s94 = sphi 0, %s96
      %s97 = sphi 0, %s94
      %s98 = sphi 0, %s97
      %s114 = sphi 0, %s98
    $region4: #{tpu_custom_call.1} parent=1 // loop_header_branch
      %19 = sbr.rel (%p17) target = $region8
    $region5: #{tpu_custom_call.1} parent=1 // loop_body
      %s21 = ssub.s32 %s16, 1
      %s22 = ssub.s32 %s16, 2
      %s23 = sadd.s32 %s16, 1
      %s24 = ssub.s32 %s16, %s23
      %p25 = scmp.eq.s32.totalorder %s24, 0
      %s27 = sadd.s32 %s26, 1
      %s28 = scalar_select %p25, %s26, %s27
      %p31 = pneg %p25
      %p32 = scmp.eq.s32.totalorder %s16, 1
      %p33 = por %p31, %p32
      %p34 = scmp.ne.s32.totalorder %s26, %s29
      %p35 = scmp.eq.s32.totalorder %s16, 0
      %p36 = por %p34, %p35
      %p37 = scmp.ne.s32.totalorder %s26, %s29
      %p38 = scmp.eq.s32.totalorder %s21, 1
      %p39 = por %p37, %p38
      %p40 = scmp.ne.s32.totalorder %s29, %s30
      %p41 = scmp.eq.s32.totalorder %s21, 0
      %p42 = por %p40, %p41
      %p43 = scmp.ne.s32.totalorder %s29, %s30
      %p44 = scmp.eq.s32.totalorder %s22, 1
      %p45 = por %p43, %p44
      %p47 = scmp.ne.s32.totalorder %s30, %s46
      %p48 = scmp.eq.s32.totalorder %s22, 0
      %p49 = por %p47, %p48
      %s51 = sadd.s32 %s50, 1
      %p54 = scmp.eq.s32.totalorder %s16, 1
      %p55 = scmp.ne.s32.totalorder %s50, %s52
      %p56 = scmp.eq.s32.totalorder %s16, 0
      %p57 = por %p55, %p56
      %p58 = scmp.ne.s32.totalorder %s50, %s52
      %p59 = scmp.eq.s32.totalorder %s21, 1
      %p60 = por %p58, %p59
      %p61 = scmp.ne.s32.totalorder %s52, %s53
      %p62 = scmp.eq.s32.totalorder %s21, 0
      %p63 = por %p61, %p62
      %p64 = scmp.ne.s32.totalorder %s52, %s53
      %p65 = scmp.eq.s32.totalorder %s22, 1
      %p66 = por %p64, %p65
      %p68 = scmp.ne.s32.totalorder %s53, %s67
      %p69 = scmp.eq.s32.totalorder %s22, 0
      %p70 = por %p68, %p69
      %s72 = sadd.s32 %s71, 1
      %p75 = scmp.eq.s32.totalorder %s16, 1
      %p76 = scmp.ne.s32.totalorder %s71, %s73
      %p77 = scmp.eq.s32.totalorder %s16, 0
      %p78 = por %p76, %p77
      %p79 = scmp.ne.s32.totalorder %s71, %s73
      %p80 = scmp.eq.s32.totalorder %s21, 1
      %p81 = por %p79, %p80
      %p82 = scmp.ne.s32.totalorder %s73, %s74
      %p83 = scmp.eq.s32.totalorder %s21, 0
      %p84 = por %p82, %p83
      %p85 = scmp.ne.s32.totalorder %s73, %s74
      %p86 = scmp.eq.s32.totalorder %s22, 1
      %p87 = por %p85, %p86
      %p89 = scmp.ne.s32.totalorder %s74, %s88
      %p90 = scmp.eq.s32.totalorder %s22, 0
      %p91 = por %p89, %p90
      %s92 = ssub.s32 %s16, %s23
      %p93 = scmp.eq.s32.totalorder %s92, 0
      %s95 = sadd.s32 %s94, 1
      %s96 = scalar_select %p93, %s94, %s95
      %p99 = pneg %p93
      %p100 = scmp.eq.s32.totalorder %s16, 1
      %p101 = por %p99, %p100
      %p102 = scmp.ne.s32.totalorder %s94, %s97
      %p103 = scmp.eq.s32.totalorder %s16, 0
      %p104 = por %p102, %p103
      %p105 = scmp.ne.s32.totalorder %s94, %s97
      %p106 = scmp.eq.s32.totalorder %s21, 1
      %p107 = por %p105, %p106
      %p108 = scmp.ne.s32.totalorder %s97, %s98
      %p109 = scmp.eq.s32.totalorder %s21, 0
      %p110 = por %p108, %p109
      %p111 = scmp.ne.s32.totalorder %s97, %s98
      %p112 = scmp.eq.s32.totalorder %s22, 1
      %p113 = por %p111, %p112
      %p115 = scmp.ne.s32.totalorder %s98, %s114
      %p116 = scmp.eq.s32.totalorder %s22, 0
      %p117 = por %p115, %p116
      %p118 = scmp.le.s32.totalorder 1, %s16
      %p119 = scmp.lt.s32.totalorder %s16, 3
      %p120 = pnand %p118, %p119
      %p121 = pneg %p120
      // Predicated region
      $region9: #{tpu_custom_call.1} parent=5 // pred_check
        _
      $region10: #{tpu_custom_call.1} parent=5 // pred_check_branch
        %123 = sbr.rel (%p120) target = $region12
      $region11: #{tpu_custom_call.1} parent=5 // pred_region
        %s124 = ssub.s32 %s16, 1
        // Predicated region
        $region13: #{tpu_custom_call.1} parent=11 // pred_check
          %p125 = pneg %p63
        $region14: #{tpu_custom_call.1} parent=11 // pred_check_branch
          %127 = sbr.rel (%p125) target = $region16
        $region15: #{tpu_custom_call.1} parent=11 // pred_region
          %s129 = ssub.s32 9216, 9216
          %130 = vsyncadd [#allocation6], %s129
          %s131 = sshll.u32 [#allocation5], 4
          %s132 = int_to_ptr.vmem [resolvable:$true] %s131
          %137 = dma.hbm_to_vmem [thread:$0]  %s1, 9216, %s132, [#allocation6], 64, 64, 4
        $region16: #{tpu_custom_call.1} parent=11 // pred_fallthru
          _
        // Predicated region
        $region17: #{tpu_custom_call.1} parent=11 // pred_check
          %p138 = pneg %p84
        $region18: #{tpu_custom_call.1} parent=11 // pred_check_branch
          %140 = sbr.rel (%p138) target = $region20
        $region19: #{tpu_custom_call.1} parent=11 // pred_region
          _
        $region20: #{tpu_custom_call.1} parent=11 // pred_fallthru
          _
      $region12: #{tpu_custom_call.1} parent=5 // pred_fallthru
        _
      %p141 = scmp.lt.s32.totalorder %s16, 2
      // Predicated region
      $region21: #{tpu_custom_call.1} parent=5 // pred_check
        %p142 = pneg %p141
      $region22: #{tpu_custom_call.1} parent=5 // pred_check_branch
        %144 = sbr.rel (%p142) target = $region24
      $region23: #{tpu_custom_call.1} parent=5 // pred_region
        // Predicated region
        $region25: #{tpu_custom_call.1} parent=23 // pred_check
          %p145 = pneg %p36
        $region26: #{tpu_custom_call.1} parent=23 // pred_check_branch
          %147 = sbr.rel (%p145) target = $region28
        $region27: #{tpu_custom_call.1} parent=23 // pred_region
          %s148 = sand.u32 %s26, 1
          %s149 = scalar_lea.sflag [#allocation3], %s148
          %s150 = sand.u32 %s26, 1
          %s151 = smul.addr %s150, 256
          %s152 = scalar_lea.vmem [#allocation2], %s151
          %s154 = ssub.s32 4096, 4096
          %155 = vsyncadd %s149, %s154
          %s156 = smul.addr %s16, 32
          %s157 = smul.addr %s156, 128
          %s158 = scalar_lea.hbm %s0, %s157
          %s159 = sshll.u32 %s152, 4
          %s160 = int_to_ptr.vmem [resolvable:$true] %s159
          %165 = dma.hbm_to_vmem [thread:$0]  %s158, 4096, %s160, %s149, 128, 128, 8
        $region28: #{tpu_custom_call.1} parent=23 // pred_fallthru
          _
      $region24: #{tpu_custom_call.1} parent=5 // pred_fallthru
        _
      %p166 = scmp.le.s32.totalorder 1, %s16
      %p167 = scmp.lt.s32.totalorder %s16, 3
      %p168 = pnand %p166, %p167
      %p169 = pneg %p168
      // Predicated region
      $region29: #{tpu_custom_call.1} parent=5 // pred_check
        _
      $region30: #{tpu_custom_call.1} parent=5 // pred_check_branch
        %171 = sbr.rel (%p168) target = $region32
      $region31: #{tpu_custom_call.1} parent=5 // pred_region
        %s172 = ssub.s32 %s16, 1
        %s173 = sand.u32 %s29, 1
        %s174 = scalar_lea.sflag [#allocation3], %s173
        %s175 = sand.u32 %s29, 1
        %s176 = smul.addr %s175, 256
        %s177 = scalar_lea.vmem [#allocation2], %s176
        // Predicated region
        $region33: #{tpu_custom_call.1} parent=31 // pred_check
          %p178 = pneg %p42
        $region34: #{tpu_custom_call.1} parent=31 // pred_check_branch
          %180 = sbr.rel (%p178) target = $region36
        $region35: #{tpu_custom_call.1} parent=31 // pred_region
          %181 = dma.done %s174, 4096
        $region36: #{tpu_custom_call.1} parent=31 // pred_fallthru
          _
        // Predicated region
        $region37: #{tpu_custom_call.1} parent=31 // pred_check
          %p182 = pneg %p63
        $region38: #{tpu_custom_call.1} parent=31 // pred_check_branch
          %184 = sbr.rel (%p182) target = $region40
        $region39: #{tpu_custom_call.1} parent=31 // pred_region
          %185 = dma.done [#allocation6], 9216
        $region40: #{tpu_custom_call.1} parent=31 // pred_fallthru
          _
        %s186 = sand.u32 %s29, 1
        %s187 = scalar_lea.sflag [#allocation3], %s186
        %s188 = sand.u32 %s29, 1
        %s189 = smul.addr %s188, 256
        %s190 = scalar_lea.vmem [#allocation2], %s189
        %p191 = pneg %p42
        %p192 = pneg %p39
        %p193 = pneg %p63
        %p194 = pneg %p60
        %p195 = pneg %p84
        %p196 = pneg %p81
        %p197 = pneg %p110
        %p198 = pneg %p107
        %s199 = sand.u32 %s97, 1
        %s200 = scalar_lea.sflag [#allocation4], %s199
        %s201 = sand.u32 %s97, 1
        %s202 = smul.addr %s201, 512
        %s203 = scalar_lea.vmem [#allocation7], %s202
        %v207 = vld [vmem:[%s177] sm:$0xff]
        %v208 = vld [vmem:[%s177 + $0x8] sm:$0xff]
        %v209 = vld [vmem:[%s177 + $0x10] sm:$0xff]
        %v210 = vld [vmem:[%s177 + $0x18] sm:$0xff]
        %v211 = vld [vmem:[%s177 + $0x20] sm:$0xff]
        %v212 = vld [vmem:[%s177 + $0x28] sm:$0xff]
        %v213 = vld [vmem:[%s177 + $0x30] sm:$0xff]
        %v214 = vld [vmem:[%s177 + $0x38] sm:$0xff]
        %v215 = vld [vmem:[%s177 + $0x40] sm:$0xff]
        %v216 = vld [vmem:[%s177 + $0x48] sm:$0xff]
        %v217 = vld [vmem:[%s177 + $0x50] sm:$0xff]
        %v218 = vld [vmem:[%s177 + $0x58] sm:$0xff]
        %v219 = vld [vmem:[%s177 + $0x60] sm:$0xff]
        %v220 = vld [vmem:[%s177 + $0x68] sm:$0xff]
        %v221 = vld [vmem:[%s177 + $0x70] sm:$0xff]
        %v222 = vld [vmem:[%s177 + $0x78] sm:$0xff]
        %v223 = vld [vmem:[%s177 + $0x80] sm:$0xff]
        %v224 = vld [vmem:[%s177 + $0x88] sm:$0xff]
        %v225 = vld [vmem:[%s177 + $0x90] sm:$0xff]
        %v226 = vld [vmem:[%s177 + $0x98] sm:$0xff]
        %v227 = vld [vmem:[%s177 + $0xa0] sm:$0xff]
        %v228 = vld [vmem:[%s177 + $0xa8] sm:$0xff]
        %v229 = vld [vmem:[%s177 + $0xb0] sm:$0xff]
        %v230 = vld [vmem:[%s177 + $0xb8] sm:$0xff]
        %v231 = vld [vmem:[%s177 + $0xc0] sm:$0xff]
        %v232 = vld [vmem:[%s177 + $0xc8] sm:$0xff]
        %v233 = vld [vmem:[%s177 + $0xd0] sm:$0xff]
        %v234 = vld [vmem:[%s177 + $0xd8] sm:$0xff]
        %v235 = vld [vmem:[%s177 + $0xe0] sm:$0xff]
        %v236 = vld [vmem:[%s177 + $0xe8] sm:$0xff]
        %v237 = vld [vmem:[%s177 + $0xf0] sm:$0xff]
        %v238 = vld [vmem:[%s177 + $0xf8] sm:$0xff]
        %v239 = vpack.c.bf16 %v208, %v207
        %v240 = vpack.c.bf16 %v210, %v209
        %v241 = vpack.c.bf16 %v212, %v211
        %v242 = vpack.c.bf16 %v214, %v213
        %v243 = vpack.c.bf16 %v216, %v215
        %v244 = vpack.c.bf16 %v218, %v217
        %v245 = vpack.c.bf16 %v220, %v219
        %v246 = vpack.c.bf16 %v222, %v221
        %v247 = vpack.c.bf16 %v224, %v223
        %v248 = vpack.c.bf16 %v226, %v225
        %v249 = vpack.c.bf16 %v228, %v227
        %v250 = vpack.c.bf16 %v230, %v229
        %v251 = vpack.c.bf16 %v232, %v231
        %v252 = vpack.c.bf16 %v234, %v233
        %v253 = vpack.c.bf16 %v236, %v235
        %v254 = vpack.c.bf16 %v238, %v237
        %v255 = vlaneseq
        %v256 = vshrl.u32 %v255, 7
        %v257 = vadd.s32 %v256, 8
        %v259 = vshrl.u32 %v254, 16
        %v261 = vrot.slane %v259, 7
        %v263 = vshrl.u32 %v239, 16
        %v265 = vrot.slane %v263, 7
        %v267 = vshrl.u32 %v240, 16
        %v269 = vrot.slane %v267, 7
        %v271 = vshrl.u32 %v241, 16
        %v273 = vrot.slane %v271, 7
        %v275 = vshrl.u32 %v242, 16
        %v277 = vrot.slane %v275, 7
        %v279 = vshrl.u32 %v243, 16
        %v281 = vrot.slane %v279, 7
        %v283 = vshrl.u32 %v244, 16
        %v285 = vrot.slane %v283, 7
        %v287 = vshrl.u32 %v245, 16
        %v289 = vrot.slane %v287, 7
        %v291 = vshrl.u32 %v246, 16
        %v293 = vrot.slane %v291, 7
        %v295 = vshrl.u32 %v247, 16
        %v297 = vrot.slane %v295, 7
        %v299 = vshrl.u32 %v248, 16
        %v301 = vrot.slane %v299, 7
        %v303 = vshrl.u32 %v249, 16
        %v305 = vrot.slane %v303, 7
        %v307 = vshrl.u32 %v250, 16
        %v309 = vrot.slane %v307, 7
        %v311 = vshrl.u32 %v251, 16
        %v313 = vrot.slane %v311, 7
        %v315 = vshrl.u32 %v252, 16
        %v317 = vrot.slane %v315, 7
        %v319 = vshrl.u32 %v253, 16
        %v321 = vrot.slane %v319, 7
        %v338 = vshll.u32 %v254, 16
        %v340 = vor.u32 %v261, %v338
        %v341 = vshll.u32 %v239, 16
        %v343 = vor.u32 %v265, %v341
        %v344 = vshll.u32 %v240, 16
        %v346 = vor.u32 %v269, %v344
        %v347 = vshll.u32 %v241, 16
        %v349 = vor.u32 %v273, %v347
        %v350 = vshll.u32 %v242, 16
        %v352 = vor.u32 %v277, %v350
        %v353 = vshll.u32 %v243, 16
        %v355 = vor.u32 %v281, %v353
        %v356 = vshll.u32 %v244, 16
        %v358 = vor.u32 %v285, %v356
        %v359 = vshll.u32 %v245, 16
        %v361 = vor.u32 %v289, %v359
        %v362 = vshll.u32 %v246, 16
        %v364 = vor.u32 %v293, %v362
        %v365 = vshll.u32 %v247, 16
        %v367 = vor.u32 %v297, %v365
        %v368 = vshll.u32 %v248, 16
        %v370 = vor.u32 %v301, %v368
        %v371 = vshll.u32 %v249, 16
        %v373 = vor.u32 %v305, %v371
        %v374 = vshll.u32 %v250, 16
        %v376 = vor.u32 %v309, %v374
        %v377 = vshll.u32 %v251, 16
        %v379 = vor.u32 %v313, %v377
        %v380 = vshll.u32 %v252, 16
        %v382 = vor.u32 %v317, %v380
        %v383 = vshll.u32 %v253, 16
        %v385 = vor.u32 %v321, %v383
        %vm402 = vcmask 1040384
        %vm403 = vsmask.f32 256
        %vm404 = vmand %vm402, %vm403
        %v405 = vsel %vm404, %v261, %v340
        %v406 = vsel %vm404, %v265, %v343
        %v407 = vsel %vm404, %v269, %v346
        %v408 = vsel %vm404, %v273, %v349
        %v409 = vsel %vm404, %v277, %v352
        %v410 = vsel %vm404, %v281, %v355
        %v411 = vsel %vm404, %v285, %v358
        %v412 = vsel %vm404, %v289, %v361
        %v413 = vsel %vm404, %v293, %v364
        %v414 = vsel %vm404, %v297, %v367
        %v415 = vsel %vm404, %v301, %v370
        %v416 = vsel %vm404, %v305, %v373
        %v417 = vsel %vm404, %v309, %v376
        %v418 = vsel %vm404, %v313, %v379
        %v419 = vsel %vm404, %v317, %v382
        %v420 = vsel %vm404, %v321, %v385
        %v421 = vadd.s32 %v256, 4294967295
        %v422 = vadd.s32 %v257, 4294967295
        %vm423 = vcmp.ge.s32.totalorder %v421, 0
        %vm424 = vcmp.ge.s32.totalorder %v422, 0
        %vm425 = vmand 0, %vm423
        %vm426 = vmand 0, %vm424
        %vm427 = vmand 1, %vm423
        %vm428 = vmand 1, %vm424
        %vm429 = vcmp.lt.s32.totalorder %v421, 16
        %vm430 = vcmp.lt.s32.totalorder %v422, 16
        %vm431 = vmand %vm425, %vm429
        %vm432 = vmand %vm426, %vm430
        %vm433 = vmand %vm427, %vm429
        %vm434 = vmand %vm428, %vm430
        %v435 = vsel %vm431, 1, 0
        %v436 = vsel %vm432, 1, 0
        %v437 = vsel %vm433, 1, 0
        %v438 = vsel %vm434, 1, 0
        %vm439 = vcmp.eq.s32.totalorder %v435, 1
        %vm440 = vcmp.eq.s32.totalorder %v436, 1
        %vm441 = vcmp.eq.s32.totalorder %v437, 1
        %vm442 = vcmp.eq.s32.totalorder %v438, 1
        %vm443 = vmpackc.low %vm439, %vm439
        %vm444 = vmpackc.low %vm440, %vm440
        %vm445 = vmpackc.low %vm441, %vm441
        %vm446 = vmpackc.low %vm442, %vm442
        %v447 = vsel %vm443, 65537, 0
        %v448 = vsel %vm444, 65537, 0
        %v449 = vsel %vm445, 65537, 0
        %v450 = vsel %vm446, 65537, 0
        %v451 = vunpack.c.l.b16 %v447
        %v452 = vunpack.c.l.b16 %v448
        %v453 = vunpack.c.l.b16 %v449
        %v454 = vunpack.c.l.b16 %v450
        %v455 = vpack.c.b16 %v452, %v451
        %v456 = vpack.c.b16 %v454, %v453
        %vm457 = vcmp.ne.s16.totalorder %v455, 0
        %vm458 = vcmp.ne.s16.totalorder %v456, 0
        %v459 = vsel %vm457, %v405, 0
        %v460 = vsel %vm458, %v406, 0
        %v461 = vsel %vm458, %v407, 0
        %v462 = vsel %vm458, %v408, 0
        %v463 = vsel %vm458, %v409, 0
        %v464 = vsel %vm458, %v410, 0
        %v465 = vsel %vm458, %v411, 0
        %v466 = vsel %vm458, %v412, 0
        %v467 = vsel %vm458, %v413, 0
        %v468 = vsel %vm458, %v414, 0
        %v469 = vsel %vm458, %v415, 0
        %v470 = vsel %vm458, %v416, 0
        %v471 = vsel %vm458, %v417, 0
        %v472 = vsel %vm458, %v418, 0
        %v473 = vsel %vm458, %v419, 0
        %v474 = vsel %vm458, %v420, 0
        %v475 = vld [vmem:[#allocation5] sm:$0xf]
        %v476 = vld [vmem:[#allocation5 + $0x4] sm:$0xf]
        %v477 = vld [vmem:[#allocation5 + $0x8] sm:$0xf]
        %v478 = vld [vmem:[#allocation5 + $0xc] sm:$0xf]
        %v479 = vld [vmem:[#allocation5 + $0x10] sm:$0xf]
        %v480 = vld [vmem:[#allocation5 + $0x14] sm:$0xf]
        %v481 = vld [vmem:[#allocation5 + $0x18] sm:$0xf]
        %v482 = vld [vmem:[#allocation5 + $0x1c] sm:$0xf]
        %v483 = vld [vmem:[#allocation5 + $0x20] sm:$0xf]
        %v484 = vld [vmem:[#allocation5 + $0x24] sm:$0xf]
        %v485 = vld [vmem:[#allocation5 + $0x28] sm:$0xf]
        %v486 = vld [vmem:[#allocation5 + $0x2c] sm:$0xf]
        %v487 = vld [vmem:[#allocation5 + $0x30] sm:$0xf]
        %v488 = vld [vmem:[#allocation5 + $0x34] sm:$0xf]
        %v489 = vld [vmem:[#allocation5 + $0x38] sm:$0xf]
        %v490 = vld [vmem:[#allocation5 + $0x3c] sm:$0xf]
        %vm491 = vcmp.ge.s32.totalorder %v256, 0
        %vm492 = vcmp.ge.s32.totalorder %v257, 0
        %vm493 = vmand 0, %vm491
        %vm494 = vmand 0, %vm492
        %vm495 = vmand 1, %vm491
        %vm496 = vmand 1, %vm492
        %vm497 = vcmp.lt.s32.totalorder %v256, 16
        %vm498 = vcmp.lt.s32.totalorder %v257, 16
        %vm499 = vmand %vm493, %vm497
        %vm500 = vmand %vm494, %vm498
        %vm501 = vmand %vm495, %vm497
        %vm502 = vmand %vm496, %vm498
        %v503 = vsel %vm499, 1, 0
        %v504 = vsel %vm500, 1, 0
        %v505 = vsel %vm501, 1, 0
        %v506 = vsel %vm502, 1, 0
        %vm507 = vcmp.eq.s32.totalorder %v503, 1
        %vm508 = vcmp.eq.s32.totalorder %v504, 1
        %vm509 = vcmp.eq.s32.totalorder %v505, 1
        %vm510 = vcmp.eq.s32.totalorder %v506, 1
        %vm511 = vmpackc.low %vm507, %vm507
        %vm512 = vmpackc.low %vm508, %vm508
        %vm513 = vmpackc.low %vm509, %vm509
        %vm514 = vmpackc.low %vm510, %vm510
        %v515 = vsel %vm511, 65537, 0
        %v516 = vsel %vm512, 65537, 0
        %v517 = vsel %vm513, 65537, 0
        %v518 = vsel %vm514, 65537, 0
        %v519 = vunpack.c.l.b16 %v515
        %v520 = vunpack.c.l.b16 %v516
        %v521 = vunpack.c.l.b16 %v517
        %v522 = vunpack.c.l.b16 %v518
        %v523 = vpack.c.b16 %v520, %v519
        %v524 = vpack.c.b16 %v522, %v521
        %vm525 = vcmp.ne.s16.totalorder %v523, 0
        %vm526 = vcmp.ne.s16.totalorder %v524, 0
        %v527 = vsel %vm525, %v254, 0
        %v528 = vsel %vm526, %v239, 0
        %v529 = vsel %vm526, %v240, 0
        %v530 = vsel %vm526, %v241, 0
        %v531 = vsel %vm526, %v242, 0
        %v532 = vsel %vm526, %v243, 0
        %v533 = vsel %vm526, %v244, 0
        %v534 = vsel %vm526, %v245, 0
        %v535 = vsel %vm526, %v246, 0
        %v536 = vsel %vm526, %v247, 0
        %v537 = vsel %vm526, %v248, 0
        %v538 = vsel %vm526, %v249, 0
        %v539 = vsel %vm526, %v250, 0
        %v540 = vsel %vm526, %v251, 0
        %v541 = vsel %vm526, %v252, 0
        %v542 = vsel %vm526, %v253, 0
        %s543 = scalar_lea.vmem [#allocation5], 64
        %v544 = vld [vmem:[%s543] sm:$0xf]
        %v545 = vld [vmem:[%s543 + $0x4] sm:$0xf]
        %v546 = vld [vmem:[%s543 + $0x8] sm:$0xf]
        %v547 = vld [vmem:[%s543 + $0xc] sm:$0xf]
        %v548 = vld [vmem:[%s543 + $0x10] sm:$0xf]
        %v549 = vld [vmem:[%s543 + $0x14] sm:$0xf]
        %v550 = vld [vmem:[%s543 + $0x18] sm:$0xf]
        %v551 = vld [vmem:[%s543 + $0x1c] sm:$0xf]
        %v552 = vld [vmem:[%s543 + $0x20] sm:$0xf]
        %v553 = vld [vmem:[%s543 + $0x24] sm:$0xf]
        %v554 = vld [vmem:[%s543 + $0x28] sm:$0xf]
        %v555 = vld [vmem:[%s543 + $0x2c] sm:$0xf]
        %v556 = vld [vmem:[%s543 + $0x30] sm:$0xf]
        %v557 = vld [vmem:[%s543 + $0x34] sm:$0xf]
        %v558 = vld [vmem:[%s543 + $0x38] sm:$0xf]
        %v559 = vld [vmem:[%s543 + $0x3c] sm:$0xf]
        %v576 = vunpack.c.l.b16 %v544
        %v577 = vunpack.c.l.b16 %v545
        %v578 = vunpack.c.l.b16 %v546
        %v579 = vunpack.c.l.b16 %v547
        %v580 = vunpack.c.l.b16 %v548
        %v581 = vunpack.c.l.b16 %v549
        %v582 = vunpack.c.l.b16 %v550
        %v583 = vunpack.c.l.b16 %v551
        %v584 = vunpack.c.l.b16 %v552
        %v585 = vunpack.c.l.b16 %v553
        %v586 = vunpack.c.l.b16 %v554
        %v587 = vunpack.c.l.b16 %v555
        %v588 = vunpack.c.l.b16 %v556
        %v589 = vunpack.c.l.b16 %v557
        %v590 = vunpack.c.l.b16 %v558
        %v591 = vunpack.c.l.b16 %v559
        %v592 = vpack.c.b16 %v577, %v576
        %v593 = vpack.c.b16 %v579, %v578
        %v594 = vpack.c.b16 %v581, %v580
        %v595 = vpack.c.b16 %v583, %v582
        %v596 = vpack.c.b16 %v585, %v584
        %v597 = vpack.c.b16 %v587, %v586
        %v598 = vpack.c.b16 %v589, %v588
        %v599 = vpack.c.b16 %v591, %v590
        %608 = vmatprep.subr.bf16.mxu0 0
        %609 = vmatpush1.bf16.msra.mxu0 %v599
        %610 = vmatprep.subr.bf16.mxu0 0
        %611 = vmatpush1.bf16.msra.mxu0 %v598
        %612 = vmatprep.subr.bf16.mxu0 0
        %613 = vmatpush1.bf16.msra.mxu0 %v597
        %614 = vmatprep.subr.bf16.mxu0 0
        %615 = vmatpush1.bf16.msra.mxu0 %v596
        %616 = vmatprep.subr.bf16.mxu0 0
        %617 = vmatpush1.bf16.msra.mxu0 %v595
        %618 = vmatprep.subr.bf16.mxu0 0
        %619 = vmatpush1.bf16.msra.mxu0 %v594
        %620 = vmatprep.subr.bf16.mxu0 0
        %621 = vmatpush1.bf16.msra.mxu0 %v593
        %622 = vmatprep.subr.bf16.mxu0 0
        %623 = vmatpush1.bf16.msra.mxu0 %v592
        %624 = vmatprep.subr.bf16.mxu0 0
        %625 = vmatpush2.bf16.msra.mxu0 0
        %626 = vmatprep.subr.bf16.mxu0 0
        %627 = vmatpush2.bf16.msra.mxu0 0
        %628 = vmatprep.subr.bf16.mxu0 0
        %629 = vmatpush2.bf16.msra.mxu0 0
        %630 = vmatprep.subr.bf16.mxu0 0
        %631 = vmatpush2.bf16.msra.mxu0 0
        %632 = vmatprep.subr.bf16.mxu0 0
        %633 = vmatpush2.bf16.msra.mxu0 0
        %634 = vmatprep.subr.bf16.mxu0 0
        %635 = vmatpush2.bf16.msra.mxu0 0
        %636 = vmatprep.subr.bf16.mxu0 0
        %637 = vmatpush2.bf16.msra.mxu0 0
        %638 = vmatprep.subr.bf16.mxu0 0
        %639 = vmatpush2.bf16.msra.mxu0 0
        %640 = vmatprep.mubr.bf16.mxu0 0
        %641 = vmatmul.mubr.bf16.gmra.mxu0 %v527
        %v642 = vpop.f32.mrf.mxu0
        %v643 = vadd.f32 0.0, %v642
        %v644 = vpop.f32.mrf.mxu0
        %v645 = vpop.f32.mrf.mxu0
        %v646 = vadd.f32 0.0, %v645
        %v647 = vpop.f32.mrf.mxu0
        %648 = vmatprep.mubr.bf16.mxu0 0
        %649 = vmatmul.mubr.bf16.gmra.mxu0 %v528
        %v650 = vpop.f32.mrf.mxu0
        %v651 = vadd.f32 0.0, %v650
        %v652 = vpop.f32.mrf.mxu0
        %v653 = vpop.f32.mrf.mxu0
        %v654 = vadd.f32 0.0, %v653
        %v655 = vpop.f32.mrf.mxu0
        %656 = vmatprep.mubr.bf16.mxu0 0
        %657 = vmatmul.mubr.bf16.gmra.mxu0 %v529
        %v658 = vpop.f32.mrf.mxu0
        %v659 = vadd.f32 0.0, %v658
        %v660 = vpop.f32.mrf.mxu0
        %v661 = vpop.f32.mrf.mxu0
        %v662 = vadd.f32 0.0, %v661
        %v663 = vpop.f32.mrf.mxu0
        %664 = vmatprep.mubr.bf16.mxu0 0
        %665 = vmatmul.mubr.bf16.gmra.mxu0 %v530
        %v666 = vpop.f32.mrf.mxu0
        %v667 = vadd.f32 0.0, %v666
        %v668 = vpop.f32.mrf.mxu0
        %v669 = vpop.f32.mrf.mxu0
        %v670 = vadd.f32 0.0, %v669
        %v671 = vpop.f32.mrf.mxu0
        %672 = vmatprep.mubr.bf16.mxu0 0
        %673 = vmatmul.mubr.bf16.gmra.mxu0 %v531
        %v674 = vpop.f32.mrf.mxu0
        %v675 = vadd.f32 0.0, %v674
        %v676 = vpop.f32.mrf.mxu0
        %v677 = vpop.f32.mrf.mxu0
        %v678 = vadd.f32 0.0, %v677
        %v679 = vpop.f32.mrf.mxu0
        %680 = vmatprep.mubr.bf16.mxu0 0
        %681 = vmatmul.mubr.bf16.gmra.mxu0 %v532
        %v682 = vpop.f32.mrf.mxu0
        %v683 = vadd.f32 0.0, %v682
        %v684 = vpop.f32.mrf.mxu0
        %v685 = vpop.f32.mrf.mxu0
        %v686 = vadd.f32 0.0, %v685
        %v687 = vpop.f32.mrf.mxu0
        %688 = vmatprep.mubr.bf16.mxu0 0
        %689 = vmatmul.mubr.bf16.gmra.mxu0 %v533
        %v690 = vpop.f32.mrf.mxu0
        %v691 = vadd.f32 0.0, %v690
        %v692 = vpop.f32.mrf.mxu0
        %v693 = vpop.f32.mrf.mxu0
        %v694 = vadd.f32 0.0, %v693
        %v695 = vpop.f32.mrf.mxu0
        %696 = vmatprep.mubr.bf16.mxu0 0
        %697 = vmatmul.mubr.bf16.gmra.mxu0 %v534
        %v698 = vpop.f32.mrf.mxu0
        %v699 = vadd.f32 0.0, %v698
        %v700 = vpop.f32.mrf.mxu0
        %v701 = vpop.f32.mrf.mxu0
        %v702 = vadd.f32 0.0, %v701
        %v703 = vpop.f32.mrf.mxu0
        %704 = vmatprep.mubr.bf16.mxu0 0
        %705 = vmatmul.mubr.bf16.gmra.mxu0 %v535
        %v706 = vpop.f32.mrf.mxu0
        %v707 = vadd.f32 0.0, %v706
        %v708 = vpop.f32.mrf.mxu0
        %v709 = vpop.f32.mrf.mxu0
        %v710 = vadd.f32 0.0, %v709
        %v711 = vpop.f32.mrf.mxu0
        %712 = vmatprep.mubr.bf16.mxu0 0
        %713 = vmatmul.mubr.bf16.gmra.mxu0 %v536
        %v714 = vpop.f32.mrf.mxu0
        %v715 = vadd.f32 0.0, %v714
        %v716 = vpop.f32.mrf.mxu0
        %v717 = vpop.f32.mrf.mxu0
        %v718 = vadd.f32 0.0, %v717
        %v719 = vpop.f32.mrf.mxu0
        %720 = vmatprep.mubr.bf16.mxu0 0
        %721 = vmatmul.mubr.bf16.gmra.mxu0 %v537
        %v722 = vpop.f32.mrf.mxu0
        %v723 = vadd.f32 0.0, %v722
        %v724 = vpop.f32.mrf.mxu0
        %v725 = vpop.f32.mrf.mxu0
        %v726 = vadd.f32 0.0, %v725
        %v727 = vpop.f32.mrf.mxu0
        %728 = vmatprep.mubr.bf16.mxu0 0
        %729 = vmatmul.mubr.bf16.gmra.mxu0 %v538
        %v730 = vpop.f32.mrf.mxu0
        %v731 = vadd.f32 0.0, %v730
        %v732 = vpop.f32.mrf.mxu0
        %v733 = vpop.f32.mrf.mxu0
        %v734 = vadd.f32 0.0, %v733
        %v735 = vpop.f32.mrf.mxu0
        %736 = vmatprep.mubr.bf16.mxu0 0
        %737 = vmatmul.mubr.bf16.gmra.mxu0 %v539
        %v738 = vpop.f32.mrf.mxu0
        %v739 = vadd.f32 0.0, %v738
        %v740 = vpop.f32.mrf.mxu0
        %v741 = vpop.f32.mrf.mxu0
        %v742 = vadd.f32 0.0, %v741
        %v743 = vpop.f32.mrf.mxu0
        %744 = vmatprep.mubr.bf16.mxu0 0
        %745 = vmatmul.mubr.bf16.gmra.mxu0 %v540
        %v746 = vpop.f32.mrf.mxu0
        %v747 = vadd.f32 0.0, %v746
        %v748 = vpop.f32.mrf.mxu0
        %v749 = vpop.f32.mrf.mxu0
        %v750 = vadd.f32 0.0, %v749
        %v751 = vpop.f32.mrf.mxu0
        %752 = vmatprep.mubr.bf16.mxu0 0
        %753 = vmatmul.mubr.bf16.gmra.mxu0 %v541
        %v754 = vpop.f32.mrf.mxu0
        %v755 = vadd.f32 0.0, %v754
        %v756 = vpop.f32.mrf.mxu0
        %v757 = vpop.f32.mrf.mxu0
        %v758 = vadd.f32 0.0, %v757
        %v759 = vpop.f32.mrf.mxu0
        %760 = vmatprep.mubr.bf16.mxu0 0
        %761 = vmatmul.mubr.bf16.gmra.mxu0 %v542
        %v762 = vpop.f32.mrf.mxu0
        %v763 = vadd.f32 0.0, %v762
        %v764 = vpop.f32.mrf.mxu0
        %v765 = vpop.f32.mrf.mxu0
        %v766 = vadd.f32 0.0, %v765
        %v767 = vpop.f32.mrf.mxu0
        %768 = vdwg.mxu0
        %v785 = vunpack.c.l.b16 %v475
        %v786 = vunpack.c.l.b16 %v476
        %v787 = vunpack.c.l.b16 %v477
        %v788 = vunpack.c.l.b16 %v478
        %v789 = vunpack.c.l.b16 %v479
        %v790 = vunpack.c.l.b16 %v480
        %v791 = vunpack.c.l.b16 %v481
        %v792 = vunpack.c.l.b16 %v482
        %v793 = vunpack.c.l.b16 %v483
        %v794 = vunpack.c.l.b16 %v484
        %v795 = vunpack.c.l.b16 %v485
        %v796 = vunpack.c.l.b16 %v486
        %v797 = vunpack.c.l.b16 %v487
        %v798 = vunpack.c.l.b16 %v488
        %v799 = vunpack.c.l.b16 %v489
        %v800 = vunpack.c.l.b16 %v490
        %v801 = vpack.c.b16 %v786, %v785
        %v802 = vpack.c.b16 %v788, %v787
        %v803 = vpack.c.b16 %v790, %v789
        %v804 = vpack.c.b16 %v792, %v791
        %v805 = vpack.c.b16 %v794, %v793
        %v806 = vpack.c.b16 %v796, %v795
        %v807 = vpack.c.b16 %v798, %v797
        %v808 = vpack.c.b16 %v800, %v799
        %817 = vmatprep.subr.bf16.mxu0 0
        %818 = vmatpush1.bf16.msra.mxu0 %v808
        %819 = vmatprep.subr.bf16.mxu0 0
        %820 = vmatpush1.bf16.msra.mxu0 %v807
        %821 = vmatprep.subr.bf16.mxu0 0
        %822 = vmatpush1.bf16.msra.mxu0 %v806
        %823 = vmatprep.subr.bf16.mxu0 0
        %824 = vmatpush1.bf16.msra.mxu0 %v805
        %825 = vmatprep.subr.bf16.mxu0 0
        %826 = vmatpush1.bf16.msra.mxu0 %v804
        %827 = vmatprep.subr.bf16.mxu0 0
        %828 = vmatpush1.bf16.msra.mxu0 %v803
        %829 = vmatprep.subr.bf16.mxu0 0
        %830 = vmatpush1.bf16.msra.mxu0 %v802
        %831 = vmatprep.subr.bf16.mxu0 0
        %832 = vmatpush1.bf16.msra.mxu0 %v801
        %833 = vmatprep.subr.bf16.mxu0 0
        %834 = vmatpush2.bf16.msra.mxu0 0
        %835 = vmatprep.subr.bf16.mxu0 0
        %836 = vmatpush2.bf16.msra.mxu0 0
        %837 = vmatprep.subr.bf16.mxu0 0
        %838 = vmatpush2.bf16.msra.mxu0 0
        %839 = vmatprep.subr.bf16.mxu0 0
        %840 = vmatpush2.bf16.msra.mxu0 0
        %841 = vmatprep.subr.bf16.mxu0 0
        %842 = vmatpush2.bf16.msra.mxu0 0
        %843 = vmatprep.subr.bf16.mxu0 0
        %844 = vmatpush2.bf16.msra.mxu0 0
        %845 = vmatprep.subr.bf16.mxu0 0
        %846 = vmatpush2.bf16.msra.mxu0 0
        %847 = vmatprep.subr.bf16.mxu0 0
        %848 = vmatpush2.bf16.msra.mxu0 0
        %849 = vmatprep.mubr.bf16.mxu0 0
        %850 = vmatmul.mubr.bf16.gmra.mxu0 %v459
        %v851 = vpop.f32.mrf.mxu0
        %v852 = vadd.f32 %v643, %v851
        %v853 = vpop.f32.mrf.mxu0
        %v854 = vpop.f32.mrf.mxu0
        %v855 = vadd.f32 %v646, %v854
        %v856 = vpop.f32.mrf.mxu0
        %857 = vmatprep.mubr.bf16.mxu0 0
        %858 = vmatmul.mubr.bf16.gmra.mxu0 %v460
        %v859 = vpop.f32.mrf.mxu0
        %v860 = vadd.f32 %v651, %v859
        %v861 = vpop.f32.mrf.mxu0
        %v862 = vpop.f32.mrf.mxu0
        %v863 = vadd.f32 %v654, %v862
        %v864 = vpop.f32.mrf.mxu0
        %865 = vmatprep.mubr.bf16.mxu0 0
        %866 = vmatmul.mubr.bf16.gmra.mxu0 %v461
        %v867 = vpop.f32.mrf.mxu0
        %v868 = vadd.f32 %v659, %v867
        %v869 = vpop.f32.mrf.mxu0
        %v870 = vpop.f32.mrf.mxu0
        %v871 = vadd.f32 %v662, %v870
        %v872 = vpop.f32.mrf.mxu0
        %873 = vmatprep.mubr.bf16.mxu0 0
        %874 = vmatmul.mubr.bf16.gmra.mxu0 %v462
        %v875 = vpop.f32.mrf.mxu0
        %v876 = vadd.f32 %v667, %v875
        %v877 = vpop.f32.mrf.mxu0
        %v878 = vpop.f32.mrf.mxu0
        %v879 = vadd.f32 %v670, %v878
        %v880 = vpop.f32.mrf.mxu0
        %881 = vmatprep.mubr.bf16.mxu0 0
        %882 = vmatmul.mubr.bf16.gmra.mxu0 %v463
        %v883 = vpop.f32.mrf.mxu0
        %v884 = vadd.f32 %v675, %v883
        %v885 = vpop.f32.mrf.mxu0
        %v886 = vpop.f32.mrf.mxu0
        %v887 = vadd.f32 %v678, %v886
        %v888 = vpop.f32.mrf.mxu0
        %889 = vmatprep.mubr.bf16.mxu0 0
        %890 = vmatmul.mubr.bf16.gmra.mxu0 %v464
        %v891 = vpop.f32.mrf.mxu0
        %v892 = vadd.f32 %v683, %v891
        %v893 = vpop.f32.mrf.mxu0
        %v894 = vpop.f32.mrf.mxu0
        %v895 = vadd.f32 %v686, %v894
        %v896 = vpop.f32.mrf.mxu0
        %897 = vmatprep.mubr.bf16.mxu0 0
        %898 = vmatmul.mubr.bf16.gmra.mxu0 %v465
        %v899 = vpop.f32.mrf.mxu0
        %v900 = vadd.f32 %v691, %v899
        %v901 = vpop.f32.mrf.mxu0
        %v902 = vpop.f32.mrf.mxu0
        %v903 = vadd.f32 %v694, %v902
        %v904 = vpop.f32.mrf.mxu0
        %905 = vmatprep.mubr.bf16.mxu0 0
        %906 = vmatmul.mubr.bf16.gmra.mxu0 %v466
        %v907 = vpop.f32.mrf.mxu0
        %v908 = vadd.f32 %v699, %v907
        %v909 = vpop.f32.mrf.mxu0
        %v910 = vpop.f32.mrf.mxu0
        %v911 = vadd.f32 %v702, %v910
        %v912 = vpop.f32.mrf.mxu0
        %913 = vmatprep.mubr.bf16.mxu0 0
        %914 = vmatmul.mubr.bf16.gmra.mxu0 %v467
        %v915 = vpop.f32.mrf.mxu0
        %v916 = vadd.f32 %v707, %v915
        %v917 = vpop.f32.mrf.mxu0
        %v918 = vpop.f32.mrf.mxu0
        %v919 = vadd.f32 %v710, %v918
        %v920 = vpop.f32.mrf.mxu0
        %921 = vmatprep.mubr.bf16.mxu0 0
        %922 = vmatmul.mubr.bf16.gmra.mxu0 %v468
        %v923 = vpop.f32.mrf.mxu0
        %v924 = vadd.f32 %v715, %v923
        %v925 = vpop.f32.mrf.mxu0
        %v926 = vpop.f32.mrf.mxu0
        %v927 = vadd.f32 %v718, %v926
        %v928 = vpop.f32.mrf.mxu0
        %929 = vmatprep.mubr.bf16.mxu0 0
        %930 = vmatmul.mubr.bf16.gmra.mxu0 %v469
        %v931 = vpop.f32.mrf.mxu0
        %v932 = vadd.f32 %v723, %v931
        %v933 = vpop.f32.mrf.mxu0
        %v934 = vpop.f32.mrf.mxu0
        %v935 = vadd.f32 %v726, %v934
        %v936 = vpop.f32.mrf.mxu0
        %937 = vmatprep.mubr.bf16.mxu0 0
        %938 = vmatmul.mubr.bf16.gmra.mxu0 %v470
        %v939 = vpop.f32.mrf.mxu0
        %v940 = vadd.f32 %v731, %v939
        %v941 = vpop.f32.mrf.mxu0
        %v942 = vpop.f32.mrf.mxu0
        %v943 = vadd.f32 %v734, %v942
        %v944 = vpop.f32.mrf.mxu0
        %945 = vmatprep.mubr.bf16.mxu0 0
        %946 = vmatmul.mubr.bf16.gmra.mxu0 %v471
        %v947 = vpop.f32.mrf.mxu0
        %v948 = vadd.f32 %v739, %v947
        %v949 = vpop.f32.mrf.mxu0
        %v950 = vpop.f32.mrf.mxu0
        %v951 = vadd.f32 %v742, %v950
        %v952 = vpop.f32.mrf.mxu0
        %953 = vmatprep.mubr.bf16.mxu0 0
        %954 = vmatmul.mubr.bf16.gmra.mxu0 %v472
        %v955 = vpop.f32.mrf.mxu0
        %v956 = vadd.f32 %v747, %v955
        %v957 = vpop.f32.mrf.mxu0
        %v958 = vpop.f32.mrf.mxu0
        %v959 = vadd.f32 %v750, %v958
        %v960 = vpop.f32.mrf.mxu0
        %961 = vmatprep.mubr.bf16.mxu0 0
        %962 = vmatmul.mubr.bf16.gmra.mxu0 %v473
        %v963 = vpop.f32.mrf.mxu0
        %v964 = vadd.f32 %v755, %v963
        %v965 = vpop.f32.mrf.mxu0
        %v966 = vpop.f32.mrf.mxu0
        %v967 = vadd.f32 %v758, %v966
        %v968 = vpop.f32.mrf.mxu0
        %969 = vmatprep.mubr.bf16.mxu0 0
        %970 = vmatmul.mubr.bf16.gmra.mxu0 %v474
        %v971 = vpop.f32.mrf.mxu0
        %v972 = vadd.f32 %v763, %v971
        %v973 = vpop.f32.mrf.mxu0
        %v974 = vpop.f32.mrf.mxu0
        %v975 = vadd.f32 %v766, %v974
        %v976 = vpop.f32.mrf.mxu0
        %977 = vdwg.mxu0
        %v978 = vrot.slane %v338, 1
        %v979 = vor.u32 %v259, %v978
        %v980 = vrot.slane %v341, 1
        %v981 = vor.u32 %v263, %v980
        %v982 = vrot.slane %v344, 1
        %v983 = vor.u32 %v267, %v982
        %v984 = vrot.slane %v347, 1
        %v985 = vor.u32 %v271, %v984
        %v986 = vrot.slane %v350, 1
        %v987 = vor.u32 %v275, %v986
        %v988 = vrot.slane %v353, 1
        %v989 = vor.u32 %v279, %v988
        %v990 = vrot.slane %v356, 1
        %v991 = vor.u32 %v283, %v990
        %v992 = vrot.slane %v359, 1
        %v993 = vor.u32 %v287, %v992
        %v994 = vrot.slane %v362, 1
        %v995 = vor.u32 %v291, %v994
        %v996 = vrot.slane %v365, 1
        %v997 = vor.u32 %v295, %v996
        %v998 = vrot.slane %v368, 1
        %v999 = vor.u32 %v299, %v998
        %v1000 = vrot.slane %v371, 1
        %v1001 = vor.u32 %v303, %v1000
        %v1002 = vrot.slane %v374, 1
        %v1003 = vor.u32 %v307, %v1002
        %v1004 = vrot.slane %v377, 1
        %v1005 = vor.u32 %v311, %v1004
        %v1006 = vrot.slane %v380, 1
        %v1007 = vor.u32 %v315, %v1006
        %v1008 = vrot.slane %v383, 1
        %v1009 = vor.u32 %v319, %v1008
        %vm1042 = vcmask 1047552
        %vm1043 = vsmask.f32 7424
        %vm1044 = vmand %vm1042, %vm1043
        %v1045 = vsel %vm1044, %v979, %v978
        %v1046 = vsel %vm1044, %v981, %v980
        %v1047 = vsel %vm1044, %v983, %v982
        %v1048 = vsel %vm1044, %v985, %v984
        %v1049 = vsel %vm1044, %v987, %v986
        %v1050 = vsel %vm1044, %v989, %v988
        %v1051 = vsel %vm1044, %v991, %v990
        %v1052 = vsel %vm1044, %v993, %v992
        %v1053 = vsel %vm1044, %v995, %v994
        %v1054 = vsel %vm1044, %v997, %v996
        %v1055 = vsel %vm1044, %v999, %v998
        %v1056 = vsel %vm1044, %v1001, %v1000
        %v1057 = vsel %vm1044, %v1003, %v1002
        %v1058 = vsel %vm1044, %v1005, %v1004
        %v1059 = vsel %vm1044, %v1007, %v1006
        %v1060 = vsel %vm1044, %v1009, %v1008
        %v1061 = vadd.s32 %v256, 1
        %v1062 = vadd.s32 %v257, 1
        %vm1063 = vcmp.ge.s32.totalorder %v1061, 0
        %vm1064 = vcmp.ge.s32.totalorder %v1062, 0
        %vm1065 = vmand 0, %vm1063
        %vm1066 = vmand 0, %vm1064
        %vm1067 = vmand 1, %vm1063
        %vm1068 = vmand 1, %vm1064
        %vm1069 = vcmp.lt.s32.totalorder %v1061, 16
        %vm1070 = vcmp.lt.s32.totalorder %v1062, 16
        %vm1071 = vmand %vm1065, %vm1069
        %vm1072 = vmand %vm1066, %vm1070
        %vm1073 = vmand %vm1067, %vm1069
        %vm1074 = vmand %vm1068, %vm1070
        %v1075 = vsel %vm1071, 1, 0
        %v1076 = vsel %vm1072, 1, 0
        %v1077 = vsel %vm1073, 1, 0
        %v1078 = vsel %vm1074, 1, 0
        %vm1079 = vcmp.eq.s32.totalorder %v1075, 1
        %vm1080 = vcmp.eq.s32.totalorder %v1076, 1
        %vm1081 = vcmp.eq.s32.totalorder %v1077, 1
        %vm1082 = vcmp.eq.s32.totalorder %v1078, 1
        %vm1083 = vmpackc.low %vm1079, %vm1079
        %vm1084 = vmpackc.low %vm1080, %vm1080
        %vm1085 = vmpackc.low %vm1081, %vm1081
        %vm1086 = vmpackc.low %vm1082, %vm1082
        %v1087 = vsel %vm1083, 65537, 0
        %v1088 = vsel %vm1084, 65537, 0
        %v1089 = vsel %vm1085, 65537, 0
        %v1090 = vsel %vm1086, 65537, 0
        %v1091 = vunpack.c.l.b16 %v1087
        %v1092 = vunpack.c.l.b16 %v1088
        %v1093 = vunpack.c.l.b16 %v1089
        %v1094 = vunpack.c.l.b16 %v1090
        %v1095 = vpack.c.b16 %v1092, %v1091
        %v1096 = vpack.c.b16 %v1094, %v1093
        %vm1097 = vcmp.ne.s16.totalorder %v1095, 0
        %vm1098 = vcmp.ne.s16.totalorder %v1096, 0
        %v1099 = vsel %vm1097, %v1045, 0
        %v1100 = vsel %vm1098, %v1046, 0
        %v1101 = vsel %vm1098, %v1047, 0
        %v1102 = vsel %vm1098, %v1048, 0
        %v1103 = vsel %vm1098, %v1049, 0
        %v1104 = vsel %vm1098, %v1050, 0
        %v1105 = vsel %vm1098, %v1051, 0
        %v1106 = vsel %vm1098, %v1052, 0
        %v1107 = vsel %vm1098, %v1053, 0
        %v1108 = vsel %vm1098, %v1054, 0
        %v1109 = vsel %vm1098, %v1055, 0
        %v1110 = vsel %vm1098, %v1056, 0
        %v1111 = vsel %vm1098, %v1057, 0
        %v1112 = vsel %vm1098, %v1058, 0
        %v1113 = vsel %vm1098, %v1059, 0
        %v1114 = vsel %vm1098, %v1060, 0
        %s1115 = scalar_lea.vmem [#allocation5], 128
        %v1116 = vld [vmem:[%s1115] sm:$0xf]
        %v1117 = vld [vmem:[%s1115 + $0x4] sm:$0xf]
        %v1118 = vld [vmem:[%s1115 + $0x8] sm:$0xf]
        %v1119 = vld [vmem:[%s1115 + $0xc] sm:$0xf]
        %v1120 = vld [vmem:[%s1115 + $0x10] sm:$0xf]
        %v1121 = vld [vmem:[%s1115 + $0x14] sm:$0xf]
        %v1122 = vld [vmem:[%s1115 + $0x18] sm:$0xf]
        %v1123 = vld [vmem:[%s1115 + $0x1c] sm:$0xf]
        %v1124 = vld [vmem:[%s1115 + $0x20] sm:$0xf]
        %v1125 = vld [vmem:[%s1115 + $0x24] sm:$0xf]
        %v1126 = vld [vmem:[%s1115 + $0x28] sm:$0xf]
        %v1127 = vld [vmem:[%s1115 + $0x2c] sm:$0xf]
        %v1128 = vld [vmem:[%s1115 + $0x30] sm:$0xf]
        %v1129 = vld [vmem:[%s1115 + $0x34] sm:$0xf]
        %v1130 = vld [vmem:[%s1115 + $0x38] sm:$0xf]
        %v1131 = vld [vmem:[%s1115 + $0x3c] sm:$0xf]
        %v1148 = vunpack.c.l.b16 %v1116
        %v1149 = vunpack.c.l.b16 %v1117
        %v1150 = vunpack.c.l.b16 %v1118
        %v1151 = vunpack.c.l.b16 %v1119
        %v1152 = vunpack.c.l.b16 %v1120
        %v1153 = vunpack.c.l.b16 %v1121
        %v1154 = vunpack.c.l.b16 %v1122
        %v1155 = vunpack.c.l.b16 %v1123
        %v1156 = vunpack.c.l.b16 %v1124
        %v1157 = vunpack.c.l.b16 %v1125
        %v1158 = vunpack.c.l.b16 %v1126
        %v1159 = vunpack.c.l.b16 %v1127
        %v1160 = vunpack.c.l.b16 %v1128
        %v1161 = vunpack.c.l.b16 %v1129
        %v1162 = vunpack.c.l.b16 %v1130
        %v1163 = vunpack.c.l.b16 %v1131
        %v1164 = vpack.c.b16 %v1149, %v1148
        %v1165 = vpack.c.b16 %v1151, %v1150
        %v1166 = vpack.c.b16 %v1153, %v1152
        %v1167 = vpack.c.b16 %v1155, %v1154
        %v1168 = vpack.c.b16 %v1157, %v1156
        %v1169 = vpack.c.b16 %v1159, %v1158
        %v1170 = vpack.c.b16 %v1161, %v1160
        %v1171 = vpack.c.b16 %v1163, %v1162
        %1180 = vmatprep.subr.bf16.mxu0 0
        %1181 = vmatpush1.bf16.msra.mxu0 %v1171
        %1182 = vmatprep.subr.bf16.mxu0 0
        %1183 = vmatpush1.bf16.msra.mxu0 %v1170
        %1184 = vmatprep.subr.bf16.mxu0 0
        %1185 = vmatpush1.bf16.msra.mxu0 %v1169
        %1186 = vmatprep.subr.bf16.mxu0 0
        %1187 = vmatpush1.bf16.msra.mxu0 %v1168
        %1188 = vmatprep.subr.bf16.mxu0 0
        %1189 = vmatpush1.bf16.msra.mxu0 %v1167
        %1190 = vmatprep.subr.bf16.mxu0 0
        %1191 = vmatpush1.bf16.msra.mxu0 %v1166
        %1192 = vmatprep.subr.bf16.mxu0 0
        %1193 = vmatpush1.bf16.msra.mxu0 %v1165
        %1194 = vmatprep.subr.bf16.mxu0 0
        %1195 = vmatpush1.bf16.msra.mxu0 %v1164
        %1196 = vmatprep.subr.bf16.mxu0 0
        %1197 = vmatpush2.bf16.msra.mxu0 0
        %1198 = vmatprep.subr.bf16.mxu0 0
        %1199 = vmatpush2.bf16.msra.mxu0 0
        %1200 = vmatprep.subr.bf16.mxu0 0
        %1201 = vmatpush2.bf16.msra.mxu0 0
        %1202 = vmatprep.subr.bf16.mxu0 0
        %1203 = vmatpush2.bf16.msra.mxu0 0
        %1204 = vmatprep.subr.bf16.mxu0 0
        %1205 = vmatpush2.bf16.msra.mxu0 0
        %1206 = vmatprep.subr.bf16.mxu0 0
        %1207 = vmatpush2.bf16.msra.mxu0 0
        %1208 = vmatprep.subr.bf16.mxu0 0
        %1209 = vmatpush2.bf16.msra.mxu0 0
        %1210 = vmatprep.subr.bf16.mxu0 0
        %1211 = vmatpush2.bf16.msra.mxu0 0
        %1212 = vmatprep.mubr.bf16.mxu0 0
        %1213 = vmatmul.mubr.bf16.gmra.mxu0 %v1099
        %v1214 = vpop.f32.mrf.mxu0
        %v1215 = vadd.f32 0.0, %v1214
        %v1216 = vpop.f32.mrf.mxu0
        %v1217 = vpop.f32.mrf.mxu0
        %v1218 = vadd.f32 0.0, %v1217
        %v1219 = vpop.f32.mrf.mxu0
        %1220 = vmatprep.mubr.bf16.mxu0 0
        %1221 = vmatmul.mubr.bf16.gmra.mxu0 %v1100
        %v1222 = vpop.f32.mrf.mxu0
        %v1223 = vadd.f32 0.0, %v1222
        %v1224 = vpop.f32.mrf.mxu0
        %v1225 = vpop.f32.mrf.mxu0
        %v1226 = vadd.f32 0.0, %v1225
        %v1227 = vpop.f32.mrf.mxu0
        %1228 = vmatprep.mubr.bf16.mxu0 0
        %1229 = vmatmul.mubr.bf16.gmra.mxu0 %v1101
        %v1230 = vpop.f32.mrf.mxu0
        %v1231 = vadd.f32 0.0, %v1230
        %v1232 = vpop.f32.mrf.mxu0
        %v1233 = vpop.f32.mrf.mxu0
        %v1234 = vadd.f32 0.0, %v1233
        %v1235 = vpop.f32.mrf.mxu0
        %1236 = vmatprep.mubr.bf16.mxu0 0
        %1237 = vmatmul.mubr.bf16.gmra.mxu0 %v1102
        %v1238 = vpop.f32.mrf.mxu0
        %v1239 = vadd.f32 0.0, %v1238
        %v1240 = vpop.f32.mrf.mxu0
        %v1241 = vpop.f32.mrf.mxu0
        %v1242 = vadd.f32 0.0, %v1241
        %v1243 = vpop.f32.mrf.mxu0
        %1244 = vmatprep.mubr.bf16.mxu0 0
        %1245 = vmatmul.mubr.bf16.gmra.mxu0 %v1103
        %v1246 = vpop.f32.mrf.mxu0
        %v1247 = vadd.f32 0.0, %v1246
        %v1248 = vpop.f32.mrf.mxu0
        %v1249 = vpop.f32.mrf.mxu0
        %v1250 = vadd.f32 0.0, %v1249
        %v1251 = vpop.f32.mrf.mxu0
        %1252 = vmatprep.mubr.bf16.mxu0 0
        %1253 = vmatmul.mubr.bf16.gmra.mxu0 %v1104
        %v1254 = vpop.f32.mrf.mxu0
        %v1255 = vadd.f32 0.0, %v1254
        %v1256 = vpop.f32.mrf.mxu0
        %v1257 = vpop.f32.mrf.mxu0
        %v1258 = vadd.f32 0.0, %v1257
        %v1259 = vpop.f32.mrf.mxu0
        %1260 = vmatprep.mubr.bf16.mxu0 0
        %1261 = vmatmul.mubr.bf16.gmra.mxu0 %v1105
        %v1262 = vpop.f32.mrf.mxu0
        %v1263 = vadd.f32 0.0, %v1262
        %v1264 = vpop.f32.mrf.mxu0
        %v1265 = vpop.f32.mrf.mxu0
        %v1266 = vadd.f32 0.0, %v1265
        %v1267 = vpop.f32.mrf.mxu0
        %1268 = vmatprep.mubr.bf16.mxu0 0
        %1269 = vmatmul.mubr.bf16.gmra.mxu0 %v1106
        %v1270 = vpop.f32.mrf.mxu0
        %v1271 = vadd.f32 0.0, %v1270
        %v1272 = vpop.f32.mrf.mxu0
        %v1273 = vpop.f32.mrf.mxu0
        %v1274 = vadd.f32 0.0, %v1273
        %v1275 = vpop.f32.mrf.mxu0
        %1276 = vmatprep.mubr.bf16.mxu0 0
        %1277 = vmatmul.mubr.bf16.gmra.mxu0 %v1107
        %v1278 = vpop.f32.mrf.mxu0
        %v1279 = vadd.f32 0.0, %v1278
        %v1280 = vpop.f32.mrf.mxu0
        %v1281 = vpop.f32.mrf.mxu0
        %v1282 = vadd.f32 0.0, %v1281
        %v1283 = vpop.f32.mrf.mxu0
        %1284 = vmatprep.mubr.bf16.mxu0 0
        %1285 = vmatmul.mubr.bf16.gmra.mxu0 %v1108
        %v1286 = vpop.f32.mrf.mxu0
        %v1287 = vadd.f32 0.0, %v1286
        %v1288 = vpop.f32.mrf.mxu0
        %v1289 = vpop.f32.mrf.mxu0
        %v1290 = vadd.f32 0.0, %v1289
        %v1291 = vpop.f32.mrf.mxu0
        %1292 = vmatprep.mubr.bf16.mxu0 0
        %1293 = vmatmul.mubr.bf16.gmra.mxu0 %v1109
        %v1294 = vpop.f32.mrf.mxu0
        %v1295 = vadd.f32 0.0, %v1294
        %v1296 = vpop.f32.mrf.mxu0
        %v1297 = vpop.f32.mrf.mxu0
        %v1298 = vadd.f32 0.0, %v1297
        %v1299 = vpop.f32.mrf.mxu0
        %1300 = vmatprep.mubr.bf16.mxu0 0
        %1301 = vmatmul.mubr.bf16.gmra.mxu0 %v1110
        %v1302 = vpop.f32.mrf.mxu0
        %v1303 = vadd.f32 0.0, %v1302
        %v1304 = vpop.f32.mrf.mxu0
        %v1305 = vpop.f32.mrf.mxu0
        %v1306 = vadd.f32 0.0, %v1305
        %v1307 = vpop.f32.mrf.mxu0
        %1308 = vmatprep.mubr.bf16.mxu0 0
        %1309 = vmatmul.mubr.bf16.gmra.mxu0 %v1111
        %v1310 = vpop.f32.mrf.mxu0
        %v1311 = vadd.f32 0.0, %v1310
        %v1312 = vpop.f32.mrf.mxu0
        %v1313 = vpop.f32.mrf.mxu0
        %v1314 = vadd.f32 0.0, %v1313
        %v1315 = vpop.f32.mrf.mxu0
        %1316 = vmatprep.mubr.bf16.mxu0 0
        %1317 = vmatmul.mubr.bf16.gmra.mxu0 %v1112
        %v1318 = vpop.f32.mrf.mxu0
        %v1319 = vadd.f32 0.0, %v1318
        %v1320 = vpop.f32.mrf.mxu0
        %v1321 = vpop.f32.mrf.mxu0
        %v1322 = vadd.f32 0.0, %v1321
        %v1323 = vpop.f32.mrf.mxu0
        %1324 = vmatprep.mubr.bf16.mxu0 0
        %1325 = vmatmul.mubr.bf16.gmra.mxu0 %v1113
        %v1326 = vpop.f32.mrf.mxu0
        %v1327 = vadd.f32 0.0, %v1326
        %v1328 = vpop.f32.mrf.mxu0
        %v1329 = vpop.f32.mrf.mxu0
        %v1330 = vadd.f32 0.0, %v1329
        %v1331 = vpop.f32.mrf.mxu0
        %1332 = vmatprep.mubr.bf16.mxu0 0
        %1333 = vmatmul.mubr.bf16.gmra.mxu0 %v1114
        %v1334 = vpop.f32.mrf.mxu0
        %v1335 = vadd.f32 0.0, %v1334
        %v1336 = vpop.f32.mrf.mxu0
        %v1337 = vpop.f32.mrf.mxu0
        %v1338 = vadd.f32 0.0, %v1337
        %v1339 = vpop.f32.mrf.mxu0
        %1340 = vdwg.mxu0
        %v1341 = vadd.f32 %v852, %v1215
        %v1342 = vadd.f32 %v855, %v1218
        %v1343 = vadd.f32 %v860, %v1223
        %v1344 = vadd.f32 %v863, %v1226
        %v1345 = vadd.f32 %v868, %v1231
        %v1346 = vadd.f32 %v871, %v1234
        %v1347 = vadd.f32 %v876, %v1239
        %v1348 = vadd.f32 %v879, %v1242
        %v1349 = vadd.f32 %v884, %v1247
        %v1350 = vadd.f32 %v887, %v1250
        %v1351 = vadd.f32 %v892, %v1255
        %v1352 = vadd.f32 %v895, %v1258
        %v1353 = vadd.f32 %v900, %v1263
        %v1354 = vadd.f32 %v903, %v1266
        %v1355 = vadd.f32 %v908, %v1271
        %v1356 = vadd.f32 %v911, %v1274
        %v1357 = vadd.f32 %v916, %v1279
        %v1358 = vadd.f32 %v919, %v1282
        %v1359 = vadd.f32 %v924, %v1287
        %v1360 = vadd.f32 %v927, %v1290
        %v1361 = vadd.f32 %v932, %v1295
        %v1362 = vadd.f32 %v935, %v1298
        %v1363 = vadd.f32 %v940, %v1303
        %v1364 = vadd.f32 %v943, %v1306
        %v1365 = vadd.f32 %v948, %v1311
        %v1366 = vadd.f32 %v951, %v1314
        %v1367 = vadd.f32 %v956, %v1319
        %v1368 = vadd.f32 %v959, %v1322
        %v1369 = vadd.f32 %v964, %v1327
        %v1370 = vadd.f32 %v967, %v1330
        %v1371 = vadd.f32 %v972, %v1335
        %v1372 = vadd.f32 %v975, %v1338
        %v1373 = vsel %vm458, %v405, 0
        %s1374 = scalar_lea.vmem [#allocation5], 192
        %v1375 = vld [vmem:[%s1374] sm:$0xf]
        %v1376 = vld [vmem:[%s1374 + $0x4] sm:$0xf]
        %v1377 = vld [vmem:[%s1374 + $0x8] sm:$0xf]
        %v1378 = vld [vmem:[%s1374 + $0xc] sm:$0xf]
        %v1379 = vld [vmem:[%s1374 + $0x10] sm:$0xf]
        %v1380 = vld [vmem:[%s1374 + $0x14] sm:$0xf]
        %v1381 = vld [vmem:[%s1374 + $0x18] sm:$0xf]
        %v1382 = vld [vmem:[%s1374 + $0x1c] sm:$0xf]
        %v1383 = vld [vmem:[%s1374 + $0x20] sm:$0xf]
        %v1384 = vld [vmem:[%s1374 + $0x24] sm:$0xf]
        %v1385 = vld [vmem:[%s1374 + $0x28] sm:$0xf]
        %v1386 = vld [vmem:[%s1374 + $0x2c] sm:$0xf]
        %v1387 = vld [vmem:[%s1374 + $0x30] sm:$0xf]
        %v1388 = vld [vmem:[%s1374 + $0x34] sm:$0xf]
        %v1389 = vld [vmem:[%s1374 + $0x38] sm:$0xf]
        %v1390 = vld [vmem:[%s1374 + $0x3c] sm:$0xf]
        %v1407 = vunpack.c.l.b16 %v1375
        %v1408 = vunpack.c.l.b16 %v1376
        %v1409 = vunpack.c.l.b16 %v1377
        %v1410 = vunpack.c.l.b16 %v1378
        %v1411 = vunpack.c.l.b16 %v1379
        %v1412 = vunpack.c.l.b16 %v1380
        %v1413 = vunpack.c.l.b16 %v1381
        %v1414 = vunpack.c.l.b16 %v1382
        %v1415 = vunpack.c.l.b16 %v1383
        %v1416 = vunpack.c.l.b16 %v1384
        %v1417 = vunpack.c.l.b16 %v1385
        %v1418 = vunpack.c.l.b16 %v1386
        %v1419 = vunpack.c.l.b16 %v1387
        %v1420 = vunpack.c.l.b16 %v1388
        %v1421 = vunpack.c.l.b16 %v1389
        %v1422 = vunpack.c.l.b16 %v1390
        %v1423 = vpack.c.b16 %v1408, %v1407
        %v1424 = vpack.c.b16 %v1410, %v1409
        %v1425 = vpack.c.b16 %v1412, %v1411
        %v1426 = vpack.c.b16 %v1414, %v1413
        %v1427 = vpack.c.b16 %v1416, %v1415
        %v1428 = vpack.c.b16 %v1418, %v1417
        %v1429 = vpack.c.b16 %v1420, %v1419
        %v1430 = vpack.c.b16 %v1422, %v1421
        %1439 = vmatprep.subr.bf16.mxu0 0
        %1440 = vmatpush1.bf16.msra.mxu0 %v1430
        %1441 = vmatprep.subr.bf16.mxu0 0
        %1442 = vmatpush1.bf16.msra.mxu0 %v1429
        %1443 = vmatprep.subr.bf16.mxu0 0
        %1444 = vmatpush1.bf16.msra.mxu0 %v1428
        %1445 = vmatprep.subr.bf16.mxu0 0
        %1446 = vmatpush1.bf16.msra.mxu0 %v1427
        %1447 = vmatprep.subr.bf16.mxu0 0
        %1448 = vmatpush1.bf16.msra.mxu0 %v1426
        %1449 = vmatprep.subr.bf16.mxu0 0
        %1450 = vmatpush1.bf16.msra.mxu0 %v1425
        %1451 = vmatprep.subr.bf16.mxu0 0
        %1452 = vmatpush1.bf16.msra.mxu0 %v1424
        %1453 = vmatprep.subr.bf16.mxu0 0
        %1454 = vmatpush1.bf16.msra.mxu0 %v1423
        %1455 = vmatprep.subr.bf16.mxu0 0
        %1456 = vmatpush2.bf16.msra.mxu0 0
        %1457 = vmatprep.subr.bf16.mxu0 0
        %1458 = vmatpush2.bf16.msra.mxu0 0
        %1459 = vmatprep.subr.bf16.mxu0 0
        %1460 = vmatpush2.bf16.msra.mxu0 0
        %1461 = vmatprep.subr.bf16.mxu0 0
        %1462 = vmatpush2.bf16.msra.mxu0 0
        %1463 = vmatprep.subr.bf16.mxu0 0
        %1464 = vmatpush2.bf16.msra.mxu0 0
        %1465 = vmatprep.subr.bf16.mxu0 0
        %1466 = vmatpush2.bf16.msra.mxu0 0
        %1467 = vmatprep.subr.bf16.mxu0 0
        %1468 = vmatpush2.bf16.msra.mxu0 0
        %1469 = vmatprep.subr.bf16.mxu0 0
        %1470 = vmatpush2.bf16.msra.mxu0 0
        %1471 = vmatprep.mubr.bf16.mxu0 0
        %1472 = vmatmul.mubr.bf16.gmra.mxu0 %v460
        %v1473 = vpop.f32.mrf.mxu0
        %v1474 = vadd.f32 0.0, %v1473
        %v1475 = vpop.f32.mrf.mxu0
        %v1476 = vpop.f32.mrf.mxu0
        %v1477 = vadd.f32 0.0, %v1476
        %v1478 = vpop.f32.mrf.mxu0
        %1479 = vmatprep.mubr.bf16.mxu0 0
        %1480 = vmatmul.mubr.bf16.gmra.mxu0 %v461
        %v1481 = vpop.f32.mrf.mxu0
        %v1482 = vadd.f32 0.0, %v1481
        %v1483 = vpop.f32.mrf.mxu0
        %v1484 = vpop.f32.mrf.mxu0
        %v1485 = vadd.f32 0.0, %v1484
        %v1486 = vpop.f32.mrf.mxu0
        %1487 = vmatprep.mubr.bf16.mxu0 0
        %1488 = vmatmul.mubr.bf16.gmra.mxu0 %v462
        %v1489 = vpop.f32.mrf.mxu0
        %v1490 = vadd.f32 0.0, %v1489
        %v1491 = vpop.f32.mrf.mxu0
        %v1492 = vpop.f32.mrf.mxu0
        %v1493 = vadd.f32 0.0, %v1492
        %v1494 = vpop.f32.mrf.mxu0
        %1495 = vmatprep.mubr.bf16.mxu0 0
        %1496 = vmatmul.mubr.bf16.gmra.mxu0 %v463
        %v1497 = vpop.f32.mrf.mxu0
        %v1498 = vadd.f32 0.0, %v1497
        %v1499 = vpop.f32.mrf.mxu0
        %v1500 = vpop.f32.mrf.mxu0
        %v1501 = vadd.f32 0.0, %v1500
        %v1502 = vpop.f32.mrf.mxu0
        %1503 = vmatprep.mubr.bf16.mxu0 0
        %1504 = vmatmul.mubr.bf16.gmra.mxu0 %v464
        %v1505 = vpop.f32.mrf.mxu0
        %v1506 = vadd.f32 0.0, %v1505
        %v1507 = vpop.f32.mrf.mxu0
        %v1508 = vpop.f32.mrf.mxu0
        %v1509 = vadd.f32 0.0, %v1508
        %v1510 = vpop.f32.mrf.mxu0
        %1511 = vmatprep.mubr.bf16.mxu0 0
        %1512 = vmatmul.mubr.bf16.gmra.mxu0 %v465
        %v1513 = vpop.f32.mrf.mxu0
        %v1514 = vadd.f32 0.0, %v1513
        %v1515 = vpop.f32.mrf.mxu0
        %v1516 = vpop.f32.mrf.mxu0
        %v1517 = vadd.f32 0.0, %v1516
        %v1518 = vpop.f32.mrf.mxu0
        %1519 = vmatprep.mubr.bf16.mxu0 0
        %1520 = vmatmul.mubr.bf16.gmra.mxu0 %v466
        %v1521 = vpop.f32.mrf.mxu0
        %v1522 = vadd.f32 0.0, %v1521
        %v1523 = vpop.f32.mrf.mxu0
        %v1524 = vpop.f32.mrf.mxu0
        %v1525 = vadd.f32 0.0, %v1524
        %v1526 = vpop.f32.mrf.mxu0
        %1527 = vmatprep.mubr.bf16.mxu0 0
        %1528 = vmatmul.mubr.bf16.gmra.mxu0 %v467
        %v1529 = vpop.f32.mrf.mxu0
        %v1530 = vadd.f32 0.0, %v1529
        %v1531 = vpop.f32.mrf.mxu0
        %v1532 = vpop.f32.mrf.mxu0
        %v1533 = vadd.f32 0.0, %v1532
        %v1534 = vpop.f32.mrf.mxu0
        %1535 = vmatprep.mubr.bf16.mxu0 0
        %1536 = vmatmul.mubr.bf16.gmra.mxu0 %v468
        %v1537 = vpop.f32.mrf.mxu0
        %v1538 = vadd.f32 0.0, %v1537
        %v1539 = vpop.f32.mrf.mxu0
        %v1540 = vpop.f32.mrf.mxu0
        %v1541 = vadd.f32 0.0, %v1540
        %v1542 = vpop.f32.mrf.mxu0
        %1543 = vmatprep.mubr.bf16.mxu0 0
        %1544 = vmatmul.mubr.bf16.gmra.mxu0 %v469
        %v1545 = vpop.f32.mrf.mxu0
        %v1546 = vadd.f32 0.0, %v1545
        %v1547 = vpop.f32.mrf.mxu0
        %v1548 = vpop.f32.mrf.mxu0
        %v1549 = vadd.f32 0.0, %v1548
        %v1550 = vpop.f32.mrf.mxu0
        %1551 = vmatprep.mubr.bf16.mxu0 0
        %1552 = vmatmul.mubr.bf16.gmra.mxu0 %v470
        %v1553 = vpop.f32.mrf.mxu0
        %v1554 = vadd.f32 0.0, %v1553
        %v1555 = vpop.f32.mrf.mxu0
        %v1556 = vpop.f32.mrf.mxu0
        %v1557 = vadd.f32 0.0, %v1556
        %v1558 = vpop.f32.mrf.mxu0
        %1559 = vmatprep.mubr.bf16.mxu0 0
        %1560 = vmatmul.mubr.bf16.gmra.mxu0 %v471
        %v1561 = vpop.f32.mrf.mxu0
        %v1562 = vadd.f32 0.0, %v1561
        %v1563 = vpop.f32.mrf.mxu0
        %v1564 = vpop.f32.mrf.mxu0
        %v1565 = vadd.f32 0.0, %v1564
        %v1566 = vpop.f32.mrf.mxu0
        %1567 = vmatprep.mubr.bf16.mxu0 0
        %1568 = vmatmul.mubr.bf16.gmra.mxu0 %v472
        %v1569 = vpop.f32.mrf.mxu0
        %v1570 = vadd.f32 0.0, %v1569
        %v1571 = vpop.f32.mrf.mxu0
        %v1572 = vpop.f32.mrf.mxu0
        %v1573 = vadd.f32 0.0, %v1572
        %v1574 = vpop.f32.mrf.mxu0
        %1575 = vmatprep.mubr.bf16.mxu0 0
        %1576 = vmatmul.mubr.bf16.gmra.mxu0 %v473
        %v1577 = vpop.f32.mrf.mxu0
        %v1578 = vadd.f32 0.0, %v1577
        %v1579 = vpop.f32.mrf.mxu0
        %v1580 = vpop.f32.mrf.mxu0
        %v1581 = vadd.f32 0.0, %v1580
        %v1582 = vpop.f32.mrf.mxu0
        %1583 = vmatprep.mubr.bf16.mxu0 0
        %1584 = vmatmul.mubr.bf16.gmra.mxu0 %v474
        %v1585 = vpop.f32.mrf.mxu0
        %v1586 = vadd.f32 0.0, %v1585
        %v1587 = vpop.f32.mrf.mxu0
        %v1588 = vpop.f32.mrf.mxu0
        %v1589 = vadd.f32 0.0, %v1588
        %v1590 = vpop.f32.mrf.mxu0
        %1591 = vmatprep.mubr.bf16.mxu0 0
        %1592 = vmatmul.mubr.bf16.gmra.mxu0 %v1373
        %v1593 = vpop.f32.mrf.mxu0
        %v1594 = vadd.f32 0.0, %v1593
        %v1595 = vpop.f32.mrf.mxu0
        %v1596 = vpop.f32.mrf.mxu0
        %v1597 = vadd.f32 0.0, %v1596
        %v1598 = vpop.f32.mrf.mxu0
        %1599 = vdwg.mxu0
        %v1600 = vadd.f32 %v1341, %v1474
        %v1601 = vadd.f32 %v1342, %v1477
        %v1602 = vadd.f32 %v1343, %v1482
        %v1603 = vadd.f32 %v1344, %v1485
        %v1604 = vadd.f32 %v1345, %v1490
        %v1605 = vadd.f32 %v1346, %v1493
        %v1606 = vadd.f32 %v1347, %v1498
        %v1607 = vadd.f32 %v1348, %v1501
        %v1608 = vadd.f32 %v1349, %v1506
        %v1609 = vadd.f32 %v1350, %v1509
        %v1610 = vadd.f32 %v1351, %v1514
        %v1611 = vadd.f32 %v1352, %v1517
        %v1612 = vadd.f32 %v1353, %v1522
        %v1613 = vadd.f32 %v1354, %v1525
        %v1614 = vadd.f32 %v1355, %v1530
        %v1615 = vadd.f32 %v1356, %v1533
        %v1616 = vadd.f32 %v1357, %v1538
        %v1617 = vadd.f32 %v1358, %v1541
        %v1618 = vadd.f32 %v1359, %v1546
        %v1619 = vadd.f32 %v1360, %v1549
        %v1620 = vadd.f32 %v1361, %v1554
        %v1621 = vadd.f32 %v1362, %v1557
        %v1622 = vadd.f32 %v1363, %v1562
        %v1623 = vadd.f32 %v1364, %v1565
        %v1624 = vadd.f32 %v1365, %v1570
        %v1625 = vadd.f32 %v1366, %v1573
        %v1626 = vadd.f32 %v1367, %v1578
        %v1627 = vadd.f32 %v1368, %v1581
        %v1628 = vadd.f32 %v1369, %v1586
        %v1629 = vadd.f32 %v1370, %v1589
        %v1630 = vadd.f32 %v1371, %v1594
        %v1631 = vadd.f32 %v1372, %v1597
        %s1632 = scalar_lea.vmem [#allocation5], 256
        %v1633 = vld [vmem:[%s1632] sm:$0xf]
        %v1634 = vld [vmem:[%s1632 + $0x4] sm:$0xf]
        %v1635 = vld [vmem:[%s1632 + $0x8] sm:$0xf]
        %v1636 = vld [vmem:[%s1632 + $0xc] sm:$0xf]
        %v1637 = vld [vmem:[%s1632 + $0x10] sm:$0xf]
        %v1638 = vld [vmem:[%s1632 + $0x14] sm:$0xf]
        %v1639 = vld [vmem:[%s1632 + $0x18] sm:$0xf]
        %v1640 = vld [vmem:[%s1632 + $0x1c] sm:$0xf]
        %v1641 = vld [vmem:[%s1632 + $0x20] sm:$0xf]
        %v1642 = vld [vmem:[%s1632 + $0x24] sm:$0xf]
        %v1643 = vld [vmem:[%s1632 + $0x28] sm:$0xf]
        %v1644 = vld [vmem:[%s1632 + $0x2c] sm:$0xf]
        %v1645 = vld [vmem:[%s1632 + $0x30] sm:$0xf]
        %v1646 = vld [vmem:[%s1632 + $0x34] sm:$0xf]
        %v1647 = vld [vmem:[%s1632 + $0x38] sm:$0xf]
        %v1648 = vld [vmem:[%s1632 + $0x3c] sm:$0xf]
        %v1665 = vunpack.c.l.b16 %v1633
        %v1666 = vunpack.c.l.b16 %v1634
        %v1667 = vunpack.c.l.b16 %v1635
        %v1668 = vunpack.c.l.b16 %v1636
        %v1669 = vunpack.c.l.b16 %v1637
        %v1670 = vunpack.c.l.b16 %v1638
        %v1671 = vunpack.c.l.b16 %v1639
        %v1672 = vunpack.c.l.b16 %v1640
        %v1673 = vunpack.c.l.b16 %v1641
        %v1674 = vunpack.c.l.b16 %v1642
        %v1675 = vunpack.c.l.b16 %v1643
        %v1676 = vunpack.c.l.b16 %v1644
        %v1677 = vunpack.c.l.b16 %v1645
        %v1678 = vunpack.c.l.b16 %v1646
        %v1679 = vunpack.c.l.b16 %v1647
        %v1680 = vunpack.c.l.b16 %v1648
        %v1681 = vpack.c.b16 %v1666, %v1665
        %v1682 = vpack.c.b16 %v1668, %v1667
        %v1683 = vpack.c.b16 %v1670, %v1669
        %v1684 = vpack.c.b16 %v1672, %v1671
        %v1685 = vpack.c.b16 %v1674, %v1673
        %v1686 = vpack.c.b16 %v1676, %v1675
        %v1687 = vpack.c.b16 %v1678, %v1677
        %v1688 = vpack.c.b16 %v1680, %v1679
        %1697 = vmatprep.subr.bf16.mxu0 0
        %1698 = vmatpush1.bf16.msra.mxu0 %v1688
        %1699 = vmatprep.subr.bf16.mxu0 0
        %1700 = vmatpush1.bf16.msra.mxu0 %v1687
        %1701 = vmatprep.subr.bf16.mxu0 0
        %1702 = vmatpush1.bf16.msra.mxu0 %v1686
        %1703 = vmatprep.subr.bf16.mxu0 0
        %1704 = vmatpush1.bf16.msra.mxu0 %v1685
        %1705 = vmatprep.subr.bf16.mxu0 0
        %1706 = vmatpush1.bf16.msra.mxu0 %v1684
        %1707 = vmatprep.subr.bf16.mxu0 0
        %1708 = vmatpush1.bf16.msra.mxu0 %v1683
        %1709 = vmatprep.subr.bf16.mxu0 0
        %1710 = vmatpush1.bf16.msra.mxu0 %v1682
        %1711 = vmatprep.subr.bf16.mxu0 0
        %1712 = vmatpush1.bf16.msra.mxu0 %v1681
        %1713 = vmatprep.subr.bf16.mxu0 0
        %1714 = vmatpush2.bf16.msra.mxu0 0
        %1715 = vmatprep.subr.bf16.mxu0 0
        %1716 = vmatpush2.bf16.msra.mxu0 0
        %1717 = vmatprep.subr.bf16.mxu0 0
        %1718 = vmatpush2.bf16.msra.mxu0 0
        %1719 = vmatprep.subr.bf16.mxu0 0
        %1720 = vmatpush2.bf16.msra.mxu0 0
        %1721 = vmatprep.subr.bf16.mxu0 0
        %1722 = vmatpush2.bf16.msra.mxu0 0
        %1723 = vmatprep.subr.bf16.mxu0 0
        %1724 = vmatpush2.bf16.msra.mxu0 0
        %1725 = vmatprep.subr.bf16.mxu0 0
        %1726 = vmatpush2.bf16.msra.mxu0 0
        %1727 = vmatprep.subr.bf16.mxu0 0
        %1728 = vmatpush2.bf16.msra.mxu0 0
        %1729 = vmatprep.mubr.bf16.mxu0 0
        %1730 = vmatmul.mubr.bf16.gmra.mxu0 %v239
        %v1731 = vpop.f32.mrf.mxu0
        %v1732 = vadd.f32 0.0, %v1731
        %v1733 = vpop.f32.mrf.mxu0
        %v1734 = vpop.f32.mrf.mxu0
        %v1735 = vadd.f32 0.0, %v1734
        %v1736 = vpop.f32.mrf.mxu0
        %1737 = vmatprep.mubr.bf16.mxu0 0
        %1738 = vmatmul.mubr.bf16.gmra.mxu0 %v240
        %v1739 = vpop.f32.mrf.mxu0
        %v1740 = vadd.f32 0.0, %v1739
        %v1741 = vpop.f32.mrf.mxu0
        %v1742 = vpop.f32.mrf.mxu0
        %v1743 = vadd.f32 0.0, %v1742
        %v1744 = vpop.f32.mrf.mxu0
        %1745 = vmatprep.mubr.bf16.mxu0 0
        %1746 = vmatmul.mubr.bf16.gmra.mxu0 %v241
        %v1747 = vpop.f32.mrf.mxu0
        %v1748 = vadd.f32 0.0, %v1747
        %v1749 = vpop.f32.mrf.mxu0
        %v1750 = vpop.f32.mrf.mxu0
        %v1751 = vadd.f32 0.0, %v1750
        %v1752 = vpop.f32.mrf.mxu0
        %1753 = vmatprep.mubr.bf16.mxu0 0
        %1754 = vmatmul.mubr.bf16.gmra.mxu0 %v242
        %v1755 = vpop.f32.mrf.mxu0
        %v1756 = vadd.f32 0.0, %v1755
        %v1757 = vpop.f32.mrf.mxu0
        %v1758 = vpop.f32.mrf.mxu0
        %v1759 = vadd.f32 0.0, %v1758
        %v1760 = vpop.f32.mrf.mxu0
        %1761 = vmatprep.mubr.bf16.mxu0 0
        %1762 = vmatmul.mubr.bf16.gmra.mxu0 %v243
        %v1763 = vpop.f32.mrf.mxu0
        %v1764 = vadd.f32 0.0, %v1763
        %v1765 = vpop.f32.mrf.mxu0
        %v1766 = vpop.f32.mrf.mxu0
        %v1767 = vadd.f32 0.0, %v1766
        %v1768 = vpop.f32.mrf.mxu0
        %1769 = vmatprep.mubr.bf16.mxu0 0
        %1770 = vmatmul.mubr.bf16.gmra.mxu0 %v244
        %v1771 = vpop.f32.mrf.mxu0
        %v1772 = vadd.f32 0.0, %v1771
        %v1773 = vpop.f32.mrf.mxu0
        %v1774 = vpop.f32.mrf.mxu0
        %v1775 = vadd.f32 0.0, %v1774
        %v1776 = vpop.f32.mrf.mxu0
        %1777 = vmatprep.mubr.bf16.mxu0 0
        %1778 = vmatmul.mubr.bf16.gmra.mxu0 %v245
        %v1779 = vpop.f32.mrf.mxu0
        %v1780 = vadd.f32 0.0, %v1779
        %v1781 = vpop.f32.mrf.mxu0
        %v1782 = vpop.f32.mrf.mxu0
        %v1783 = vadd.f32 0.0, %v1782
        %v1784 = vpop.f32.mrf.mxu0
        %1785 = vmatprep.mubr.bf16.mxu0 0
        %1786 = vmatmul.mubr.bf16.gmra.mxu0 %v246
        %v1787 = vpop.f32.mrf.mxu0
        %v1788 = vadd.f32 0.0, %v1787
        %v1789 = vpop.f32.mrf.mxu0
        %v1790 = vpop.f32.mrf.mxu0
        %v1791 = vadd.f32 0.0, %v1790
        %v1792 = vpop.f32.mrf.mxu0
        %1793 = vmatprep.mubr.bf16.mxu0 0
        %1794 = vmatmul.mubr.bf16.gmra.mxu0 %v247
        %v1795 = vpop.f32.mrf.mxu0
        %v1796 = vadd.f32 0.0, %v1795
        %v1797 = vpop.f32.mrf.mxu0
        %v1798 = vpop.f32.mrf.mxu0
        %v1799 = vadd.f32 0.0, %v1798
        %v1800 = vpop.f32.mrf.mxu0
        %1801 = vmatprep.mubr.bf16.mxu0 0
        %1802 = vmatmul.mubr.bf16.gmra.mxu0 %v248
        %v1803 = vpop.f32.mrf.mxu0
        %v1804 = vadd.f32 0.0, %v1803
        %v1805 = vpop.f32.mrf.mxu0
        %v1806 = vpop.f32.mrf.mxu0
        %v1807 = vadd.f32 0.0, %v1806
        %v1808 = vpop.f32.mrf.mxu0
        %1809 = vmatprep.mubr.bf16.mxu0 0
        %1810 = vmatmul.mubr.bf16.gmra.mxu0 %v249
        %v1811 = vpop.f32.mrf.mxu0
        %v1812 = vadd.f32 0.0, %v1811
        %v1813 = vpop.f32.mrf.mxu0
        %v1814 = vpop.f32.mrf.mxu0
        %v1815 = vadd.f32 0.0, %v1814
        %v1816 = vpop.f32.mrf.mxu0
        %1817 = vmatprep.mubr.bf16.mxu0 0
        %1818 = vmatmul.mubr.bf16.gmra.mxu0 %v250
        %v1819 = vpop.f32.mrf.mxu0
        %v1820 = vadd.f32 0.0, %v1819
        %v1821 = vpop.f32.mrf.mxu0
        %v1822 = vpop.f32.mrf.mxu0
        %v1823 = vadd.f32 0.0, %v1822
        %v1824 = vpop.f32.mrf.mxu0
        %1825 = vmatprep.mubr.bf16.mxu0 0
        %1826 = vmatmul.mubr.bf16.gmra.mxu0 %v251
        %v1827 = vpop.f32.mrf.mxu0
        %v1828 = vadd.f32 0.0, %v1827
        %v1829 = vpop.f32.mrf.mxu0
        %v1830 = vpop.f32.mrf.mxu0
        %v1831 = vadd.f32 0.0, %v1830
        %v1832 = vpop.f32.mrf.mxu0
        %1833 = vmatprep.mubr.bf16.mxu0 0
        %1834 = vmatmul.mubr.bf16.gmra.mxu0 %v252
        %v1835 = vpop.f32.mrf.mxu0
        %v1836 = vadd.f32 0.0, %v1835
        %v1837 = vpop.f32.mrf.mxu0
        %v1838 = vpop.f32.mrf.mxu0
        %v1839 = vadd.f32 0.0, %v1838
        %v1840 = vpop.f32.mrf.mxu0
        %1841 = vmatprep.mubr.bf16.mxu0 0
        %1842 = vmatmul.mubr.bf16.gmra.mxu0 %v253
        %v1843 = vpop.f32.mrf.mxu0
        %v1844 = vadd.f32 0.0, %v1843
        %v1845 = vpop.f32.mrf.mxu0
        %v1846 = vpop.f32.mrf.mxu0
        %v1847 = vadd.f32 0.0, %v1846
        %v1848 = vpop.f32.mrf.mxu0
        %1849 = vmatprep.mubr.bf16.mxu0 0
        %1850 = vmatmul.mubr.bf16.gmra.mxu0 %v254
        %v1851 = vpop.f32.mrf.mxu0
        %v1852 = vadd.f32 0.0, %v1851
        %v1853 = vpop.f32.mrf.mxu0
        %v1854 = vpop.f32.mrf.mxu0
        %v1855 = vadd.f32 0.0, %v1854
        %v1856 = vpop.f32.mrf.mxu0
        %1857 = vdwg.mxu0
        %v1858 = vadd.f32 %v1600, %v1732
        %v1859 = vadd.f32 %v1601, %v1735
        %v1860 = vadd.f32 %v1602, %v1740
        %v1861 = vadd.f32 %v1603, %v1743
        %v1862 = vadd.f32 %v1604, %v1748
        %v1863 = vadd.f32 %v1605, %v1751
        %v1864 = vadd.f32 %v1606, %v1756
        %v1865 = vadd.f32 %v1607, %v1759
        %v1866 = vadd.f32 %v1608, %v1764
        %v1867 = vadd.f32 %v1609, %v1767
        %v1868 = vadd.f32 %v1610, %v1772
        %v1869 = vadd.f32 %v1611, %v1775
        %v1870 = vadd.f32 %v1612, %v1780
        %v1871 = vadd.f32 %v1613, %v1783
        %v1872 = vadd.f32 %v1614, %v1788
        %v1873 = vadd.f32 %v1615, %v1791
        %v1874 = vadd.f32 %v1616, %v1796
        %v1875 = vadd.f32 %v1617, %v1799
        %v1876 = vadd.f32 %v1618, %v1804
        %v1877 = vadd.f32 %v1619, %v1807
        %v1878 = vadd.f32 %v1620, %v1812
        %v1879 = vadd.f32 %v1621, %v1815
        %v1880 = vadd.f32 %v1622, %v1820
        %v1881 = vadd.f32 %v1623, %v1823
        %v1882 = vadd.f32 %v1624, %v1828
        %v1883 = vadd.f32 %v1625, %v1831
        %v1884 = vadd.f32 %v1626, %v1836
        %v1885 = vadd.f32 %v1627, %v1839
        %v1886 = vadd.f32 %v1628, %v1844
        %v1887 = vadd.f32 %v1629, %v1847
        %v1888 = vadd.f32 %v1630, %v1852
        %v1889 = vadd.f32 %v1631, %v1855
        %v1890 = vsel %vm1098, %v1045, 0
        %s1891 = scalar_lea.vmem [#allocation5], 320
        %v1892 = vld [vmem:[%s1891] sm:$0xf]
        %v1893 = vld [vmem:[%s1891 + $0x4] sm:$0xf]
        %v1894 = vld [vmem:[%s1891 + $0x8] sm:$0xf]
        %v1895 = vld [vmem:[%s1891 + $0xc] sm:$0xf]
        %v1896 = vld [vmem:[%s1891 + $0x10] sm:$0xf]
        %v1897 = vld [vmem:[%s1891 + $0x14] sm:$0xf]
        %v1898 = vld [vmem:[%s1891 + $0x18] sm:$0xf]
        %v1899 = vld [vmem:[%s1891 + $0x1c] sm:$0xf]
        %v1900 = vld [vmem:[%s1891 + $0x20] sm:$0xf]
        %v1901 = vld [vmem:[%s1891 + $0x24] sm:$0xf]
        %v1902 = vld [vmem:[%s1891 + $0x28] sm:$0xf]
        %v1903 = vld [vmem:[%s1891 + $0x2c] sm:$0xf]
        %v1904 = vld [vmem:[%s1891 + $0x30] sm:$0xf]
        %v1905 = vld [vmem:[%s1891 + $0x34] sm:$0xf]
        %v1906 = vld [vmem:[%s1891 + $0x38] sm:$0xf]
        %v1907 = vld [vmem:[%s1891 + $0x3c] sm:$0xf]
        %v1924 = vunpack.c.l.b16 %v1892
        %v1925 = vunpack.c.l.b16 %v1893
        %v1926 = vunpack.c.l.b16 %v1894
        %v1927 = vunpack.c.l.b16 %v1895
        %v1928 = vunpack.c.l.b16 %v1896
        %v1929 = vunpack.c.l.b16 %v1897
        %v1930 = vunpack.c.l.b16 %v1898
        %v1931 = vunpack.c.l.b16 %v1899
        %v1932 = vunpack.c.l.b16 %v1900
        %v1933 = vunpack.c.l.b16 %v1901
        %v1934 = vunpack.c.l.b16 %v1902
        %v1935 = vunpack.c.l.b16 %v1903
        %v1936 = vunpack.c.l.b16 %v1904
        %v1937 = vunpack.c.l.b16 %v1905
        %v1938 = vunpack.c.l.b16 %v1906
        %v1939 = vunpack.c.l.b16 %v1907
        %v1940 = vpack.c.b16 %v1925, %v1924
        %v1941 = vpack.c.b16 %v1927, %v1926
        %v1942 = vpack.c.b16 %v1929, %v1928
        %v1943 = vpack.c.b16 %v1931, %v1930
        %v1944 = vpack.c.b16 %v1933, %v1932
        %v1945 = vpack.c.b16 %v1935, %v1934
        %v1946 = vpack.c.b16 %v1937, %v1936
        %v1947 = vpack.c.b16 %v1939, %v1938
        %1956 = vmatprep.subr.bf16.mxu0 0
        %1957 = vmatpush1.bf16.msra.mxu0 %v1947
        %1958 = vmatprep.subr.bf16.mxu0 0
        %1959 = vmatpush1.bf16.msra.mxu0 %v1946
        %1960 = vmatprep.subr.bf16.mxu0 0
        %1961 = vmatpush1.bf16.msra.mxu0 %v1945
        %1962 = vmatprep.subr.bf16.mxu0 0
        %1963 = vmatpush1.bf16.msra.mxu0 %v1944
        %1964 = vmatprep.subr.bf16.mxu0 0
        %1965 = vmatpush1.bf16.msra.mxu0 %v1943
        %1966 = vmatprep.subr.bf16.mxu0 0
        %1967 = vmatpush1.bf16.msra.mxu0 %v1942
        %1968 = vmatprep.subr.bf16.mxu0 0
        %1969 = vmatpush1.bf16.msra.mxu0 %v1941
        %1970 = vmatprep.subr.bf16.mxu0 0
        %1971 = vmatpush1.bf16.msra.mxu0 %v1940
        %1972 = vmatprep.subr.bf16.mxu0 0
        %1973 = vmatpush2.bf16.msra.mxu0 0
        %1974 = vmatprep.subr.bf16.mxu0 0
        %1975 = vmatpush2.bf16.msra.mxu0 0
        %1976 = vmatprep.subr.bf16.mxu0 0
        %1977 = vmatpush2.bf16.msra.mxu0 0
        %1978 = vmatprep.subr.bf16.mxu0 0
        %1979 = vmatpush2.bf16.msra.mxu0 0
        %1980 = vmatprep.subr.bf16.mxu0 0
        %1981 = vmatpush2.bf16.msra.mxu0 0
        %1982 = vmatprep.subr.bf16.mxu0 0
        %1983 = vmatpush2.bf16.msra.mxu0 0
        %1984 = vmatprep.subr.bf16.mxu0 0
        %1985 = vmatpush2.bf16.msra.mxu0 0
        %1986 = vmatprep.subr.bf16.mxu0 0
        %1987 = vmatpush2.bf16.msra.mxu0 0
        %1988 = vmatprep.mubr.bf16.mxu0 0
        %1989 = vmatmul.mubr.bf16.gmra.mxu0 %v1100
        %v1990 = vpop.f32.mrf.mxu0
        %v1991 = vadd.f32 0.0, %v1990
        %v1992 = vpop.f32.mrf.mxu0
        %v1993 = vpop.f32.mrf.mxu0
        %v1994 = vadd.f32 0.0, %v1993
        %v1995 = vpop.f32.mrf.mxu0
        %1996 = vmatprep.mubr.bf16.mxu0 0
        %1997 = vmatmul.mubr.bf16.gmra.mxu0 %v1101
        %v1998 = vpop.f32.mrf.mxu0
        %v1999 = vadd.f32 0.0, %v1998
        %v2000 = vpop.f32.mrf.mxu0
        %v2001 = vpop.f32.mrf.mxu0
        %v2002 = vadd.f32 0.0, %v2001
        %v2003 = vpop.f32.mrf.mxu0
        %2004 = vmatprep.mubr.bf16.mxu0 0
        %2005 = vmatmul.mubr.bf16.gmra.mxu0 %v1102
        %v2006 = vpop.f32.mrf.mxu0
        %v2007 = vadd.f32 0.0, %v2006
        %v2008 = vpop.f32.mrf.mxu0
        %v2009 = vpop.f32.mrf.mxu0
        %v2010 = vadd.f32 0.0, %v2009
        %v2011 = vpop.f32.mrf.mxu0
        %2012 = vmatprep.mubr.bf16.mxu0 0
        %2013 = vmatmul.mubr.bf16.gmra.mxu0 %v1103
        %v2014 = vpop.f32.mrf.mxu0
        %v2015 = vadd.f32 0.0, %v2014
        %v2016 = vpop.f32.mrf.mxu0
        %v2017 = vpop.f32.mrf.mxu0
        %v2018 = vadd.f32 0.0, %v2017
        %v2019 = vpop.f32.mrf.mxu0
        %2020 = vmatprep.mubr.bf16.mxu0 0
        %2021 = vmatmul.mubr.bf16.gmra.mxu0 %v1104
        %v2022 = vpop.f32.mrf.mxu0
        %v2023 = vadd.f32 0.0, %v2022
        %v2024 = vpop.f32.mrf.mxu0
        %v2025 = vpop.f32.mrf.mxu0
        %v2026 = vadd.f32 0.0, %v2025
        %v2027 = vpop.f32.mrf.mxu0
        %2028 = vmatprep.mubr.bf16.mxu0 0
        %2029 = vmatmul.mubr.bf16.gmra.mxu0 %v1105
        %v2030 = vpop.f32.mrf.mxu0
        %v2031 = vadd.f32 0.0, %v2030
        %v2032 = vpop.f32.mrf.mxu0
        %v2033 = vpop.f32.mrf.mxu0
        %v2034 = vadd.f32 0.0, %v2033
        %v2035 = vpop.f32.mrf.mxu0
        %2036 = vmatprep.mubr.bf16.mxu0 0
        %2037 = vmatmul.mubr.bf16.gmra.mxu0 %v1106
        %v2038 = vpop.f32.mrf.mxu0
        %v2039 = vadd.f32 0.0, %v2038
        %v2040 = vpop.f32.mrf.mxu0
        %v2041 = vpop.f32.mrf.mxu0
        %v2042 = vadd.f32 0.0, %v2041
        %v2043 = vpop.f32.mrf.mxu0
        %2044 = vmatprep.mubr.bf16.mxu0 0
        %2045 = vmatmul.mubr.bf16.gmra.mxu0 %v1107
        %v2046 = vpop.f32.mrf.mxu0
        %v2047 = vadd.f32 0.0, %v2046
        %v2048 = vpop.f32.mrf.mxu0
        %v2049 = vpop.f32.mrf.mxu0
        %v2050 = vadd.f32 0.0, %v2049
        %v2051 = vpop.f32.mrf.mxu0
        %2052 = vmatprep.mubr.bf16.mxu0 0
        %2053 = vmatmul.mubr.bf16.gmra.mxu0 %v1108
        %v2054 = vpop.f32.mrf.mxu0
        %v2055 = vadd.f32 0.0, %v2054
        %v2056 = vpop.f32.mrf.mxu0
        %v2057 = vpop.f32.mrf.mxu0
        %v2058 = vadd.f32 0.0, %v2057
        %v2059 = vpop.f32.mrf.mxu0
        %2060 = vmatprep.mubr.bf16.mxu0 0
        %2061 = vmatmul.mubr.bf16.gmra.mxu0 %v1109
        %v2062 = vpop.f32.mrf.mxu0
        %v2063 = vadd.f32 0.0, %v2062
        %v2064 = vpop.f32.mrf.mxu0
        %v2065 = vpop.f32.mrf.mxu0
        %v2066 = vadd.f32 0.0, %v2065
        %v2067 = vpop.f32.mrf.mxu0
        %2068 = vmatprep.mubr.bf16.mxu0 0
        %2069 = vmatmul.mubr.bf16.gmra.mxu0 %v1110
        %v2070 = vpop.f32.mrf.mxu0
        %v2071 = vadd.f32 0.0, %v2070
        %v2072 = vpop.f32.mrf.mxu0
        %v2073 = vpop.f32.mrf.mxu0
        %v2074 = vadd.f32 0.0, %v2073
        %v2075 = vpop.f32.mrf.mxu0
        %2076 = vmatprep.mubr.bf16.mxu0 0
        %2077 = vmatmul.mubr.bf16.gmra.mxu0 %v1111
        %v2078 = vpop.f32.mrf.mxu0
        %v2079 = vadd.f32 0.0, %v2078
        %v2080 = vpop.f32.mrf.mxu0
        %v2081 = vpop.f32.mrf.mxu0
        %v2082 = vadd.f32 0.0, %v2081
        %v2083 = vpop.f32.mrf.mxu0
        %2084 = vmatprep.mubr.bf16.mxu0 0
        %2085 = vmatmul.mubr.bf16.gmra.mxu0 %v1112
        %v2086 = vpop.f32.mrf.mxu0
        %v2087 = vadd.f32 0.0, %v2086
        %v2088 = vpop.f32.mrf.mxu0
        %v2089 = vpop.f32.mrf.mxu0
        %v2090 = vadd.f32 0.0, %v2089
        %v2091 = vpop.f32.mrf.mxu0
        %2092 = vmatprep.mubr.bf16.mxu0 0
        %2093 = vmatmul.mubr.bf16.gmra.mxu0 %v1113
        %v2094 = vpop.f32.mrf.mxu0
        %v2095 = vadd.f32 0.0, %v2094
        %v2096 = vpop.f32.mrf.mxu0
        %v2097 = vpop.f32.mrf.mxu0
        %v2098 = vadd.f32 0.0, %v2097
        %v2099 = vpop.f32.mrf.mxu0
        %2100 = vmatprep.mubr.bf16.mxu0 0
        %2101 = vmatmul.mubr.bf16.gmra.mxu0 %v1114
        %v2102 = vpop.f32.mrf.mxu0
        %v2103 = vadd.f32 0.0, %v2102
        %v2104 = vpop.f32.mrf.mxu0
        %v2105 = vpop.f32.mrf.mxu0
        %v2106 = vadd.f32 0.0, %v2105
        %v2107 = vpop.f32.mrf.mxu0
        %2108 = vmatprep.mubr.bf16.mxu0 0
        %2109 = vmatmul.mubr.bf16.gmra.mxu0 %v1890
        %v2110 = vpop.f32.mrf.mxu0
        %v2111 = vadd.f32 0.0, %v2110
        %v2112 = vpop.f32.mrf.mxu0
        %v2113 = vpop.f32.mrf.mxu0
        %v2114 = vadd.f32 0.0, %v2113
        %v2115 = vpop.f32.mrf.mxu0
        %2116 = vdwg.mxu0
        %v2117 = vadd.f32 %v1858, %v1991
        %v2118 = vadd.f32 %v1859, %v1994
        %v2119 = vadd.f32 %v1860, %v1999
        %v2120 = vadd.f32 %v1861, %v2002
        %v2121 = vadd.f32 %v1862, %v2007
        %v2122 = vadd.f32 %v1863, %v2010
        %v2123 = vadd.f32 %v1864, %v2015
        %v2124 = vadd.f32 %v1865, %v2018
        %v2125 = vadd.f32 %v1866, %v2023
        %v2126 = vadd.f32 %v1867, %v2026
        %v2127 = vadd.f32 %v1868, %v2031
        %v2128 = vadd.f32 %v1869, %v2034
        %v2129 = vadd.f32 %v1870, %v2039
        %v2130 = vadd.f32 %v1871, %v2042
        %v2131 = vadd.f32 %v1872, %v2047
        %v2132 = vadd.f32 %v1873, %v2050
        %v2133 = vadd.f32 %v1874, %v2055
        %v2134 = vadd.f32 %v1875, %v2058
        %v2135 = vadd.f32 %v1876, %v2063
        %v2136 = vadd.f32 %v1877, %v2066
        %v2137 = vadd.f32 %v1878, %v2071
        %v2138 = vadd.f32 %v1879, %v2074
        %v2139 = vadd.f32 %v1880, %v2079
        %v2140 = vadd.f32 %v1881, %v2082
        %v2141 = vadd.f32 %v1882, %v2087
        %v2142 = vadd.f32 %v1883, %v2090
        %v2143 = vadd.f32 %v1884, %v2095
        %v2144 = vadd.f32 %v1885, %v2098
        %v2145 = vadd.f32 %v1886, %v2103
        %v2146 = vadd.f32 %v1887, %v2106
        %v2147 = vadd.f32 %v1888, %v2111
        %v2148 = vadd.f32 %v1889, %v2114
        %v2149 = vsel %vm457, %v406, 0
        %s2150 = scalar_lea.vmem [#allocation5], 384
        %v2151 = vld [vmem:[%s2150] sm:$0xf]
        %v2152 = vld [vmem:[%s2150 + $0x4] sm:$0xf]
        %v2153 = vld [vmem:[%s2150 + $0x8] sm:$0xf]
        %v2154 = vld [vmem:[%s2150 + $0xc] sm:$0xf]
        %v2155 = vld [vmem:[%s2150 + $0x10] sm:$0xf]
        %v2156 = vld [vmem:[%s2150 + $0x14] sm:$0xf]
        %v2157 = vld [vmem:[%s2150 + $0x18] sm:$0xf]
        %v2158 = vld [vmem:[%s2150 + $0x1c] sm:$0xf]
        %v2159 = vld [vmem:[%s2150 + $0x20] sm:$0xf]
        %v2160 = vld [vmem:[%s2150 + $0x24] sm:$0xf]
        %v2161 = vld [vmem:[%s2150 + $0x28] sm:$0xf]
        %v2162 = vld [vmem:[%s2150 + $0x2c] sm:$0xf]
        %v2163 = vld [vmem:[%s2150 + $0x30] sm:$0xf]
        %v2164 = vld [vmem:[%s2150 + $0x34] sm:$0xf]
        %v2165 = vld [vmem:[%s2150 + $0x38] sm:$0xf]
        %v2166 = vld [vmem:[%s2150 + $0x3c] sm:$0xf]
        %v2183 = vunpack.c.l.b16 %v2151
        %v2184 = vunpack.c.l.b16 %v2152
        %v2185 = vunpack.c.l.b16 %v2153
        %v2186 = vunpack.c.l.b16 %v2154
        %v2187 = vunpack.c.l.b16 %v2155
        %v2188 = vunpack.c.l.b16 %v2156
        %v2189 = vunpack.c.l.b16 %v2157
        %v2190 = vunpack.c.l.b16 %v2158
        %v2191 = vunpack.c.l.b16 %v2159
        %v2192 = vunpack.c.l.b16 %v2160
        %v2193 = vunpack.c.l.b16 %v2161
        %v2194 = vunpack.c.l.b16 %v2162
        %v2195 = vunpack.c.l.b16 %v2163
        %v2196 = vunpack.c.l.b16 %v2164
        %v2197 = vunpack.c.l.b16 %v2165
        %v2198 = vunpack.c.l.b16 %v2166
        %v2199 = vpack.c.b16 %v2184, %v2183
        %v2200 = vpack.c.b16 %v2186, %v2185
        %v2201 = vpack.c.b16 %v2188, %v2187
        %v2202 = vpack.c.b16 %v2190, %v2189
        %v2203 = vpack.c.b16 %v2192, %v2191
        %v2204 = vpack.c.b16 %v2194, %v2193
        %v2205 = vpack.c.b16 %v2196, %v2195
        %v2206 = vpack.c.b16 %v2198, %v2197
        %2215 = vmatprep.subr.bf16.mxu0 0
        %2216 = vmatpush1.bf16.msra.mxu0 %v2206
        %2217 = vmatprep.subr.bf16.mxu0 0
        %2218 = vmatpush1.bf16.msra.mxu0 %v2205
        %2219 = vmatprep.subr.bf16.mxu0 0
        %2220 = vmatpush1.bf16.msra.mxu0 %v2204
        %2221 = vmatprep.subr.bf16.mxu0 0
        %2222 = vmatpush1.bf16.msra.mxu0 %v2203
        %2223 = vmatprep.subr.bf16.mxu0 0
        %2224 = vmatpush1.bf16.msra.mxu0 %v2202
        %2225 = vmatprep.subr.bf16.mxu0 0
        %2226 = vmatpush1.bf16.msra.mxu0 %v2201
        %2227 = vmatprep.subr.bf16.mxu0 0
        %2228 = vmatpush1.bf16.msra.mxu0 %v2200
        %2229 = vmatprep.subr.bf16.mxu0 0
        %2230 = vmatpush1.bf16.msra.mxu0 %v2199
        %2231 = vmatprep.subr.bf16.mxu0 0
        %2232 = vmatpush2.bf16.msra.mxu0 0
        %2233 = vmatprep.subr.bf16.mxu0 0
        %2234 = vmatpush2.bf16.msra.mxu0 0
        %2235 = vmatprep.subr.bf16.mxu0 0
        %2236 = vmatpush2.bf16.msra.mxu0 0
        %2237 = vmatprep.subr.bf16.mxu0 0
        %2238 = vmatpush2.bf16.msra.mxu0 0
        %2239 = vmatprep.subr.bf16.mxu0 0
        %2240 = vmatpush2.bf16.msra.mxu0 0
        %2241 = vmatprep.subr.bf16.mxu0 0
        %2242 = vmatpush2.bf16.msra.mxu0 0
        %2243 = vmatprep.subr.bf16.mxu0 0
        %2244 = vmatpush2.bf16.msra.mxu0 0
        %2245 = vmatprep.subr.bf16.mxu0 0
        %2246 = vmatpush2.bf16.msra.mxu0 0
        %2247 = vmatprep.mubr.bf16.mxu0 0
        %2248 = vmatmul.mubr.bf16.gmra.mxu0 %v461
        %v2249 = vpop.f32.mrf.mxu0
        %v2250 = vadd.f32 0.0, %v2249
        %v2251 = vpop.f32.mrf.mxu0
        %v2252 = vpop.f32.mrf.mxu0
        %v2253 = vadd.f32 0.0, %v2252
        %v2254 = vpop.f32.mrf.mxu0
        %2255 = vmatprep.mubr.bf16.mxu0 0
        %2256 = vmatmul.mubr.bf16.gmra.mxu0 %v462
        %v2257 = vpop.f32.mrf.mxu0
        %v2258 = vadd.f32 0.0, %v2257
        %v2259 = vpop.f32.mrf.mxu0
        %v2260 = vpop.f32.mrf.mxu0
        %v2261 = vadd.f32 0.0, %v2260
        %v2262 = vpop.f32.mrf.mxu0
        %2263 = vmatprep.mubr.bf16.mxu0 0
        %2264 = vmatmul.mubr.bf16.gmra.mxu0 %v463
        %v2265 = vpop.f32.mrf.mxu0
        %v2266 = vadd.f32 0.0, %v2265
        %v2267 = vpop.f32.mrf.mxu0
        %v2268 = vpop.f32.mrf.mxu0
        %v2269 = vadd.f32 0.0, %v2268
        %v2270 = vpop.f32.mrf.mxu0
        %2271 = vmatprep.mubr.bf16.mxu0 0
        %2272 = vmatmul.mubr.bf16.gmra.mxu0 %v464
        %v2273 = vpop.f32.mrf.mxu0
        %v2274 = vadd.f32 0.0, %v2273
        %v2275 = vpop.f32.mrf.mxu0
        %v2276 = vpop.f32.mrf.mxu0
        %v2277 = vadd.f32 0.0, %v2276
        %v2278 = vpop.f32.mrf.mxu0
        %2279 = vmatprep.mubr.bf16.mxu0 0
        %2280 = vmatmul.mubr.bf16.gmra.mxu0 %v465
        %v2281 = vpop.f32.mrf.mxu0
        %v2282 = vadd.f32 0.0, %v2281
        %v2283 = vpop.f32.mrf.mxu0
        %v2284 = vpop.f32.mrf.mxu0
        %v2285 = vadd.f32 0.0, %v2284
        %v2286 = vpop.f32.mrf.mxu0
        %2287 = vmatprep.mubr.bf16.mxu0 0
        %2288 = vmatmul.mubr.bf16.gmra.mxu0 %v466
        %v2289 = vpop.f32.mrf.mxu0
        %v2290 = vadd.f32 0.0, %v2289
        %v2291 = vpop.f32.mrf.mxu0
        %v2292 = vpop.f32.mrf.mxu0
        %v2293 = vadd.f32 0.0, %v2292
        %v2294 = vpop.f32.mrf.mxu0
        %2295 = vmatprep.mubr.bf16.mxu0 0
        %2296 = vmatmul.mubr.bf16.gmra.mxu0 %v467
        %v2297 = vpop.f32.mrf.mxu0
        %v2298 = vadd.f32 0.0, %v2297
        %v2299 = vpop.f32.mrf.mxu0
        %v2300 = vpop.f32.mrf.mxu0
        %v2301 = vadd.f32 0.0, %v2300
        %v2302 = vpop.f32.mrf.mxu0
        %2303 = vmatprep.mubr.bf16.mxu0 0
        %2304 = vmatmul.mubr.bf16.gmra.mxu0 %v468
        %v2305 = vpop.f32.mrf.mxu0
        %v2306 = vadd.f32 0.0, %v2305
        %v2307 = vpop.f32.mrf.mxu0
        %v2308 = vpop.f32.mrf.mxu0
        %v2309 = vadd.f32 0.0, %v2308
        %v2310 = vpop.f32.mrf.mxu0
        %2311 = vmatprep.mubr.bf16.mxu0 0
        %2312 = vmatmul.mubr.bf16.gmra.mxu0 %v469
        %v2313 = vpop.f32.mrf.mxu0
        %v2314 = vadd.f32 0.0, %v2313
        %v2315 = vpop.f32.mrf.mxu0
        %v2316 = vpop.f32.mrf.mxu0
        %v2317 = vadd.f32 0.0, %v2316
        %v2318 = vpop.f32.mrf.mxu0
        %2319 = vmatprep.mubr.bf16.mxu0 0
        %2320 = vmatmul.mubr.bf16.gmra.mxu0 %v470
        %v2321 = vpop.f32.mrf.mxu0
        %v2322 = vadd.f32 0.0, %v2321
        %v2323 = vpop.f32.mrf.mxu0
        %v2324 = vpop.f32.mrf.mxu0
        %v2325 = vadd.f32 0.0, %v2324
        %v2326 = vpop.f32.mrf.mxu0
        %2327 = vmatprep.mubr.bf16.mxu0 0
        %2328 = vmatmul.mubr.bf16.gmra.mxu0 %v471
        %v2329 = vpop.f32.mrf.mxu0
        %v2330 = vadd.f32 0.0, %v2329
        %v2331 = vpop.f32.mrf.mxu0
        %v2332 = vpop.f32.mrf.mxu0
        %v2333 = vadd.f32 0.0, %v2332
        %v2334 = vpop.f32.mrf.mxu0
        %2335 = vmatprep.mubr.bf16.mxu0 0
        %2336 = vmatmul.mubr.bf16.gmra.mxu0 %v472
        %v2337 = vpop.f32.mrf.mxu0
        %v2338 = vadd.f32 0.0, %v2337
        %v2339 = vpop.f32.mrf.mxu0
        %v2340 = vpop.f32.mrf.mxu0
        %v2341 = vadd.f32 0.0, %v2340
        %v2342 = vpop.f32.mrf.mxu0
        %2343 = vmatprep.mubr.bf16.mxu0 0
        %2344 = vmatmul.mubr.bf16.gmra.mxu0 %v473
        %v2345 = vpop.f32.mrf.mxu0
        %v2346 = vadd.f32 0.0, %v2345
        %v2347 = vpop.f32.mrf.mxu0
        %v2348 = vpop.f32.mrf.mxu0
        %v2349 = vadd.f32 0.0, %v2348
        %v2350 = vpop.f32.mrf.mxu0
        %2351 = vmatprep.mubr.bf16.mxu0 0
        %2352 = vmatmul.mubr.bf16.gmra.mxu0 %v474
        %v2353 = vpop.f32.mrf.mxu0
        %v2354 = vadd.f32 0.0, %v2353
        %v2355 = vpop.f32.mrf.mxu0
        %v2356 = vpop.f32.mrf.mxu0
        %v2357 = vadd.f32 0.0, %v2356
        %v2358 = vpop.f32.mrf.mxu0
        %2359 = vmatprep.mubr.bf16.mxu0 0
        %2360 = vmatmul.mubr.bf16.gmra.mxu0 %v1373
        %v2361 = vpop.f32.mrf.mxu0
        %v2362 = vadd.f32 0.0, %v2361
        %v2363 = vpop.f32.mrf.mxu0
        %v2364 = vpop.f32.mrf.mxu0
        %v2365 = vadd.f32 0.0, %v2364
        %v2366 = vpop.f32.mrf.mxu0
        %2367 = vmatprep.mubr.bf16.mxu0 0
        %2368 = vmatmul.mubr.bf16.gmra.mxu0 %v2149
        %v2369 = vpop.f32.mrf.mxu0
        %v2370 = vadd.f32 0.0, %v2369
        %v2371 = vpop.f32.mrf.mxu0
        %v2372 = vpop.f32.mrf.mxu0
        %v2373 = vadd.f32 0.0, %v2372
        %v2374 = vpop.f32.mrf.mxu0
        %2375 = vdwg.mxu0
        %v2376 = vadd.f32 %v2117, %v2250
        %v2377 = vadd.f32 %v2118, %v2253
        %v2378 = vadd.f32 %v2119, %v2258
        %v2379 = vadd.f32 %v2120, %v2261
        %v2380 = vadd.f32 %v2121, %v2266
        %v2381 = vadd.f32 %v2122, %v2269
        %v2382 = vadd.f32 %v2123, %v2274
        %v2383 = vadd.f32 %v2124, %v2277
        %v2384 = vadd.f32 %v2125, %v2282
        %v2385 = vadd.f32 %v2126, %v2285
        %v2386 = vadd.f32 %v2127, %v2290
        %v2387 = vadd.f32 %v2128, %v2293
        %v2388 = vadd.f32 %v2129, %v2298
        %v2389 = vadd.f32 %v2130, %v2301
        %v2390 = vadd.f32 %v2131, %v2306
        %v2391 = vadd.f32 %v2132, %v2309
        %v2392 = vadd.f32 %v2133, %v2314
        %v2393 = vadd.f32 %v2134, %v2317
        %v2394 = vadd.f32 %v2135, %v2322
        %v2395 = vadd.f32 %v2136, %v2325
        %v2396 = vadd.f32 %v2137, %v2330
        %v2397 = vadd.f32 %v2138, %v2333
        %v2398 = vadd.f32 %v2139, %v2338
        %v2399 = vadd.f32 %v2140, %v2341
        %v2400 = vadd.f32 %v2141, %v2346
        %v2401 = vadd.f32 %v2142, %v2349
        %v2402 = vadd.f32 %v2143, %v2354
        %v2403 = vadd.f32 %v2144, %v2357
        %v2404 = vadd.f32 %v2145, %v2362
        %v2405 = vadd.f32 %v2146, %v2365
        %v2406 = vadd.f32 %v2147, %v2370
        %v2407 = vadd.f32 %v2148, %v2373
        %v2408 = vsel %vm526, %v254, 0
        %v2409 = vsel %vm525, %v239, 0
        %s2410 = scalar_lea.vmem [#allocation5], 448
        %v2411 = vld [vmem:[%s2410] sm:$0xf]
        %v2412 = vld [vmem:[%s2410 + $0x4] sm:$0xf]
        %v2413 = vld [vmem:[%s2410 + $0x8] sm:$0xf]
        %v2414 = vld [vmem:[%s2410 + $0xc] sm:$0xf]
        %v2415 = vld [vmem:[%s2410 + $0x10] sm:$0xf]
        %v2416 = vld [vmem:[%s2410 + $0x14] sm:$0xf]
        %v2417 = vld [vmem:[%s2410 + $0x18] sm:$0xf]
        %v2418 = vld [vmem:[%s2410 + $0x1c] sm:$0xf]
        %v2419 = vld [vmem:[%s2410 + $0x20] sm:$0xf]
        %v2420 = vld [vmem:[%s2410 + $0x24] sm:$0xf]
        %v2421 = vld [vmem:[%s2410 + $0x28] sm:$0xf]
        %v2422 = vld [vmem:[%s2410 + $0x2c] sm:$0xf]
        %v2423 = vld [vmem:[%s2410 + $0x30] sm:$0xf]
        %v2424 = vld [vmem:[%s2410 + $0x34] sm:$0xf]
        %v2425 = vld [vmem:[%s2410 + $0x38] sm:$0xf]
        %v2426 = vld [vmem:[%s2410 + $0x3c] sm:$0xf]
        %v2443 = vunpack.c.l.b16 %v2411
        %v2444 = vunpack.c.l.b16 %v2412
        %v2445 = vunpack.c.l.b16 %v2413
        %v2446 = vunpack.c.l.b16 %v2414
        %v2447 = vunpack.c.l.b16 %v2415
        %v2448 = vunpack.c.l.b16 %v2416
        %v2449 = vunpack.c.l.b16 %v2417
        %v2450 = vunpack.c.l.b16 %v2418
        %v2451 = vunpack.c.l.b16 %v2419
        %v2452 = vunpack.c.l.b16 %v2420
        %v2453 = vunpack.c.l.b16 %v2421
        %v2454 = vunpack.c.l.b16 %v2422
        %v2455 = vunpack.c.l.b16 %v2423
        %v2456 = vunpack.c.l.b16 %v2424
        %v2457 = vunpack.c.l.b16 %v2425
        %v2458 = vunpack.c.l.b16 %v2426
        %v2459 = vpack.c.b16 %v2444, %v2443
        %v2460 = vpack.c.b16 %v2446, %v2445
        %v2461 = vpack.c.b16 %v2448, %v2447
        %v2462 = vpack.c.b16 %v2450, %v2449
        %v2463 = vpack.c.b16 %v2452, %v2451
        %v2464 = vpack.c.b16 %v2454, %v2453
        %v2465 = vpack.c.b16 %v2456, %v2455
        %v2466 = vpack.c.b16 %v2458, %v2457
        %2475 = vmatprep.subr.bf16.mxu0 0
        %2476 = vmatpush1.bf16.msra.mxu0 %v2466
        %2477 = vmatprep.subr.bf16.mxu0 0
        %2478 = vmatpush1.bf16.msra.mxu0 %v2465
        %2479 = vmatprep.subr.bf16.mxu0 0
        %2480 = vmatpush1.bf16.msra.mxu0 %v2464
        %2481 = vmatprep.subr.bf16.mxu0 0
        %2482 = vmatpush1.bf16.msra.mxu0 %v2463
        %2483 = vmatprep.subr.bf16.mxu0 0
        %2484 = vmatpush1.bf16.msra.mxu0 %v2462
        %2485 = vmatprep.subr.bf16.mxu0 0
        %2486 = vmatpush1.bf16.msra.mxu0 %v2461
        %2487 = vmatprep.subr.bf16.mxu0 0
        %2488 = vmatpush1.bf16.msra.mxu0 %v2460
        %2489 = vmatprep.subr.bf16.mxu0 0
        %2490 = vmatpush1.bf16.msra.mxu0 %v2459
        %2491 = vmatprep.subr.bf16.mxu0 0
        %2492 = vmatpush2.bf16.msra.mxu0 0
        %2493 = vmatprep.subr.bf16.mxu0 0
        %2494 = vmatpush2.bf16.msra.mxu0 0
        %2495 = vmatprep.subr.bf16.mxu0 0
        %2496 = vmatpush2.bf16.msra.mxu0 0
        %2497 = vmatprep.subr.bf16.mxu0 0
        %2498 = vmatpush2.bf16.msra.mxu0 0
        %2499 = vmatprep.subr.bf16.mxu0 0
        %2500 = vmatpush2.bf16.msra.mxu0 0
        %2501 = vmatprep.subr.bf16.mxu0 0
        %2502 = vmatpush2.bf16.msra.mxu0 0
        %2503 = vmatprep.subr.bf16.mxu0 0
        %2504 = vmatpush2.bf16.msra.mxu0 0
        %2505 = vmatprep.subr.bf16.mxu0 0
        %2506 = vmatpush2.bf16.msra.mxu0 0
        %2507 = vmatprep.mubr.bf16.mxu0 0
        %2508 = vmatmul.mubr.bf16.gmra.mxu0 %v529
        %v2509 = vpop.f32.mrf.mxu0
        %v2510 = vadd.f32 0.0, %v2509
        %v2511 = vpop.f32.mrf.mxu0
        %v2512 = vpop.f32.mrf.mxu0
        %v2513 = vadd.f32 0.0, %v2512
        %v2514 = vpop.f32.mrf.mxu0
        %2515 = vmatprep.mubr.bf16.mxu0 0
        %2516 = vmatmul.mubr.bf16.gmra.mxu0 %v530
        %v2517 = vpop.f32.mrf.mxu0
        %v2518 = vadd.f32 0.0, %v2517
        %v2519 = vpop.f32.mrf.mxu0
        %v2520 = vpop.f32.mrf.mxu0
        %v2521 = vadd.f32 0.0, %v2520
        %v2522 = vpop.f32.mrf.mxu0
        %2523 = vmatprep.mubr.bf16.mxu0 0
        %2524 = vmatmul.mubr.bf16.gmra.mxu0 %v531
        %v2525 = vpop.f32.mrf.mxu0
        %v2526 = vadd.f32 0.0, %v2525
        %v2527 = vpop.f32.mrf.mxu0
        %v2528 = vpop.f32.mrf.mxu0
        %v2529 = vadd.f32 0.0, %v2528
        %v2530 = vpop.f32.mrf.mxu0
        %2531 = vmatprep.mubr.bf16.mxu0 0
        %2532 = vmatmul.mubr.bf16.gmra.mxu0 %v532
        %v2533 = vpop.f32.mrf.mxu0
        %v2534 = vadd.f32 0.0, %v2533
        %v2535 = vpop.f32.mrf.mxu0
        %v2536 = vpop.f32.mrf.mxu0
        %v2537 = vadd.f32 0.0, %v2536
        %v2538 = vpop.f32.mrf.mxu0
        %2539 = vmatprep.mubr.bf16.mxu0 0
        %2540 = vmatmul.mubr.bf16.gmra.mxu0 %v533
        %v2541 = vpop.f32.mrf.mxu0
        %v2542 = vadd.f32 0.0, %v2541
        %v2543 = vpop.f32.mrf.mxu0
        %v2544 = vpop.f32.mrf.mxu0
        %v2545 = vadd.f32 0.0, %v2544
        %v2546 = vpop.f32.mrf.mxu0
        %2547 = vmatprep.mubr.bf16.mxu0 0
        %2548 = vmatmul.mubr.bf16.gmra.mxu0 %v534
        %v2549 = vpop.f32.mrf.mxu0
        %v2550 = vadd.f32 0.0, %v2549
        %v2551 = vpop.f32.mrf.mxu0
        %v2552 = vpop.f32.mrf.mxu0
        %v2553 = vadd.f32 0.0, %v2552
        %v2554 = vpop.f32.mrf.mxu0
        %2555 = vmatprep.mubr.bf16.mxu0 0
        %2556 = vmatmul.mubr.bf16.gmra.mxu0 %v535
        %v2557 = vpop.f32.mrf.mxu0
        %v2558 = vadd.f32 0.0, %v2557
        %v2559 = vpop.f32.mrf.mxu0
        %v2560 = vpop.f32.mrf.mxu0
        %v2561 = vadd.f32 0.0, %v2560
        %v2562 = vpop.f32.mrf.mxu0
        %2563 = vmatprep.mubr.bf16.mxu0 0
        %2564 = vmatmul.mubr.bf16.gmra.mxu0 %v536
        %v2565 = vpop.f32.mrf.mxu0
        %v2566 = vadd.f32 0.0, %v2565
        %v2567 = vpop.f32.mrf.mxu0
        %v2568 = vpop.f32.mrf.mxu0
        %v2569 = vadd.f32 0.0, %v2568
        %v2570 = vpop.f32.mrf.mxu0
        %2571 = vmatprep.mubr.bf16.mxu0 0
        %2572 = vmatmul.mubr.bf16.gmra.mxu0 %v537
        %v2573 = vpop.f32.mrf.mxu0
        %v2574 = vadd.f32 0.0, %v2573
        %v2575 = vpop.f32.mrf.mxu0
        %v2576 = vpop.f32.mrf.mxu0
        %v2577 = vadd.f32 0.0, %v2576
        %v2578 = vpop.f32.mrf.mxu0
        %2579 = vmatprep.mubr.bf16.mxu0 0
        %2580 = vmatmul.mubr.bf16.gmra.mxu0 %v538
        %v2581 = vpop.f32.mrf.mxu0
        %v2582 = vadd.f32 0.0, %v2581
        %v2583 = vpop.f32.mrf.mxu0
        %v2584 = vpop.f32.mrf.mxu0
        %v2585 = vadd.f32 0.0, %v2584
        %v2586 = vpop.f32.mrf.mxu0
        %2587 = vmatprep.mubr.bf16.mxu0 0
        %2588 = vmatmul.mubr.bf16.gmra.mxu0 %v539
        %v2589 = vpop.f32.mrf.mxu0
        %v2590 = vadd.f32 0.0, %v2589
        %v2591 = vpop.f32.mrf.mxu0
        %v2592 = vpop.f32.mrf.mxu0
        %v2593 = vadd.f32 0.0, %v2592
        %v2594 = vpop.f32.mrf.mxu0
        %2595 = vmatprep.mubr.bf16.mxu0 0
        %2596 = vmatmul.mubr.bf16.gmra.mxu0 %v540
        %v2597 = vpop.f32.mrf.mxu0
        %v2598 = vadd.f32 0.0, %v2597
        %v2599 = vpop.f32.mrf.mxu0
        %v2600 = vpop.f32.mrf.mxu0
        %v2601 = vadd.f32 0.0, %v2600
        %v2602 = vpop.f32.mrf.mxu0
        %2603 = vmatprep.mubr.bf16.mxu0 0
        %2604 = vmatmul.mubr.bf16.gmra.mxu0 %v541
        %v2605 = vpop.f32.mrf.mxu0
        %v2606 = vadd.f32 0.0, %v2605
        %v2607 = vpop.f32.mrf.mxu0
        %v2608 = vpop.f32.mrf.mxu0
        %v2609 = vadd.f32 0.0, %v2608
        %v2610 = vpop.f32.mrf.mxu0
        %2611 = vmatprep.mubr.bf16.mxu0 0
        %2612 = vmatmul.mubr.bf16.gmra.mxu0 %v542
        %v2613 = vpop.f32.mrf.mxu0
        %v2614 = vadd.f32 0.0, %v2613
        %v2615 = vpop.f32.mrf.mxu0
        %v2616 = vpop.f32.mrf.mxu0
        %v2617 = vadd.f32 0.0, %v2616
        %v2618 = vpop.f32.mrf.mxu0
        %2619 = vmatprep.mubr.bf16.mxu0 0
        %2620 = vmatmul.mubr.bf16.gmra.mxu0 %v2408
        %v2621 = vpop.f32.mrf.mxu0
        %v2622 = vadd.f32 0.0, %v2621
        %v2623 = vpop.f32.mrf.mxu0
        %v2624 = vpop.f32.mrf.mxu0
        %v2625 = vadd.f32 0.0, %v2624
        %v2626 = vpop.f32.mrf.mxu0
        %2627 = vmatprep.mubr.bf16.mxu0 0
        %2628 = vmatmul.mubr.bf16.gmra.mxu0 %v2409
        %v2629 = vpop.f32.mrf.mxu0
        %v2630 = vadd.f32 0.0, %v2629
        %v2631 = vpop.f32.mrf.mxu0
        %v2632 = vpop.f32.mrf.mxu0
        %v2633 = vadd.f32 0.0, %v2632
        %v2634 = vpop.f32.mrf.mxu0
        %2635 = vdwg.mxu0
        %v2636 = vadd.f32 %v2376, %v2510
        %v2637 = vadd.f32 %v2377, %v2513
        %v2638 = vadd.f32 %v2378, %v2518
        %v2639 = vadd.f32 %v2379, %v2521
        %v2640 = vadd.f32 %v2380, %v2526
        %v2641 = vadd.f32 %v2381, %v2529
        %v2642 = vadd.f32 %v2382, %v2534
        %v2643 = vadd.f32 %v2383, %v2537
        %v2644 = vadd.f32 %v2384, %v2542
        %v2645 = vadd.f32 %v2385, %v2545
        %v2646 = vadd.f32 %v2386, %v2550
        %v2647 = vadd.f32 %v2387, %v2553
        %v2648 = vadd.f32 %v2388, %v2558
        %v2649 = vadd.f32 %v2389, %v2561
        %v2650 = vadd.f32 %v2390, %v2566
        %v2651 = vadd.f32 %v2391, %v2569
        %v2652 = vadd.f32 %v2392, %v2574
        %v2653 = vadd.f32 %v2393, %v2577
        %v2654 = vadd.f32 %v2394, %v2582
        %v2655 = vadd.f32 %v2395, %v2585
        %v2656 = vadd.f32 %v2396, %v2590
        %v2657 = vadd.f32 %v2397, %v2593
        %v2658 = vadd.f32 %v2398, %v2598
        %v2659 = vadd.f32 %v2399, %v2601
        %v2660 = vadd.f32 %v2400, %v2606
        %v2661 = vadd.f32 %v2401, %v2609
        %v2662 = vadd.f32 %v2402, %v2614
        %v2663 = vadd.f32 %v2403, %v2617
        %v2664 = vadd.f32 %v2404, %v2622
        %v2665 = vadd.f32 %v2405, %v2625
        %v2666 = vadd.f32 %v2406, %v2630
        %v2667 = vadd.f32 %v2407, %v2633
        %v2668 = vsel %vm1097, %v1046, 0
        %s2669 = scalar_lea.vmem [#allocation5], 512
        %v2670 = vld [vmem:[%s2669] sm:$0xf]
        %v2671 = vld [vmem:[%s2669 + $0x4] sm:$0xf]
        %v2672 = vld [vmem:[%s2669 + $0x8] sm:$0xf]
        %v2673 = vld [vmem:[%s2669 + $0xc] sm:$0xf]
        %v2674 = vld [vmem:[%s2669 + $0x10] sm:$0xf]
        %v2675 = vld [vmem:[%s2669 + $0x14] sm:$0xf]
        %v2676 = vld [vmem:[%s2669 + $0x18] sm:$0xf]
        %v2677 = vld [vmem:[%s2669 + $0x1c] sm:$0xf]
        %v2678 = vld [vmem:[%s2669 + $0x20] sm:$0xf]
        %v2679 = vld [vmem:[%s2669 + $0x24] sm:$0xf]
        %v2680 = vld [vmem:[%s2669 + $0x28] sm:$0xf]
        %v2681 = vld [vmem:[%s2669 + $0x2c] sm:$0xf]
        %v2682 = vld [vmem:[%s2669 + $0x30] sm:$0xf]
        %v2683 = vld [vmem:[%s2669 + $0x34] sm:$0xf]
        %v2684 = vld [vmem:[%s2669 + $0x38] sm:$0xf]
        %v2685 = vld [vmem:[%s2669 + $0x3c] sm:$0xf]
        %v2702 = vunpack.c.l.b16 %v2670
        %v2703 = vunpack.c.l.b16 %v2671
        %v2704 = vunpack.c.l.b16 %v2672
        %v2705 = vunpack.c.l.b16 %v2673
        %v2706 = vunpack.c.l.b16 %v2674
        %v2707 = vunpack.c.l.b16 %v2675
        %v2708 = vunpack.c.l.b16 %v2676
        %v2709 = vunpack.c.l.b16 %v2677
        %v2710 = vunpack.c.l.b16 %v2678
        %v2711 = vunpack.c.l.b16 %v2679
        %v2712 = vunpack.c.l.b16 %v2680
        %v2713 = vunpack.c.l.b16 %v2681
        %v2714 = vunpack.c.l.b16 %v2682
        %v2715 = vunpack.c.l.b16 %v2683
        %v2716 = vunpack.c.l.b16 %v2684
        %v2717 = vunpack.c.l.b16 %v2685
        %v2718 = vpack.c.b16 %v2703, %v2702
        %v2719 = vpack.c.b16 %v2705, %v2704
        %v2720 = vpack.c.b16 %v2707, %v2706
        %v2721 = vpack.c.b16 %v2709, %v2708
        %v2722 = vpack.c.b16 %v2711, %v2710
        %v2723 = vpack.c.b16 %v2713, %v2712
        %v2724 = vpack.c.b16 %v2715, %v2714
        %v2725 = vpack.c.b16 %v2717, %v2716
        %2734 = vmatprep.subr.bf16.mxu0 0
        %2735 = vmatpush1.bf16.msra.mxu0 %v2725
        %2736 = vmatprep.subr.bf16.mxu0 0
        %2737 = vmatpush1.bf16.msra.mxu0 %v2724
        %2738 = vmatprep.subr.bf16.mxu0 0
        %2739 = vmatpush1.bf16.msra.mxu0 %v2723
        %2740 = vmatprep.subr.bf16.mxu0 0
        %2741 = vmatpush1.bf16.msra.mxu0 %v2722
        %2742 = vmatprep.subr.bf16.mxu0 0
        %2743 = vmatpush1.bf16.msra.mxu0 %v2721
        %2744 = vmatprep.subr.bf16.mxu0 0
        %2745 = vmatpush1.bf16.msra.mxu0 %v2720
        %2746 = vmatprep.subr.bf16.mxu0 0
        %2747 = vmatpush1.bf16.msra.mxu0 %v2719
        %2748 = vmatprep.subr.bf16.mxu0 0
        %2749 = vmatpush1.bf16.msra.mxu0 %v2718
        %2750 = vmatprep.subr.bf16.mxu0 0
        %2751 = vmatpush2.bf16.msra.mxu0 0
        %2752 = vmatprep.subr.bf16.mxu0 0
        %2753 = vmatpush2.bf16.msra.mxu0 0
        %2754 = vmatprep.subr.bf16.mxu0 0
        %2755 = vmatpush2.bf16.msra.mxu0 0
        %2756 = vmatprep.subr.bf16.mxu0 0
        %2757 = vmatpush2.bf16.msra.mxu0 0
        %2758 = vmatprep.subr.bf16.mxu0 0
        %2759 = vmatpush2.bf16.msra.mxu0 0
        %2760 = vmatprep.subr.bf16.mxu0 0
        %2761 = vmatpush2.bf16.msra.mxu0 0
        %2762 = vmatprep.subr.bf16.mxu0 0
        %2763 = vmatpush2.bf16.msra.mxu0 0
        %2764 = vmatprep.subr.bf16.mxu0 0
        %2765 = vmatpush2.bf16.msra.mxu0 0
        %2766 = vmatprep.mubr.bf16.mxu0 0
        %2767 = vmatmul.mubr.bf16.gmra.mxu0 %v1101
        %v2768 = vpop.f32.mrf.mxu0
        %v2769 = vadd.f32 0.0, %v2768
        %v2770 = vpop.f32.mrf.mxu0
        %v2771 = vpop.f32.mrf.mxu0
        %v2772 = vadd.f32 0.0, %v2771
        %v2773 = vpop.f32.mrf.mxu0
        %2774 = vmatprep.mubr.bf16.mxu0 0
        %2775 = vmatmul.mubr.bf16.gmra.mxu0 %v1102
        %v2776 = vpop.f32.mrf.mxu0
        %v2777 = vadd.f32 0.0, %v2776
        %v2778 = vpop.f32.mrf.mxu0
        %v2779 = vpop.f32.mrf.mxu0
        %v2780 = vadd.f32 0.0, %v2779
        %v2781 = vpop.f32.mrf.mxu0
        %2782 = vmatprep.mubr.bf16.mxu0 0
        %2783 = vmatmul.mubr.bf16.gmra.mxu0 %v1103
        %v2784 = vpop.f32.mrf.mxu0
        %v2785 = vadd.f32 0.0, %v2784
        %v2786 = vpop.f32.mrf.mxu0
        %v2787 = vpop.f32.mrf.mxu0
        %v2788 = vadd.f32 0.0, %v2787
        %v2789 = vpop.f32.mrf.mxu0
        %2790 = vmatprep.mubr.bf16.mxu0 0
        %2791 = vmatmul.mubr.bf16.gmra.mxu0 %v1104
        %v2792 = vpop.f32.mrf.mxu0
        %v2793 = vadd.f32 0.0, %v2792
        %v2794 = vpop.f32.mrf.mxu0
        %v2795 = vpop.f32.mrf.mxu0
        %v2796 = vadd.f32 0.0, %v2795
        %v2797 = vpop.f32.mrf.mxu0
        %2798 = vmatprep.mubr.bf16.mxu0 0
        %2799 = vmatmul.mubr.bf16.gmra.mxu0 %v1105
        %v2800 = vpop.f32.mrf.mxu0
        %v2801 = vadd.f32 0.0, %v2800
        %v2802 = vpop.f32.mrf.mxu0
        %v2803 = vpop.f32.mrf.mxu0
        %v2804 = vadd.f32 0.0, %v2803
        %v2805 = vpop.f32.mrf.mxu0
        %2806 = vmatprep.mubr.bf16.mxu0 0
        %2807 = vmatmul.mubr.bf16.gmra.mxu0 %v1106
        %v2808 = vpop.f32.mrf.mxu0
        %v2809 = vadd.f32 0.0, %v2808
        %v2810 = vpop.f32.mrf.mxu0
        %v2811 = vpop.f32.mrf.mxu0
        %v2812 = vadd.f32 0.0, %v2811
        %v2813 = vpop.f32.mrf.mxu0
        %2814 = vmatprep.mubr.bf16.mxu0 0
        %2815 = vmatmul.mubr.bf16.gmra.mxu0 %v1107
        %v2816 = vpop.f32.mrf.mxu0
        %v2817 = vadd.f32 0.0, %v2816
        %v2818 = vpop.f32.mrf.mxu0
        %v2819 = vpop.f32.mrf.mxu0
        %v2820 = vadd.f32 0.0, %v2819
        %v2821 = vpop.f32.mrf.mxu0
        %2822 = vmatprep.mubr.bf16.mxu0 0
        %2823 = vmatmul.mubr.bf16.gmra.mxu0 %v1108
        %v2824 = vpop.f32.mrf.mxu0
        %v2825 = vadd.f32 0.0, %v2824
        %v2826 = vpop.f32.mrf.mxu0
        %v2827 = vpop.f32.mrf.mxu0
        %v2828 = vadd.f32 0.0, %v2827
        %v2829 = vpop.f32.mrf.mxu0
        %2830 = vmatprep.mubr.bf16.mxu0 0
        %2831 = vmatmul.mubr.bf16.gmra.mxu0 %v1109
        %v2832 = vpop.f32.mrf.mxu0
        %v2833 = vadd.f32 0.0, %v2832
        %v2834 = vpop.f32.mrf.mxu0
        %v2835 = vpop.f32.mrf.mxu0
        %v2836 = vadd.f32 0.0, %v2835
        %v2837 = vpop.f32.mrf.mxu0
        %2838 = vmatprep.mubr.bf16.mxu0 0
        %2839 = vmatmul.mubr.bf16.gmra.mxu0 %v1110
        %v2840 = vpop.f32.mrf.mxu0
        %v2841 = vadd.f32 0.0, %v2840
        %v2842 = vpop.f32.mrf.mxu0
        %v2843 = vpop.f32.mrf.mxu0
        %v2844 = vadd.f32 0.0, %v2843
        %v2845 = vpop.f32.mrf.mxu0
        %2846 = vmatprep.mubr.bf16.mxu0 0
        %2847 = vmatmul.mubr.bf16.gmra.mxu0 %v1111
        %v2848 = vpop.f32.mrf.mxu0
        %v2849 = vadd.f32 0.0, %v2848
        %v2850 = vpop.f32.mrf.mxu0
        %v2851 = vpop.f32.mrf.mxu0
        %v2852 = vadd.f32 0.0, %v2851
        %v2853 = vpop.f32.mrf.mxu0
        %2854 = vmatprep.mubr.bf16.mxu0 0
        %2855 = vmatmul.mubr.bf16.gmra.mxu0 %v1112
        %v2856 = vpop.f32.mrf.mxu0
        %v2857 = vadd.f32 0.0, %v2856
        %v2858 = vpop.f32.mrf.mxu0
        %v2859 = vpop.f32.mrf.mxu0
        %v2860 = vadd.f32 0.0, %v2859
        %v2861 = vpop.f32.mrf.mxu0
        %2862 = vmatprep.mubr.bf16.mxu0 0
        %2863 = vmatmul.mubr.bf16.gmra.mxu0 %v1113
        %v2864 = vpop.f32.mrf.mxu0
        %v2865 = vadd.f32 0.0, %v2864
        %v2866 = vpop.f32.mrf.mxu0
        %v2867 = vpop.f32.mrf.mxu0
        %v2868 = vadd.f32 0.0, %v2867
        %v2869 = vpop.f32.mrf.mxu0
        %2870 = vmatprep.mubr.bf16.mxu0 0
        %2871 = vmatmul.mubr.bf16.gmra.mxu0 %v1114
        %v2872 = vpop.f32.mrf.mxu0
        %v2873 = vadd.f32 0.0, %v2872
        %v2874 = vpop.f32.mrf.mxu0
        %v2875 = vpop.f32.mrf.mxu0
        %v2876 = vadd.f32 0.0, %v2875
        %v2877 = vpop.f32.mrf.mxu0
        %2878 = vmatprep.mubr.bf16.mxu0 0
        %2879 = vmatmul.mubr.bf16.gmra.mxu0 %v1890
        %v2880 = vpop.f32.mrf.mxu0
        %v2881 = vadd.f32 0.0, %v2880
        %v2882 = vpop.f32.mrf.mxu0
        %v2883 = vpop.f32.mrf.mxu0
        %v2884 = vadd.f32 0.0, %v2883
        %v2885 = vpop.f32.mrf.mxu0
        %2886 = vmatprep.mubr.bf16.mxu0 0
        %2887 = vmatmul.mubr.bf16.gmra.mxu0 %v2668
        %v2888 = vpop.f32.mrf.mxu0
        %v2889 = vadd.f32 0.0, %v2888
        %v2890 = vpop.f32.mrf.mxu0
        %v2891 = vpop.f32.mrf.mxu0
        %v2892 = vadd.f32 0.0, %v2891
        %v2893 = vpop.f32.mrf.mxu0
        %2894 = vdwg.mxu0
        %v2895 = vadd.f32 %v2636, %v2769
        %v2896 = vadd.f32 %v2637, %v2772
        %v2897 = vadd.f32 %v2638, %v2777
        %v2898 = vadd.f32 %v2639, %v2780
        %v2899 = vadd.f32 %v2640, %v2785
        %v2900 = vadd.f32 %v2641, %v2788
        %v2901 = vadd.f32 %v2642, %v2793
        %v2902 = vadd.f32 %v2643, %v2796
        %v2903 = vadd.f32 %v2644, %v2801
        %v2904 = vadd.f32 %v2645, %v2804
        %v2905 = vadd.f32 %v2646, %v2809
        %v2906 = vadd.f32 %v2647, %v2812
        %v2907 = vadd.f32 %v2648, %v2817
        %v2908 = vadd.f32 %v2649, %v2820
        %v2909 = vadd.f32 %v2650, %v2825
        %v2910 = vadd.f32 %v2651, %v2828
        %v2911 = vadd.f32 %v2652, %v2833
        %v2912 = vadd.f32 %v2653, %v2836
        %v2913 = vadd.f32 %v2654, %v2841
        %v2914 = vadd.f32 %v2655, %v2844
        %v2915 = vadd.f32 %v2656, %v2849
        %v2916 = vadd.f32 %v2657, %v2852
        %v2917 = vadd.f32 %v2658, %v2857
        %v2918 = vadd.f32 %v2659, %v2860
        %v2919 = vadd.f32 %v2660, %v2865
        %v2920 = vadd.f32 %v2661, %v2868
        %v2921 = vadd.f32 %v2662, %v2873
        %v2922 = vadd.f32 %v2663, %v2876
        %v2923 = vadd.f32 %v2664, %v2881
        %v2924 = vadd.f32 %v2665, %v2884
        %v2925 = vadd.f32 %v2666, %v2889
        %v2926 = vadd.f32 %v2667, %v2892
        %v2927 = vld [vmem:[%s2] sm:$0x1]
        %v2929 = vlaneseq
        %v2930 = vshrl.u32 %v2929, 7
        %v2931 = vsub.s32 0, %v2930
        %v2932 = vrot.slane %v2927, %v2931
        %v2934 = vadd.f32 %v2895, %v2932
        %v2935 = vadd.f32 %v2896, %v2932
        %v2936 = vadd.f32 %v2897, %v2932
        %v2937 = vadd.f32 %v2898, %v2932
        %v2938 = vadd.f32 %v2899, %v2932
        %v2939 = vadd.f32 %v2900, %v2932
        %v2940 = vadd.f32 %v2901, %v2932
        %v2941 = vadd.f32 %v2902, %v2932
        %v2942 = vadd.f32 %v2903, %v2932
        %v2943 = vadd.f32 %v2904, %v2932
        %v2944 = vadd.f32 %v2905, %v2932
        %v2945 = vadd.f32 %v2906, %v2932
        %v2946 = vadd.f32 %v2907, %v2932
        %v2947 = vadd.f32 %v2908, %v2932
        %v2948 = vadd.f32 %v2909, %v2932
        %v2949 = vadd.f32 %v2910, %v2932
        %v2950 = vadd.f32 %v2911, %v2932
        %v2951 = vadd.f32 %v2912, %v2932
        %v2952 = vadd.f32 %v2913, %v2932
        %v2953 = vadd.f32 %v2914, %v2932
        %v2954 = vadd.f32 %v2915, %v2932
        %v2955 = vadd.f32 %v2916, %v2932
        %v2956 = vadd.f32 %v2917, %v2932
        %v2957 = vadd.f32 %v2918, %v2932
        %v2958 = vadd.f32 %v2919, %v2932
        %v2959 = vadd.f32 %v2920, %v2932
        %v2960 = vadd.f32 %v2921, %v2932
        %v2961 = vadd.f32 %v2922, %v2932
        %v2962 = vadd.f32 %v2923, %v2932
        %v2963 = vadd.f32 %v2924, %v2932
        %v2964 = vadd.f32 %v2925, %v2932
        %v2965 = vadd.f32 %v2926, %v2932
        %v2966 = vmax.f32 %v2934, 0.0
        %v2967 = vmax.f32 %v2935, 0.0
        %v2968 = vmax.f32 %v2936, 0.0
        %v2969 = vmax.f32 %v2937, 0.0
        %v2970 = vmax.f32 %v2938, 0.0
        %v2971 = vmax.f32 %v2939, 0.0
        %v2972 = vmax.f32 %v2940, 0.0
        %v2973 = vmax.f32 %v2941, 0.0
        %v2974 = vmax.f32 %v2942, 0.0
        %v2975 = vmax.f32 %v2943, 0.0
        %v2976 = vmax.f32 %v2944, 0.0
        %v2977 = vmax.f32 %v2945, 0.0
        %v2978 = vmax.f32 %v2946, 0.0
        %v2979 = vmax.f32 %v2947, 0.0
        %v2980 = vmax.f32 %v2948, 0.0
        %v2981 = vmax.f32 %v2949, 0.0
        %v2982 = vmax.f32 %v2950, 0.0
        %v2983 = vmax.f32 %v2951, 0.0
        %v2984 = vmax.f32 %v2952, 0.0
        %v2985 = vmax.f32 %v2953, 0.0
        %v2986 = vmax.f32 %v2954, 0.0
        %v2987 = vmax.f32 %v2955, 0.0
        %v2988 = vmax.f32 %v2956, 0.0
        %v2989 = vmax.f32 %v2957, 0.0
        %v2990 = vmax.f32 %v2958, 0.0
        %v2991 = vmax.f32 %v2959, 0.0
        %v2992 = vmax.f32 %v2960, 0.0
        %v2993 = vmax.f32 %v2961, 0.0
        %v2994 = vmax.f32 %v2962, 0.0
        %v2995 = vmax.f32 %v2963, 0.0
        %v2996 = vmax.f32 %v2964, 0.0
        %v2997 = vmax.f32 %v2965, 0.0
        %2998 = vst [vmem:[%s203] sm:$0xff] %v207
        %2999 = vst [vmem:[%s203 + $0x10] sm:$0xff] %v208
        %3000 = vst [vmem:[%s203 + $0x20] sm:$0xff] %v209
        %3001 = vst [vmem:[%s203 + $0x30] sm:$0xff] %v210
        %3002 = vst [vmem:[%s203 + $0x40] sm:$0xff] %v211
        %3003 = vst [vmem:[%s203 + $0x50] sm:$0xff] %v212
        %3004 = vst [vmem:[%s203 + $0x60] sm:$0xff] %v213
        %3005 = vst [vmem:[%s203 + $0x70] sm:$0xff] %v214
        %3006 = vst [vmem:[%s203 + $0x80] sm:$0xff] %v215
        %3007 = vst [vmem:[%s203 + $0x90] sm:$0xff] %v216
        %3008 = vst [vmem:[%s203 + $0xa0] sm:$0xff] %v217
        %3009 = vst [vmem:[%s203 + $0xb0] sm:$0xff] %v218
        %3010 = vst [vmem:[%s203 + $0xc0] sm:$0xff] %v219
        %3011 = vst [vmem:[%s203 + $0xd0] sm:$0xff] %v220
        %3012 = vst [vmem:[%s203 + $0xe0] sm:$0xff] %v221
        %3013 = vst [vmem:[%s203 + $0xf0] sm:$0xff] %v222
        %3014 = vst [vmem:[%s203 + $0x100] sm:$0xff] %v223
        %3015 = vst [vmem:[%s203 + $0x110] sm:$0xff] %v224
        %3016 = vst [vmem:[%s203 + $0x120] sm:$0xff] %v225
        %3017 = vst [vmem:[%s203 + $0x130] sm:$0xff] %v226
        %3018 = vst [vmem:[%s203 + $0x140] sm:$0xff] %v227
        %3019 = vst [vmem:[%s203 + $0x150] sm:$0xff] %v228
        %3020 = vst [vmem:[%s203 + $0x160] sm:$0xff] %v229
        %3021 = vst [vmem:[%s203 + $0x170] sm:$0xff] %v230
        %3022 = vst [vmem:[%s203 + $0x180] sm:$0xff] %v231
        %3023 = vst [vmem:[%s203 + $0x190] sm:$0xff] %v232
        %3024 = vst [vmem:[%s203 + $0x1a0] sm:$0xff] %v233
        %3025 = vst [vmem:[%s203 + $0x1b0] sm:$0xff] %v234
        %3026 = vst [vmem:[%s203 + $0x1c0] sm:$0xff] %v235
        %3027 = vst [vmem:[%s203 + $0x1d0] sm:$0xff] %v236
        %3028 = vst [vmem:[%s203 + $0x1e0] sm:$0xff] %v237
        %3029 = vst [vmem:[%s203 + $0x1f0] sm:$0xff] %v238
        %3030 = vst [vmem:[%s203 + $0x8] sm:$0xff] %v2966
        %3031 = vst [vmem:[%s203 + $0x18] sm:$0xff] %v2967
        %3032 = vst [vmem:[%s203 + $0x28] sm:$0xff] %v2968
        %3033 = vst [vmem:[%s203 + $0x38] sm:$0xff] %v2969
        %3034 = vst [vmem:[%s203 + $0x48] sm:$0xff] %v2970
        %3035 = vst [vmem:[%s203 + $0x58] sm:$0xff] %v2971
        %3036 = vst [vmem:[%s203 + $0x68] sm:$0xff] %v2972
        %3037 = vst [vmem:[%s203 + $0x78] sm:$0xff] %v2973
        %3038 = vst [vmem:[%s203 + $0x88] sm:$0xff] %v2974
        %3039 = vst [vmem:[%s203 + $0x98] sm:$0xff] %v2975
        %3040 = vst [vmem:[%s203 + $0xa8] sm:$0xff] %v2976
        %3041 = vst [vmem:[%s203 + $0xb8] sm:$0xff] %v2977
        %3042 = vst [vmem:[%s203 + $0xc8] sm:$0xff] %v2978
        %3043 = vst [vmem:[%s203 + $0xd8] sm:$0xff] %v2979
        %3044 = vst [vmem:[%s203 + $0xe8] sm:$0xff] %v2980
        %3045 = vst [vmem:[%s203 + $0xf8] sm:$0xff] %v2981
        %3046 = vst [vmem:[%s203 + $0x108] sm:$0xff] %v2982
        %3047 = vst [vmem:[%s203 + $0x118] sm:$0xff] %v2983
        %3048 = vst [vmem:[%s203 + $0x128] sm:$0xff] %v2984
        %3049 = vst [vmem:[%s203 + $0x138] sm:$0xff] %v2985
        %3050 = vst [vmem:[%s203 + $0x148] sm:$0xff] %v2986
        %3051 = vst [vmem:[%s203 + $0x158] sm:$0xff] %v2987
        %3052 = vst [vmem:[%s203 + $0x168] sm:$0xff] %v2988
        %3053 = vst [vmem:[%s203 + $0x178] sm:$0xff] %v2989
        %3054 = vst [vmem:[%s203 + $0x188] sm:$0xff] %v2990
        %3055 = vst [vmem:[%s203 + $0x198] sm:$0xff] %v2991
        %3056 = vst [vmem:[%s203 + $0x1a8] sm:$0xff] %v2992
        %3057 = vst [vmem:[%s203 + $0x1b8] sm:$0xff] %v2993
        %3058 = vst [vmem:[%s203 + $0x1c8] sm:$0xff] %v2994
        %3059 = vst [vmem:[%s203 + $0x1d8] sm:$0xff] %v2995
        %3060 = vst [vmem:[%s203 + $0x1e8] sm:$0xff] %v2996
        %3061 = vst [vmem:[%s203 + $0x1f8] sm:$0xff] %v2997
        %s3062 = sand.u32 %s97, 1
        %s3063 = scalar_lea.sflag [#allocation4], %s3062
        %s3064 = sand.u32 %s97, 1
        %s3065 = smul.addr %s3064, 512
        %s3066 = scalar_lea.vmem [#allocation7], %s3065
        // Predicated region
        $region41: #{tpu_custom_call.1} parent=31 // pred_check
          %p3067 = pneg %p107
        $region42: #{tpu_custom_call.1} parent=31 // pred_check_branch
          %3069 = sbr.rel (%p3067) target = $region44
        $region43: #{tpu_custom_call.1} parent=31 // pred_region
          %s3071 = ssub.s32 8192, 8192
          %3072 = vsyncadd %s3063, %s3071
          %s3073 = smul.addr %s21, 64
          %s3074 = smul.addr %s3073, 128
          %s3075 = scalar_lea.hbm %s3, %s3074
          %s3076 = sshll.u32 %s3066, 4
          %s3077 = int_to_ptr.vmem [resolvable:$true] %s3076
          %3082 = dma.vmem_to_hbm [thread:$0]  %s3077, 8192, %s3075, %s3063, 256, 256, 16
        $region44: #{tpu_custom_call.1} parent=31 // pred_fallthru
          _
      $region32: #{tpu_custom_call.1} parent=5 // pred_fallthru
        _
      %p3083 = scmp.le.s32.totalorder 2, %s16
      // Predicated region
      $region45: #{tpu_custom_call.1} parent=5 // pred_check
        %p3084 = pneg %p3083
      $region46: #{tpu_custom_call.1} parent=5 // pred_check_branch
        %3086 = sbr.rel (%p3084) target = $region48
      $region47: #{tpu_custom_call.1} parent=5 // pred_region
        %s3087 = ssub.s32 %s16, 2
        // Predicated region
        $region49: #{tpu_custom_call.1} parent=47 // pred_check
          %p3088 = pneg %p113
        $region50: #{tpu_custom_call.1} parent=47 // pred_check_branch
          %3090 = sbr.rel (%p3088) target = $region52
        $region51: #{tpu_custom_call.1} parent=47 // pred_region
          %s3091 = sand.u32 %s98, 1
          %s3092 = scalar_lea.sflag [#allocation4], %s3091
          %s3093 = sand.u32 %s98, 1
          %s3094 = smul.addr %s3093, 512
          %s3095 = scalar_lea.vmem [#allocation7], %s3094
          %3096 = dma.done %s3092, 8192
        $region52: #{tpu_custom_call.1} parent=47 // pred_fallthru
          _
      $region48: #{tpu_custom_call.1} parent=5 // pred_fallthru
        _
    $region6: #{tpu_custom_call.1} parent=1 // loop_footer
      %s20 = sadd.s32 1, %s16
    $region7: #{tpu_custom_call.1} parent=1 // loop_footer_branch
      %15 = sbr.rel target = $region3
    $region8: #{tpu_custom_call.1} parent=1 // loop_exit
      _
    %3097 = vsyncpa [#allocation3], 1
    %s3098 = scalar_lea.sflag [#allocation3], 1
    %3099 = vsyncpa %s3098, 1
    %3100 = vsyncpa [#allocation6], 1
    %3101 = vsyncpa [#allocation4], 1
    %s3102 = scalar_lea.sflag [#allocation4], 1
    %3103 = vsyncpa %s3102, 1

</llo_original>
